<compile_context>
chip_gen: v6e
topology: v6e:2x2x1
jax: 0.10.0
libtpu: 0.0.40
codegen_flags: <defaults>
</compile_context>

<pallas_src>
import jax
import jax.numpy as jnp
import numpy as np
from jax import lax
from jax.experimental import pallas as pl
from jax.experimental.pallas import tpu as pltpu

_BIG = 1e9        # Python float -> jaxpr literal (NOT a captured jax.Array)
_SUBLANES = 8


def _pick_row_tile(n):
    for t in (64, 32, 16, 8):
        if n % t == 0:
            return t
    return n


def _make_kernel(C, N, TR, alpha, apply_softmax):
    RB = _SUBLANES
    NT = N // TR
    n_groups = TR // RB

    def kernel(pred_r_ref, pred_c_ref, tgt_r_ref, tgt_c_ref,
               coord_l_ref, coord_s_ref, out_ref):
        cls = pl.program_id(1)                  # class index for this invocation
        cls_f = cls.astype(jnp.float32)

        # ---------- lane-dense (row) path: class prob, squared error, fg masks
        logits_r = pred_r_ref[...]              # (C, N)
        t_row = tgt_r_ref[...]                  # (1, N) float class labels
        row_ids = lax.broadcasted_iota(jnp.int32, (C, N), 0)
        if apply_softmax:
            m_r = jnp.max(logits_r, axis=0, keepdims=True)
            e_r = jnp.exp(logits_r - m_r)
            s_r = jnp.sum(e_r, axis=0, keepdims=True)
            e_sel = jnp.sum(jnp.where(row_ids == cls, e_r, 0.0),
                            axis=0, keepdims=True)
            p_row = e_sel / s_r                 # (1, N) prob of class `cls`
            # multiply-form threshold == the sublane-path expression below, so the
            # fg decision of a pixel is identical in both roles (dest vs source).
            p_fg_l = (e_sel > 0.5 * s_r).astype(jnp.float32)
        else:
            p_row = jnp.sum(jnp.where(row_ids == cls, logits_r, 0.0),
                            axis=0, keepdims=True)
            p_fg_l = (p_row > 0.5).astype(jnp.float32)
        t_fg_l = (t_row == cls_f).astype(jnp.float32)          # one-hot target (1,N)
        err = (p_row - t_fg_l) ** 2                            # (1, N)
        any_p = jnp.max(p_fg_l)                                 # "fg_mask.any()" guards
        any_t = jnp.max(t_fg_l)

        # flattened-pixel (row, col) coordinates, lane orientation (grid-constant)
        row_l = coord_l_ref[0:1, :]             # (1, N)
        col_l = coord_l_ref[1:2, :]             # (1, N)

        lane_ids = lax.broadcasted_iota(jnp.int32, (TR, C), 1)

        # ---------- fused EDT sweep: one pass over D's rows, 2 XOR-masked mins
        def tile_mins(q0, carry):
            acc_p, acc_t = carry
            lc = pred_c_ref[pl.ds(q0, TR), :]   # (TR, C) logits, pixels on sublanes
            tc = tgt_c_ref[pl.ds(q0, TR), :]    # (TR, 1)
            co = coord_s_ref[pl.ds(q0, TR), :]  # (TR, 2)
            rq = co[:, 0:1]
            cq = co[:, 1:2]
            if apply_softmax:
                m = jnp.max(lc, axis=1, keepdims=True)
                e = jnp.exp(lc - m)
                s = jnp.sum(e, axis=1, keepdims=True)
                e_c = jnp.sum(jnp.where(lane_ids == cls, e, 0.0),
                              axis=1, keepdims=True)
                p_fg_s = (e_c > 0.5 * s).astype(jnp.float32)   # softmax(pred)[cls]>0.5
            else:
                l_c = jnp.sum(jnp.where(lane_ids == cls, lc, 0.0),
                              axis=1, keepdims=True)
                p_fg_s = (l_c > 0.5).astype(jnp.float32)
            t_fg_s = (tc == cls_f).astype(jnp.float32)          # (TR, 1)

            for g in range(n_groups):
                sl = slice(g * RB, (g + 1) * RB)
                # 8 rows of D rebuilt on the fly (no NxN array anywhere)
                d_g = (rq[sl] - row_l) ** 2 + (cq[sl] - col_l) ** 2   # (RB, N)
                # keep d only where source & destination are on opposite phases
                cand_p = jnp.where(p_fg_s[sl] != p_fg_l, d_g, _BIG)
                cand_t = jnp.where(t_fg_s[sl] != t_fg_l, d_g, _BIG)
                if acc_p is None:
                    acc_p, acc_t = cand_p, cand_t
                else:
                    acc_p = jnp.minimum(acc_p, cand_p)
                    acc_t = jnp.minimum(acc_t, cand_t)
            return acc_p, acc_t

        accs = tile_mins(0, (None, None))
        if NT > 1:
            def body(t, carry):
                q0 = pl.multiple_of(t * TR, TR)
                return tile_mins(q0, carry)
            accs = lax.fori_loop(1, NT, body, accs, unroll=(NT <= 8))

        # tiny final 8-sublane reduce -> lane-dense (1, N) squared distance fields
        def finish(a):
            msq = jnp.min(a, axis=0, keepdims=True)
            # TODO(synk): EDT of a mask with no opposite-phase pixel is ill-defined;
            # use 0 (matches the numpy reference convention).
            return jnp.where(msq >= _BIG * 0.5, 0.0, msq)

        pred_field_sq = finish(accs[0])     # = (fg_dist + bg_dist)^2 (disjoint support)
        tgt_field_sq = finish(accs[1])
        if alpha == 2.0:
            pred_pow, tgt_pow = pred_field_sq, tgt_field_sq
        else:
            pred_pow = jnp.power(pred_field_sq, alpha * 0.5)
            tgt_pow = jnp.power(tgt_field_sq, alpha * 0.5)

        dist = pred_pow * any_p + tgt_pow * any_t           # (1, N)
        partial = jnp.sum(err * dist)                       # sum over pixels
        out_ref[...] = jnp.broadcast_to(partial, out_ref.shape)

    return kernel


def hausdorff_dt_loss(pred, target, alpha=2.0, softmax=True):
    B, C, H, W = pred.shape
    N = H * W
    assert N % _SUBLANES == 0, "H*W must be a multiple of 8"  # TODO(synk): pad ragged N
    assert (H - 1) ** 2 + (W - 1) ** 2 < _BIG * 0.25, "image too large for BIG sentinel"

    TR = _pick_row_tile(N)

    pred_r = pred.reshape(B, C, N).astype(jnp.float32)      # pixels on lanes
    pred_c = jnp.transpose(pred_r, (0, 2, 1))               # pixels on sublanes
    tgt = target.reshape(B, N).astype(jnp.float32)
    tgt_r = tgt.reshape(B, 1, N)
    tgt_c = tgt.reshape(B, N, 1)

    rows = jnp.repeat(jnp.arange(H, dtype=jnp.float32), W)  # (N,)
    cols = jnp.tile(jnp.arange(W, dtype=jnp.float32), H)
    coord_l = jnp.stack([rows, cols], axis=0)               # (2, N) lane oriented
    coord_s = jnp.stack([rows, cols], axis=1)               # (N, 2) sublane oriented

    kernel = _make_kernel(C, N, TR, float(alpha), bool(softmax))

    partials = pl.pallas_call(
        kernel,
        out_shape=jax.ShapeDtypeStruct((B, C, 1, 128), jnp.float32),
        grid=(B, C),
        in_specs=[
            pl.BlockSpec((None, C, N), lambda b, c: (b, 0, 0)),
            pl.BlockSpec((None, N, C), lambda b, c: (b, 0, 0)),
            pl.BlockSpec((None, 1, N), lambda b, c: (b, 0, 0)),
            pl.BlockSpec((None, N, 1), lambda b, c: (b, 0, 0)),
            pl.BlockSpec((2, N), lambda b, c: (0, 0)),
            pl.BlockSpec((N, 2), lambda b, c: (0, 0)),
        ],
        out_specs=pl.BlockSpec((None, None, 1, 128), lambda b, c: (b, c, 0, 0)),
        compiler_params=pltpu.CompilerParams(
            dimension_semantics=("parallel", "parallel"),
            vmem_limit_bytes=32 * 1024 * 1024,
        ),
    )(pred_r, pred_c, tgt_r, tgt_c, coord_l, coord_s)

    # every lane of a partial holds the same per-(batch, class) pixel sum
    return jnp.sum(partials[:, :, 0, 0]) / (B * N * C)


def _reference_loss(pred, target, alpha=2.0, n_classes=4):
    """Pure-numpy reference (brute-force exact EDT)."""
    pred = np.asarray(pred, dtype=np.float32)
    target = np.asarray(target)
    B, C, H, W = pred.shape
    e = np.exp(pred - pred.max(axis=1, keepdims=True))
    probs = (e / e.sum(axis=1, keepdims=True)).astype(np.float64)

    rr, cc = np.meshgrid(np.arange(H), np.arange(W), indexing="ij")
    coords = np.stack([rr.ravel(), cc.ravel()], axis=1).astype(np.float64)
    sq = ((coords[:, None, :] - coords[None, :, :]) ** 2).sum(-1)

    def edt(mask):
        flat = mask.ravel()
        bg = ~flat
        if not bg.any():
            return np.zeros((H, W))
        d2 = np.where(bg[None, :], sq, np.inf).min(axis=1)
        d = np.where(flat, np.sqrt(d2), 0.0)
        return d.reshape(H, W)

    def field(img):
        fg = img > 0.5
        if not fg.any():
            return np.zeros((H, W))
        return edt(fg) + edt(~fg)

    total = 0.0
    for i in range(n_classes):
        per_class = 0.0
        for b in range(B):
            p = probs[b, i]
            t = (target[b] == i).astype(np.float64)
            pd = field(p)
            td = field(t)
            err = (p - t) ** 2
            dist = pd ** alpha + td ** alpha
            per_class += (err * dist).mean()
        total += per_class / B
    return total / n_classes


if __name__ == "__main__":
    key = jax.random.PRNGKey(0)
    k_pred, k_tgt = jax.random.split(key)
    B, C, H, W = 2, 4, 16, 16
    pred = 2.0 * jax.random.normal(k_pred, (B, C, H, W), dtype=jnp.float32)
    target = jax.random.randint(k_tgt, (B, H, W), 0, C).astype(jnp.float32)

    loss = hausdorff_dt_loss(pred, target, alpha=2.0, softmax=True)
    loss = jax.block_until_ready(loss)

    ref = _reference_loss(np.asarray(pred), np.asarray(target), alpha=2.0)
    assert np.isfinite(float(loss)), float(loss)
    assert abs(float(loss) - ref) <= 1e-3 * max(1.0, abs(ref)), (float(loss), ref)
    print("KERNEL_OK")
</pallas_src>

<mosaic_0001>
module attributes {stable_mosaic.version = 11 : i64} {
  func.func @kernel(%arg0: i32, %arg1: i32, %arg2: memref<1x4x256xf32, #tpu.memory_space<vmem>>, %arg3: memref<1x256x4xf32, #tpu.memory_space<vmem>>, %arg4: memref<1x1x256xf32, #tpu.memory_space<vmem>>, %arg5: memref<1x256x1xf32, #tpu.memory_space<vmem>>, %arg6: memref<2x256xf32, #tpu.memory_space<vmem>>, %arg7: memref<256x2xf32, #tpu.memory_space<vmem>>, %arg8: memref<1x1x1x128xf32, #tpu.memory_space<vmem>>) attributes {dimension_semantics = [#tpu.dimension_semantics<parallel>, #tpu.dimension_semantics<parallel>], iteration_bounds = array<i64: 2, 4>, scalar_prefetch = 0 : i64, scratch_operands = 0 : i64, tpu.core_type = #tpu.core_type<tc>, window_params = [{transform_indices = @transform_0, window_bounds = array<i64: 1, 4, 256>}, {transform_indices = @transform_1, window_bounds = array<i64: 1, 256, 4>}, {transform_indices = @transform_2, window_bounds = array<i64: 1, 1, 256>}, {transform_indices = @transform_3, window_bounds = array<i64: 1, 256, 1>}, {pipeline_mode = #tpu.pipeline_mode<synchronous>, transform_indices = @transform_4, window_bounds = array<i64: 2, 256>}, {pipeline_mode = #tpu.pipeline_mode<synchronous>, transform_indices = @transform_5, window_bounds = array<i64: 256, 2>}, {transform_indices = @transform_6, window_bounds = array<i64: 1, 1, 1, 128>}]} {
    %0 = arith.sitofp %arg1 : i32 to f32
    %c0 = arith.constant 0 : index
    %c0_0 = arith.constant 0 : index
    %c0_1 = arith.constant 0 : index
    %1 = vector.load %arg2[%c0, %c0_0, %c0_1] : memref<1x4x256xf32, #tpu.memory_space<vmem>>, vector<1x4x256xf32>
    %2 = vector.shape_cast %1 : vector<1x4x256xf32> to vector<4x256xf32>
    %c0_2 = arith.constant 0 : index
    %c0_3 = arith.constant 0 : index
    %c0_4 = arith.constant 0 : index
    %3 = vector.load %arg4[%c0_2, %c0_3, %c0_4] : memref<1x1x256xf32, #tpu.memory_space<vmem>>, vector<1x1x256xf32>
    %4 = vector.shape_cast %3 : vector<1x1x256xf32> to vector<1x256xf32>
    %5 = tpu.iota {dimensions = array<i32: 0>} : vector<4x256xi32>
    %cst = arith.constant dense<0xFF800000> : vector<256xf32>
    %6 = vector.multi_reduction <maximumf>, %2, %cst [0] : vector<4x256xf32> to vector<256xf32>
    %7 = vector.shape_cast %6 : vector<256xf32> to vector<1x256xf32>
    %8 = vector.broadcast %7 : vector<1x256xf32> to vector<4x256xf32>
    %9 = arith.subf %2, %8 : vector<4x256xf32>
    %10 = math.exp %9 : vector<4x256xf32>
    %cst_5 = arith.constant dense<0.000000e+00> : vector<256xf32>
    %11 = vector.multi_reduction <add>, %10, %cst_5 [0] : vector<4x256xf32> to vector<256xf32>
    %12 = vector.shape_cast %11 : vector<256xf32> to vector<1x256xf32>
    %13 = vector.broadcast %arg1 : i32 to vector<4x256xi32>
    %14 = arith.cmpi eq, %5, %13 : vector<4x256xi32>
    %cst_6 = arith.constant 0.000000e+00 : f32
    %15 = vector.broadcast %cst_6 : f32 to vector<4x256xf32>
    %16 = arith.select %14, %10, %15 : vector<4x256xi1>, vector<4x256xf32>
    %cst_7 = arith.constant dense<0.000000e+00> : vector<256xf32>
    %17 = vector.multi_reduction <add>, %16, %cst_7 [0] : vector<4x256xf32> to vector<256xf32>
    %18 = vector.shape_cast %17 : vector<256xf32> to vector<1x256xf32>
    %19 = arith.divf %18, %12 : vector<1x256xf32>
    %cst_8 = arith.constant 5.000000e-01 : f32
    %20 = vector.broadcast %cst_8 : f32 to vector<1x256xf32>
    %21 = arith.mulf %20, %12 : vector<1x256xf32>
    %22 = arith.cmpf ogt, %18, %21 : vector<1x256xf32>
    %23 = arith.extui %22 : vector<1x256xi1> to vector<1x256xi32>
    %24 = arith.sitofp %23 : vector<1x256xi32> to vector<1x256xf32>
    %25 = vector.broadcast %0 : f32 to vector<1x256xf32>
    %26 = arith.cmpf oeq, %4, %25 : vector<1x256xf32>
    %27 = arith.extui %26 : vector<1x256xi1> to vector<1x256xi32>
    %28 = arith.sitofp %27 : vector<1x256xi32> to vector<1x256xf32>
    %29 = arith.subf %19, %28 : vector<1x256xf32>
    %30 = arith.mulf %29, %29 : vector<1x256xf32>
    %31 = vector.shape_cast %24 : vector<1x256xf32> to vector<1x1x256xf32>
    %cst_9 = arith.constant dense<0xFF800000> : vector<1xf32>
    %32 = vector.multi_reduction <maximumf>, %31, %cst_9 [1, 2] : vector<1x1x256xf32> to vector<1xf32>
    %33 = vector.shape_cast %32 : vector<1xf32> to vector<1x1x1xf32>
    %34 = vector.extract %33[0, 0, 0] : f32 from vector<1x1x1xf32>
    %35 = vector.shape_cast %28 : vector<1x256xf32> to vector<1x1x256xf32>
    %cst_10 = arith.constant dense<0xFF800000> : vector<1xf32>
    %36 = vector.multi_reduction <maximumf>, %35, %cst_10 [1, 2] : vector<1x1x256xf32> to vector<1xf32>
    %37 = vector.shape_cast %36 : vector<1xf32> to vector<1x1x1xf32>
    %38 = vector.extract %37[0, 0, 0] : f32 from vector<1x1x1xf32>
    %c0_11 = arith.constant 0 : index
    %c0_12 = arith.constant 0 : index
    %39 = vector.load %arg6[%c0_11, %c0_12] : memref<2x256xf32, #tpu.memory_space<vmem>>, vector<1x256xf32>
    %c1 = arith.constant 1 : index
    %c0_13 = arith.constant 0 : index
    %40 = vector.load %arg6[%c1, %c0_13] : memref<2x256xf32, #tpu.memory_space<vmem>>, vector<1x256xf32>
    %41 = tpu.iota {dimensions = array<i32: 1>} : vector<64x4xi32>
    %c0_14 = arith.constant 0 : index
    %c0_15 = arith.constant 0 : index
    %c0_16 = arith.constant 0 : index
    %42 = vector.load %arg3[%c0_14, %c0_15, %c0_16] : memref<1x256x4xf32, #tpu.memory_space<vmem>>, vector<1x64x4xf32>
    %43 = vector.shape_cast %42 : vector<1x64x4xf32> to vector<64x4xf32>
    %c0_17 = arith.constant 0 : index
    %c0_18 = arith.constant 0 : index
    %c0_19 = arith.constant 0 : index
    %44 = vector.load %arg5[%c0_17, %c0_18, %c0_19] : memref<1x256x1xf32, #tpu.memory_space<vmem>>, vector<1x64x1xf32>
    %45 = vector.shape_cast %44 : vector<1x64x1xf32> to vector<64x1xf32>
    %c0_20 = arith.constant 0 : index
    %c0_21 = arith.constant 0 : index
    %46 = vector.load %arg7[%c0_20, %c0_21] : memref<256x2xf32, #tpu.memory_space<vmem>>, vector<64x2xf32>
    %47 = vector.extract_strided_slice %46 {offsets = [0, 0], sizes = [64, 1], strides = [1, 1]} : vector<64x2xf32> to vector<64x1xf32>
    %48 = vector.extract_strided_slice %46 {offsets = [0, 1], sizes = [64, 1], strides = [1, 1]} : vector<64x2xf32> to vector<64x1xf32>
    %cst_22 = arith.constant dense<0xFF800000> : vector<64xf32>
    %49 = vector.multi_reduction <maximumf>, %43, %cst_22 [1] : vector<64x4xf32> to vector<64xf32>
    %50 = vector.shape_cast %49 : vector<64xf32> to vector<64x1xf32>
    %51 = vector.broadcast %50 : vector<64x1xf32> to vector<64x4xf32>
    %52 = arith.subf %43, %51 : vector<64x4xf32>
    %53 = math.exp %52 : vector<64x4xf32>
    %cst_23 = arith.constant dense<0.000000e+00> : vector<64xf32>
    %54 = vector.multi_reduction <add>, %53, %cst_23 [1] : vector<64x4xf32> to vector<64xf32>
    %55 = vector.shape_cast %54 : vector<64xf32> to vector<64x1xf32>
    %56 = vector.broadcast %arg1 : i32 to vector<64x4xi32>
    %57 = arith.cmpi eq, %41, %56 : vector<64x4xi32>
    %cst_24 = arith.constant 0.000000e+00 : f32
    %58 = vector.broadcast %cst_24 : f32 to vector<64x4xf32>
    %59 = arith.select %57, %53, %58 : vector<64x4xi1>, vector<64x4xf32>
    %cst_25 = arith.constant dense<0.000000e+00> : vector<64xf32>
    %60 = vector.multi_reduction <add>, %59, %cst_25 [1] : vector<64x4xf32> to vector<64xf32>
    %61 = vector.shape_cast %60 : vector<64xf32> to vector<64x1xf32>
    %cst_26 = arith.constant 5.000000e-01 : f32
    %62 = vector.broadcast %cst_26 : f32 to vector<64x1xf32>
    %63 = arith.mulf %62, %55 : vector<64x1xf32>
    %64 = arith.cmpf ogt, %61, %63 : vector<64x1xf32>
    %65 = arith.extui %64 : vector<64x1xi1> to vector<64x1xi32>
    %66 = arith.sitofp %65 : vector<64x1xi32> to vector<64x1xf32>
    %67 = vector.broadcast %0 : f32 to vector<64x1xf32>
    %68 = arith.cmpf oeq, %45, %67 : vector<64x1xf32>
    %69 = arith.extui %68 : vector<64x1xi1> to vector<64x1xi32>
    %70 = arith.sitofp %69 : vector<64x1xi32> to vector<64x1xf32>
    %71 = vector.extract_strided_slice %47 {offsets = [0, 0], sizes = [8, 1], strides = [1, 1]} : vector<64x1xf32> to vector<8x1xf32>
    %72 = vector.broadcast %71 : vector<8x1xf32> to vector<8x256xf32>
    %73 = vector.broadcast %39 : vector<1x256xf32> to vector<8x256xf32>
    %74 = arith.subf %72, %73 : vector<8x256xf32>
    %75 = arith.mulf %74, %74 : vector<8x256xf32>
    %76 = vector.extract_strided_slice %48 {offsets = [0, 0], sizes = [8, 1], strides = [1, 1]} : vector<64x1xf32> to vector<8x1xf32>
    %77 = vector.broadcast %76 : vector<8x1xf32> to vector<8x256xf32>
    %78 = vector.broadcast %40 : vector<1x256xf32> to vector<8x256xf32>
    %79 = arith.subf %77, %78 : vector<8x256xf32>
    %80 = arith.mulf %79, %79 : vector<8x256xf32>
    %81 = arith.addf %75, %80 : vector<8x256xf32>
    %82 = vector.extract_strided_slice %66 {offsets = [0, 0], sizes = [8, 1], strides = [1, 1]} : vector<64x1xf32> to vector<8x1xf32>
    %83 = vector.broadcast %82 : vector<8x1xf32> to vector<8x256xf32>
    %84 = vector.broadcast %24 : vector<1x256xf32> to vector<8x256xf32>
    %85 = arith.cmpf one, %83, %84 : vector<8x256xf32>
    %cst_27 = arith.constant 1.000000e+09 : f32
    %86 = vector.broadcast %cst_27 : f32 to vector<8x256xf32>
    %87 = arith.select %85, %81, %86 : vector<8x256xi1>, vector<8x256xf32>
    %88 = vector.extract_strided_slice %70 {offsets = [0, 0], sizes = [8, 1], strides = [1, 1]} : vector<64x1xf32> to vector<8x1xf32>
    %89 = vector.broadcast %88 : vector<8x1xf32> to vector<8x256xf32>
    %90 = vector.broadcast %28 : vector<1x256xf32> to vector<8x256xf32>
    %91 = arith.cmpf one, %89, %90 : vector<8x256xf32>
    %cst_28 = arith.constant 1.000000e+09 : f32
    %92 = vector.broadcast %cst_28 : f32 to vector<8x256xf32>
    %93 = arith.select %91, %81, %92 : vector<8x256xi1>, vector<8x256xf32>
    %94 = vector.extract_strided_slice %47 {offsets = [8, 0], sizes = [8, 1], strides = [1, 1]} : vector<64x1xf32> to vector<8x1xf32>
    %95 = vector.broadcast %94 : vector<8x1xf32> to vector<8x256xf32>
    %96 = vector.broadcast %39 : vector<1x256xf32> to vector<8x256xf32>
    %97 = arith.subf %95, %96 : vector<8x256xf32>
    %98 = arith.mulf %97, %97 : vector<8x256xf32>
    %99 = vector.extract_strided_slice %48 {offsets = [8, 0], sizes = [8, 1], strides = [1, 1]} : vector<64x1xf32> to vector<8x1xf32>
    %100 = vector.broadcast %99 : vector<8x1xf32> to vector<8x256xf32>
    %101 = vector.broadcast %40 : vector<1x256xf32> to vector<8x256xf32>
    %102 = arith.subf %100, %101 : vector<8x256xf32>
    %103 = arith.mulf %102, %102 : vector<8x256xf32>
    %104 = arith.addf %98, %103 : vector<8x256xf32>
    %105 = vector.extract_strided_slice %66 {offsets = [8, 0], sizes = [8, 1], strides = [1, 1]} : vector<64x1xf32> to vector<8x1xf32>
    %106 = vector.broadcast %105 : vector<8x1xf32> to vector<8x256xf32>
    %107 = vector.broadcast %24 : vector<1x256xf32> to vector<8x256xf32>
    %108 = arith.cmpf one, %106, %107 : vector<8x256xf32>
    %cst_29 = arith.constant 1.000000e+09 : f32
    %109 = vector.broadcast %cst_29 : f32 to vector<8x256xf32>
    %110 = arith.select %108, %104, %109 : vector<8x256xi1>, vector<8x256xf32>
    %111 = vector.extract_strided_slice %70 {offsets = [8, 0], sizes = [8, 1], strides = [1, 1]} : vector<64x1xf32> to vector<8x1xf32>
    %112 = vector.broadcast %111 : vector<8x1xf32> to vector<8x256xf32>
    %113 = vector.broadcast %28 : vector<1x256xf32> to vector<8x256xf32>
    %114 = arith.cmpf one, %112, %113 : vector<8x256xf32>
    %cst_30 = arith.constant 1.000000e+09 : f32
    %115 = vector.broadcast %cst_30 : f32 to vector<8x256xf32>
    %116 = arith.select %114, %104, %115 : vector<8x256xi1>, vector<8x256xf32>
    %117 = arith.minimumf %87, %110 : vector<8x256xf32>
    %118 = arith.minimumf %93, %116 : vector<8x256xf32>
    %119 = vector.extract_strided_slice %47 {offsets = [16, 0], sizes = [8, 1], strides = [1, 1]} : vector<64x1xf32> to vector<8x1xf32>
    %120 = vector.broadcast %119 : vector<8x1xf32> to vector<8x256xf32>
    %121 = vector.broadcast %39 : vector<1x256xf32> to vector<8x256xf32>
    %122 = arith.subf %120, %121 : vector<8x256xf32>
    %123 = arith.mulf %122, %122 : vector<8x256xf32>
    %124 = vector.extract_strided_slice %48 {offsets = [16, 0], sizes = [8, 1], strides = [1, 1]} : vector<64x1xf32> to vector<8x1xf32>
    %125 = vector.broadcast %124 : vector<8x1xf32> to vector<8x256xf32>
    %126 = vector.broadcast %40 : vector<1x256xf32> to vector<8x256xf32>
    %127 = arith.subf %125, %126 : vector<8x256xf32>
    %128 = arith.mulf %127, %127 : vector<8x256xf32>
    %129 = arith.addf %123, %128 : vector<8x256xf32>
    %130 = vector.extract_strided_slice %66 {offsets = [16, 0], sizes = [8, 1], strides = [1, 1]} : vector<64x1xf32> to vector<8x1xf32>
    %131 = vector.broadcast %130 : vector<8x1xf32> to vector<8x256xf32>
    %132 = vector.broadcast %24 : vector<1x256xf32> to vector<8x256xf32>
    %133 = arith.cmpf one, %131, %132 : vector<8x256xf32>
    %cst_31 = arith.constant 1.000000e+09 : f32
    %134 = vector.broadcast %cst_31 : f32 to vector<8x256xf32>
    %135 = arith.select %133, %129, %134 : vector<8x256xi1>, vector<8x256xf32>
    %136 = vector.extract_strided_slice %70 {offsets = [16, 0], sizes = [8, 1], strides = [1, 1]} : vector<64x1xf32> to vector<8x1xf32>
    %137 = vector.broadcast %136 : vector<8x1xf32> to vector<8x256xf32>
    %138 = vector.broadcast %28 : vector<1x256xf32> to vector<8x256xf32>
    %139 = arith.cmpf one, %137, %138 : vector<8x256xf32>
    %cst_32 = arith.constant 1.000000e+09 : f32
    %140 = vector.broadcast %cst_32 : f32 to vector<8x256xf32>
    %141 = arith.select %139, %129, %140 : vector<8x256xi1>, vector<8x256xf32>
    %142 = arith.minimumf %117, %135 : vector<8x256xf32>
    %143 = arith.minimumf %118, %141 : vector<8x256xf32>
    %144 = vector.extract_strided_slice %47 {offsets = [24, 0], sizes = [8, 1], strides = [1, 1]} : vector<64x1xf32> to vector<8x1xf32>
    %145 = vector.broadcast %144 : vector<8x1xf32> to vector<8x256xf32>
    %146 = vector.broadcast %39 : vector<1x256xf32> to vector<8x256xf32>
    %147 = arith.subf %145, %146 : vector<8x256xf32>
    %148 = arith.mulf %147, %147 : vector<8x256xf32>
    %149 = vector.extract_strided_slice %48 {offsets = [24, 0], sizes = [8, 1], strides = [1, 1]} : vector<64x1xf32> to vector<8x1xf32>
    %150 = vector.broadcast %149 : vector<8x1xf32> to vector<8x256xf32>
    %151 = vector.broadcast %40 : vector<1x256xf32> to vector<8x256xf32>
    %152 = arith.subf %150, %151 : vector<8x256xf32>
    %153 = arith.mulf %152, %152 : vector<8x256xf32>
    %154 = arith.addf %148, %153 : vector<8x256xf32>
    %155 = vector.extract_strided_slice %66 {offsets = [24, 0], sizes = [8, 1], strides = [1, 1]} : vector<64x1xf32> to vector<8x1xf32>
    %156 = vector.broadcast %155 : vector<8x1xf32> to vector<8x256xf32>
    %157 = vector.broadcast %24 : vector<1x256xf32> to vector<8x256xf32>
    %158 = arith.cmpf one, %156, %157 : vector<8x256xf32>
    %cst_33 = arith.constant 1.000000e+09 : f32
    %159 = vector.broadcast %cst_33 : f32 to vector<8x256xf32>
    %160 = arith.select %158, %154, %159 : vector<8x256xi1>, vector<8x256xf32>
    %161 = vector.extract_strided_slice %70 {offsets = [24, 0], sizes = [8, 1], strides = [1, 1]} : vector<64x1xf32> to vector<8x1xf32>
    %162 = vector.broadcast %161 : vector<8x1xf32> to vector<8x256xf32>
    %163 = vector.broadcast %28 : vector<1x256xf32> to vector<8x256xf32>
    %164 = arith.cmpf one, %162, %163 : vector<8x256xf32>
    %cst_34 = arith.constant 1.000000e+09 : f32
    %165 = vector.broadcast %cst_34 : f32 to vector<8x256xf32>
    %166 = arith.select %164, %154, %165 : vector<8x256xi1>, vector<8x256xf32>
    %167 = arith.minimumf %142, %160 : vector<8x256xf32>
    %168 = arith.minimumf %143, %166 : vector<8x256xf32>
    %169 = vector.extract_strided_slice %47 {offsets = [32, 0], sizes = [8, 1], strides = [1, 1]} : vector<64x1xf32> to vector<8x1xf32>
    %170 = vector.broadcast %169 : vector<8x1xf32> to vector<8x256xf32>
    %171 = vector.broadcast %39 : vector<1x256xf32> to vector<8x256xf32>
    %172 = arith.subf %170, %171 : vector<8x256xf32>
    %173 = arith.mulf %172, %172 : vector<8x256xf32>
    %174 = vector.extract_strided_slice %48 {offsets = [32, 0], sizes = [8, 1], strides = [1, 1]} : vector<64x1xf32> to vector<8x1xf32>
    %175 = vector.broadcast %174 : vector<8x1xf32> to vector<8x256xf32>
    %176 = vector.broadcast %40 : vector<1x256xf32> to vector<8x256xf32>
    %177 = arith.subf %175, %176 : vector<8x256xf32>
    %178 = arith.mulf %177, %177 : vector<8x256xf32>
    %179 = arith.addf %173, %178 : vector<8x256xf32>
    %180 = vector.extract_strided_slice %66 {offsets = [32, 0], sizes = [8, 1], strides = [1, 1]} : vector<64x1xf32> to vector<8x1xf32>
    %181 = vector.broadcast %180 : vector<8x1xf32> to vector<8x256xf32>
    %182 = vector.broadcast %24 : vector<1x256xf32> to vector<8x256xf32>
    %183 = arith.cmpf one, %181, %182 : vector<8x256xf32>
    %cst_35 = arith.constant 1.000000e+09 : f32
    %184 = vector.broadcast %cst_35 : f32 to vector<8x256xf32>
    %185 = arith.select %183, %179, %184 : vector<8x256xi1>, vector<8x256xf32>
    %186 = vector.extract_strided_slice %70 {offsets = [32, 0], sizes = [8, 1], strides = [1, 1]} : vector<64x1xf32> to vector<8x1xf32>
    %187 = vector.broadcast %186 : vector<8x1xf32> to vector<8x256xf32>
    %188 = vector.broadcast %28 : vector<1x256xf32> to vector<8x256xf32>
    %189 = arith.cmpf one, %187, %188 : vector<8x256xf32>
    %cst_36 = arith.constant 1.000000e+09 : f32
    %190 = vector.broadcast %cst_36 : f32 to vector<8x256xf32>
    %191 = arith.select %189, %179, %190 : vector<8x256xi1>, vector<8x256xf32>
    %192 = arith.minimumf %167, %185 : vector<8x256xf32>
    %193 = arith.minimumf %168, %191 : vector<8x256xf32>
    %194 = vector.extract_strided_slice %47 {offsets = [40, 0], sizes = [8, 1], strides = [1, 1]} : vector<64x1xf32> to vector<8x1xf32>
    %195 = vector.broadcast %194 : vector<8x1xf32> to vector<8x256xf32>
    %196 = vector.broadcast %39 : vector<1x256xf32> to vector<8x256xf32>
    %197 = arith.subf %195, %196 : vector<8x256xf32>
    %198 = arith.mulf %197, %197 : vector<8x256xf32>
    %199 = vector.extract_strided_slice %48 {offsets = [40, 0], sizes = [8, 1], strides = [1, 1]} : vector<64x1xf32> to vector<8x1xf32>
    %200 = vector.broadcast %199 : vector<8x1xf32> to vector<8x256xf32>
    %201 = vector.broadcast %40 : vector<1x256xf32> to vector<8x256xf32>
    %202 = arith.subf %200, %201 : vector<8x256xf32>
    %203 = arith.mulf %202, %202 : vector<8x256xf32>
    %204 = arith.addf %198, %203 : vector<8x256xf32>
    %205 = vector.extract_strided_slice %66 {offsets = [40, 0], sizes = [8, 1], strides = [1, 1]} : vector<64x1xf32> to vector<8x1xf32>
    %206 = vector.broadcast %205 : vector<8x1xf32> to vector<8x256xf32>
    %207 = vector.broadcast %24 : vector<1x256xf32> to vector<8x256xf32>
    %208 = arith.cmpf one, %206, %207 : vector<8x256xf32>
    %cst_37 = arith.constant 1.000000e+09 : f32
    %209 = vector.broadcast %cst_37 : f32 to vector<8x256xf32>
    %210 = arith.select %208, %204, %209 : vector<8x256xi1>, vector<8x256xf32>
    %211 = vector.extract_strided_slice %70 {offsets = [40, 0], sizes = [8, 1], strides = [1, 1]} : vector<64x1xf32> to vector<8x1xf32>
    %212 = vector.broadcast %211 : vector<8x1xf32> to vector<8x256xf32>
    %213 = vector.broadcast %28 : vector<1x256xf32> to vector<8x256xf32>
    %214 = arith.cmpf one, %212, %213 : vector<8x256xf32>
    %cst_38 = arith.constant 1.000000e+09 : f32
    %215 = vector.broadcast %cst_38 : f32 to vector<8x256xf32>
    %216 = arith.select %214, %204, %215 : vector<8x256xi1>, vector<8x256xf32>
    %217 = arith.minimumf %192, %210 : vector<8x256xf32>
    %218 = arith.minimumf %193, %216 : vector<8x256xf32>
    %219 = vector.extract_strided_slice %47 {offsets = [48, 0], sizes = [8, 1], strides = [1, 1]} : vector<64x1xf32> to vector<8x1xf32>
    %220 = vector.broadcast %219 : vector<8x1xf32> to vector<8x256xf32>
    %221 = vector.broadcast %39 : vector<1x256xf32> to vector<8x256xf32>
    %222 = arith.subf %220, %221 : vector<8x256xf32>
    %223 = arith.mulf %222, %222 : vector<8x256xf32>
    %224 = vector.extract_strided_slice %48 {offsets = [48, 0], sizes = [8, 1], strides = [1, 1]} : vector<64x1xf32> to vector<8x1xf32>
    %225 = vector.broadcast %224 : vector<8x1xf32> to vector<8x256xf32>
    %226 = vector.broadcast %40 : vector<1x256xf32> to vector<8x256xf32>
    %227 = arith.subf %225, %226 : vector<8x256xf32>
    %228 = arith.mulf %227, %227 : vector<8x256xf32>
    %229 = arith.addf %223, %228 : vector<8x256xf32>
    %230 = vector.extract_strided_slice %66 {offsets = [48, 0], sizes = [8, 1], strides = [1, 1]} : vector<64x1xf32> to vector<8x1xf32>
    %231 = vector.broadcast %230 : vector<8x1xf32> to vector<8x256xf32>
    %232 = vector.broadcast %24 : vector<1x256xf32> to vector<8x256xf32>
    %233 = arith.cmpf one, %231, %232 : vector<8x256xf32>
    %cst_39 = arith.constant 1.000000e+09 : f32
    %234 = vector.broadcast %cst_39 : f32 to vector<8x256xf32>
    %235 = arith.select %233, %229, %234 : vector<8x256xi1>, vector<8x256xf32>
    %236 = vector.extract_strided_slice %70 {offsets = [48, 0], sizes = [8, 1], strides = [1, 1]} : vector<64x1xf32> to vector<8x1xf32>
    %237 = vector.broadcast %236 : vector<8x1xf32> to vector<8x256xf32>
    %238 = vector.broadcast %28 : vector<1x256xf32> to vector<8x256xf32>
    %239 = arith.cmpf one, %237, %238 : vector<8x256xf32>
    %cst_40 = arith.constant 1.000000e+09 : f32
    %240 = vector.broadcast %cst_40 : f32 to vector<8x256xf32>
    %241 = arith.select %239, %229, %240 : vector<8x256xi1>, vector<8x256xf32>
    %242 = arith.minimumf %217, %235 : vector<8x256xf32>
    %243 = arith.minimumf %218, %241 : vector<8x256xf32>
    %244 = vector.extract_strided_slice %47 {offsets = [56, 0], sizes = [8, 1], strides = [1, 1]} : vector<64x1xf32> to vector<8x1xf32>
    %245 = vector.broadcast %244 : vector<8x1xf32> to vector<8x256xf32>
    %246 = vector.broadcast %39 : vector<1x256xf32> to vector<8x256xf32>
    %247 = arith.subf %245, %246 : vector<8x256xf32>
    %248 = arith.mulf %247, %247 : vector<8x256xf32>
    %249 = vector.extract_strided_slice %48 {offsets = [56, 0], sizes = [8, 1], strides = [1, 1]} : vector<64x1xf32> to vector<8x1xf32>
    %250 = vector.broadcast %249 : vector<8x1xf32> to vector<8x256xf32>
    %251 = vector.broadcast %40 : vector<1x256xf32> to vector<8x256xf32>
    %252 = arith.subf %250, %251 : vector<8x256xf32>
    %253 = arith.mulf %252, %252 : vector<8x256xf32>
    %254 = arith.addf %248, %253 : vector<8x256xf32>
    %255 = vector.extract_strided_slice %66 {offsets = [56, 0], sizes = [8, 1], strides = [1, 1]} : vector<64x1xf32> to vector<8x1xf32>
    %256 = vector.broadcast %255 : vector<8x1xf32> to vector<8x256xf32>
    %257 = vector.broadcast %24 : vector<1x256xf32> to vector<8x256xf32>
    %258 = arith.cmpf one, %256, %257 : vector<8x256xf32>
    %cst_41 = arith.constant 1.000000e+09 : f32
    %259 = vector.broadcast %cst_41 : f32 to vector<8x256xf32>
    %260 = arith.select %258, %254, %259 : vector<8x256xi1>, vector<8x256xf32>
    %261 = vector.extract_strided_slice %70 {offsets = [56, 0], sizes = [8, 1], strides = [1, 1]} : vector<64x1xf32> to vector<8x1xf32>
    %262 = vector.broadcast %261 : vector<8x1xf32> to vector<8x256xf32>
    %263 = vector.broadcast %28 : vector<1x256xf32> to vector<8x256xf32>
    %264 = arith.cmpf one, %262, %263 : vector<8x256xf32>
    %cst_42 = arith.constant 1.000000e+09 : f32
    %265 = vector.broadcast %cst_42 : f32 to vector<8x256xf32>
    %266 = arith.select %264, %254, %265 : vector<8x256xi1>, vector<8x256xf32>
    %267 = arith.minimumf %242, %260 : vector<8x256xf32>
    %268 = arith.minimumf %243, %266 : vector<8x256xf32>
    %c1_i32 = arith.constant 1 : i32
    %c64_i32 = arith.constant 64 : i32
    %269 = arith.muli %c1_i32, %c64_i32 : i32
    %270 = tpu.assume_multiple %269, 64 : i32
    %c0_43 = arith.constant 0 : index
    %271 = arith.index_cast %270 : i32 to index
    %c0_44 = arith.constant 0 : index
    %272 = vector.load %arg3[%c0_43, %271, %c0_44] : memref<1x256x4xf32, #tpu.memory_space<vmem>>, vector<1x64x4xf32>
    %273 = vector.shape_cast %272 : vector<1x64x4xf32> to vector<64x4xf32>
    %c0_45 = arith.constant 0 : index
    %274 = arith.index_cast %270 : i32 to index
    %c0_46 = arith.constant 0 : index
    %275 = vector.load %arg5[%c0_45, %274, %c0_46] : memref<1x256x1xf32, #tpu.memory_space<vmem>>, vector<1x64x1xf32>
    %276 = vector.shape_cast %275 : vector<1x64x1xf32> to vector<64x1xf32>
    %277 = arith.index_cast %270 : i32 to index
    %c0_47 = arith.constant 0 : index
    %278 = vector.load %arg7[%277, %c0_47] : memref<256x2xf32, #tpu.memory_space<vmem>>, vector<64x2xf32>
    %279 = vector.extract_strided_slice %278 {offsets = [0, 0], sizes = [64, 1], strides = [1, 1]} : vector<64x2xf32> to vector<64x1xf32>
    %280 = vector.extract_strided_slice %278 {offsets = [0, 1], sizes = [64, 1], strides = [1, 1]} : vector<64x2xf32> to vector<64x1xf32>
    %cst_48 = arith.constant dense<0xFF800000> : vector<64xf32>
    %281 = vector.multi_reduction <maximumf>, %273, %cst_48 [1] : vector<64x4xf32> to vector<64xf32>
    %282 = vector.shape_cast %281 : vector<64xf32> to vector<64x1xf32>
    %283 = vector.broadcast %282 : vector<64x1xf32> to vector<64x4xf32>
    %284 = arith.subf %273, %283 : vector<64x4xf32>
    %285 = math.exp %284 : vector<64x4xf32>
    %cst_49 = arith.constant dense<0.000000e+00> : vector<64xf32>
    %286 = vector.multi_reduction <add>, %285, %cst_49 [1] : vector<64x4xf32> to vector<64xf32>
    %287 = vector.shape_cast %286 : vector<64xf32> to vector<64x1xf32>
    %288 = vector.broadcast %arg1 : i32 to vector<64x4xi32>
    %289 = arith.cmpi eq, %41, %288 : vector<64x4xi32>
    %cst_50 = arith.constant 0.000000e+00 : f32
    %290 = vector.broadcast %cst_50 : f32 to vector<64x4xf32>
    %291 = arith.select %289, %285, %290 : vector<64x4xi1>, vector<64x4xf32>
    %cst_51 = arith.constant dense<0.000000e+00> : vector<64xf32>
    %292 = vector.multi_reduction <add>, %291, %cst_51 [1] : vector<64x4xf32> to vector<64xf32>
    %293 = vector.shape_cast %292 : vector<64xf32> to vector<64x1xf32>
    %cst_52 = arith.constant 5.000000e-01 : f32
    %294 = vector.broadcast %cst_52 : f32 to vector<64x1xf32>
    %295 = arith.mulf %294, %287 : vector<64x1xf32>
    %296 = arith.cmpf ogt, %293, %295 : vector<64x1xf32>
    %297 = arith.extui %296 : vector<64x1xi1> to vector<64x1xi32>
    %298 = arith.sitofp %297 : vector<64x1xi32> to vector<64x1xf32>
    %299 = vector.broadcast %0 : f32 to vector<64x1xf32>
    %300 = arith.cmpf oeq, %276, %299 : vector<64x1xf32>
    %301 = arith.extui %300 : vector<64x1xi1> to vector<64x1xi32>
    %302 = arith.sitofp %301 : vector<64x1xi32> to vector<64x1xf32>
    %303 = vector.extract_strided_slice %279 {offsets = [0, 0], sizes = [8, 1], strides = [1, 1]} : vector<64x1xf32> to vector<8x1xf32>
    %304 = vector.broadcast %303 : vector<8x1xf32> to vector<8x256xf32>
    %305 = vector.broadcast %39 : vector<1x256xf32> to vector<8x256xf32>
    %306 = arith.subf %304, %305 : vector<8x256xf32>
    %307 = arith.mulf %306, %306 : vector<8x256xf32>
    %308 = vector.extract_strided_slice %280 {offsets = [0, 0], sizes = [8, 1], strides = [1, 1]} : vector<64x1xf32> to vector<8x1xf32>
    %309 = vector.broadcast %308 : vector<8x1xf32> to vector<8x256xf32>
    %310 = vector.broadcast %40 : vector<1x256xf32> to vector<8x256xf32>
    %311 = arith.subf %309, %310 : vector<8x256xf32>
    %312 = arith.mulf %311, %311 : vector<8x256xf32>
    %313 = arith.addf %307, %312 : vector<8x256xf32>
    %314 = vector.extract_strided_slice %298 {offsets = [0, 0], sizes = [8, 1], strides = [1, 1]} : vector<64x1xf32> to vector<8x1xf32>
    %315 = vector.broadcast %314 : vector<8x1xf32> to vector<8x256xf32>
    %316 = vector.broadcast %24 : vector<1x256xf32> to vector<8x256xf32>
    %317 = arith.cmpf one, %315, %316 : vector<8x256xf32>
    %cst_53 = arith.constant 1.000000e+09 : f32
    %318 = vector.broadcast %cst_53 : f32 to vector<8x256xf32>
    %319 = arith.select %317, %313, %318 : vector<8x256xi1>, vector<8x256xf32>
    %320 = vector.extract_strided_slice %302 {offsets = [0, 0], sizes = [8, 1], strides = [1, 1]} : vector<64x1xf32> to vector<8x1xf32>
    %321 = vector.broadcast %320 : vector<8x1xf32> to vector<8x256xf32>
    %322 = vector.broadcast %28 : vector<1x256xf32> to vector<8x256xf32>
    %323 = arith.cmpf one, %321, %322 : vector<8x256xf32>
    %cst_54 = arith.constant 1.000000e+09 : f32
    %324 = vector.broadcast %cst_54 : f32 to vector<8x256xf32>
    %325 = arith.select %323, %313, %324 : vector<8x256xi1>, vector<8x256xf32>
    %326 = arith.minimumf %267, %319 : vector<8x256xf32>
    %327 = arith.minimumf %268, %325 : vector<8x256xf32>
    %328 = vector.extract_strided_slice %279 {offsets = [8, 0], sizes = [8, 1], strides = [1, 1]} : vector<64x1xf32> to vector<8x1xf32>
    %329 = vector.broadcast %328 : vector<8x1xf32> to vector<8x256xf32>
    %330 = vector.broadcast %39 : vector<1x256xf32> to vector<8x256xf32>
    %331 = arith.subf %329, %330 : vector<8x256xf32>
    %332 = arith.mulf %331, %331 : vector<8x256xf32>
    %333 = vector.extract_strided_slice %280 {offsets = [8, 0], sizes = [8, 1], strides = [1, 1]} : vector<64x1xf32> to vector<8x1xf32>
    %334 = vector.broadcast %333 : vector<8x1xf32> to vector<8x256xf32>
    %335 = vector.broadcast %40 : vector<1x256xf32> to vector<8x256xf32>
    %336 = arith.subf %334, %335 : vector<8x256xf32>
    %337 = arith.mulf %336, %336 : vector<8x256xf32>
    %338 = arith.addf %332, %337 : vector<8x256xf32>
    %339 = vector.extract_strided_slice %298 {offsets = [8, 0], sizes = [8, 1], strides = [1, 1]} : vector<64x1xf32> to vector<8x1xf32>
    %340 = vector.broadcast %339 : vector<8x1xf32> to vector<8x256xf32>
    %341 = vector.broadcast %24 : vector<1x256xf32> to vector<8x256xf32>
    %342 = arith.cmpf one, %340, %341 : vector<8x256xf32>
    %cst_55 = arith.constant 1.000000e+09 : f32
    %343 = vector.broadcast %cst_55 : f32 to vector<8x256xf32>
    %344 = arith.select %342, %338, %343 : vector<8x256xi1>, vector<8x256xf32>
    %345 = vector.extract_strided_slice %302 {offsets = [8, 0], sizes = [8, 1], strides = [1, 1]} : vector<64x1xf32> to vector<8x1xf32>
    %346 = vector.broadcast %345 : vector<8x1xf32> to vector<8x256xf32>
    %347 = vector.broadcast %28 : vector<1x256xf32> to vector<8x256xf32>
    %348 = arith.cmpf one, %346, %347 : vector<8x256xf32>
    %cst_56 = arith.constant 1.000000e+09 : f32
    %349 = vector.broadcast %cst_56 : f32 to vector<8x256xf32>
    %350 = arith.select %348, %338, %349 : vector<8x256xi1>, vector<8x256xf32>
    %351 = arith.minimumf %326, %344 : vector<8x256xf32>
    %352 = arith.minimumf %327, %350 : vector<8x256xf32>
    %353 = vector.extract_strided_slice %279 {offsets = [16, 0], sizes = [8, 1], strides = [1, 1]} : vector<64x1xf32> to vector<8x1xf32>
    %354 = vector.broadcast %353 : vector<8x1xf32> to vector<8x256xf32>
    %355 = vector.broadcast %39 : vector<1x256xf32> to vector<8x256xf32>
    %356 = arith.subf %354, %355 : vector<8x256xf32>
    %357 = arith.mulf %356, %356 : vector<8x256xf32>
    %358 = vector.extract_strided_slice %280 {offsets = [16, 0], sizes = [8, 1], strides = [1, 1]} : vector<64x1xf32> to vector<8x1xf32>
    %359 = vector.broadcast %358 : vector<8x1xf32> to vector<8x256xf32>
    %360 = vector.broadcast %40 : vector<1x256xf32> to vector<8x256xf32>
    %361 = arith.subf %359, %360 : vector<8x256xf32>
    %362 = arith.mulf %361, %361 : vector<8x256xf32>
    %363 = arith.addf %357, %362 : vector<8x256xf32>
    %364 = vector.extract_strided_slice %298 {offsets = [16, 0], sizes = [8, 1], strides = [1, 1]} : vector<64x1xf32> to vector<8x1xf32>
    %365 = vector.broadcast %364 : vector<8x1xf32> to vector<8x256xf32>
    %366 = vector.broadcast %24 : vector<1x256xf32> to vector<8x256xf32>
    %367 = arith.cmpf one, %365, %366 : vector<8x256xf32>
    %cst_57 = arith.constant 1.000000e+09 : f32
    %368 = vector.broadcast %cst_57 : f32 to vector<8x256xf32>
    %369 = arith.select %367, %363, %368 : vector<8x256xi1>, vector<8x256xf32>
    %370 = vector.extract_strided_slice %302 {offsets = [16, 0], sizes = [8, 1], strides = [1, 1]} : vector<64x1xf32> to vector<8x1xf32>
    %371 = vector.broadcast %370 : vector<8x1xf32> to vector<8x256xf32>
    %372 = vector.broadcast %28 : vector<1x256xf32> to vector<8x256xf32>
    %373 = arith.cmpf one, %371, %372 : vector<8x256xf32>
    %cst_58 = arith.constant 1.000000e+09 : f32
    %374 = vector.broadcast %cst_58 : f32 to vector<8x256xf32>
    %375 = arith.select %373, %363, %374 : vector<8x256xi1>, vector<8x256xf32>
    %376 = arith.minimumf %351, %369 : vector<8x256xf32>
    %377 = arith.minimumf %352, %375 : vector<8x256xf32>
    %378 = vector.extract_strided_slice %279 {offsets = [24, 0], sizes = [8, 1], strides = [1, 1]} : vector<64x1xf32> to vector<8x1xf32>
    %379 = vector.broadcast %378 : vector<8x1xf32> to vector<8x256xf32>
    %380 = vector.broadcast %39 : vector<1x256xf32> to vector<8x256xf32>
    %381 = arith.subf %379, %380 : vector<8x256xf32>
    %382 = arith.mulf %381, %381 : vector<8x256xf32>
    %383 = vector.extract_strided_slice %280 {offsets = [24, 0], sizes = [8, 1], strides = [1, 1]} : vector<64x1xf32> to vector<8x1xf32>
    %384 = vector.broadcast %383 : vector<8x1xf32> to vector<8x256xf32>
    %385 = vector.broadcast %40 : vector<1x256xf32> to vector<8x256xf32>
    %386 = arith.subf %384, %385 : vector<8x256xf32>
    %387 = arith.mulf %386, %386 : vector<8x256xf32>
    %388 = arith.addf %382, %387 : vector<8x256xf32>
    %389 = vector.extract_strided_slice %298 {offsets = [24, 0], sizes = [8, 1], strides = [1, 1]} : vector<64x1xf32> to vector<8x1xf32>
    %390 = vector.broadcast %389 : vector<8x1xf32> to vector<8x256xf32>
    %391 = vector.broadcast %24 : vector<1x256xf32> to vector<8x256xf32>
    %392 = arith.cmpf one, %390, %391 : vector<8x256xf32>
    %cst_59 = arith.constant 1.000000e+09 : f32
    %393 = vector.broadcast %cst_59 : f32 to vector<8x256xf32>
    %394 = arith.select %392, %388, %393 : vector<8x256xi1>, vector<8x256xf32>
    %395 = vector.extract_strided_slice %302 {offsets = [24, 0], sizes = [8, 1], strides = [1, 1]} : vector<64x1xf32> to vector<8x1xf32>
    %396 = vector.broadcast %395 : vector<8x1xf32> to vector<8x256xf32>
    %397 = vector.broadcast %28 : vector<1x256xf32> to vector<8x256xf32>
    %398 = arith.cmpf one, %396, %397 : vector<8x256xf32>
    %cst_60 = arith.constant 1.000000e+09 : f32
    %399 = vector.broadcast %cst_60 : f32 to vector<8x256xf32>
    %400 = arith.select %398, %388, %399 : vector<8x256xi1>, vector<8x256xf32>
    %401 = arith.minimumf %376, %394 : vector<8x256xf32>
    %402 = arith.minimumf %377, %400 : vector<8x256xf32>
    %403 = vector.extract_strided_slice %279 {offsets = [32, 0], sizes = [8, 1], strides = [1, 1]} : vector<64x1xf32> to vector<8x1xf32>
    %404 = vector.broadcast %403 : vector<8x1xf32> to vector<8x256xf32>
    %405 = vector.broadcast %39 : vector<1x256xf32> to vector<8x256xf32>
    %406 = arith.subf %404, %405 : vector<8x256xf32>
    %407 = arith.mulf %406, %406 : vector<8x256xf32>
    %408 = vector.extract_strided_slice %280 {offsets = [32, 0], sizes = [8, 1], strides = [1, 1]} : vector<64x1xf32> to vector<8x1xf32>
    %409 = vector.broadcast %408 : vector<8x1xf32> to vector<8x256xf32>
    %410 = vector.broadcast %40 : vector<1x256xf32> to vector<8x256xf32>
    %411 = arith.subf %409, %410 : vector<8x256xf32>
    %412 = arith.mulf %411, %411 : vector<8x256xf32>
    %413 = arith.addf %407, %412 : vector<8x256xf32>
    %414 = vector.extract_strided_slice %298 {offsets = [32, 0], sizes = [8, 1], strides = [1, 1]} : vector<64x1xf32> to vector<8x1xf32>
    %415 = vector.broadcast %414 : vector<8x1xf32> to vector<8x256xf32>
    %416 = vector.broadcast %24 : vector<1x256xf32> to vector<8x256xf32>
    %417 = arith.cmpf one, %415, %416 : vector<8x256xf32>
    %cst_61 = arith.constant 1.000000e+09 : f32
    %418 = vector.broadcast %cst_61 : f32 to vector<8x256xf32>
    %419 = arith.select %417, %413, %418 : vector<8x256xi1>, vector<8x256xf32>
    %420 = vector.extract_strided_slice %302 {offsets = [32, 0], sizes = [8, 1], strides = [1, 1]} : vector<64x1xf32> to vector<8x1xf32>
    %421 = vector.broadcast %420 : vector<8x1xf32> to vector<8x256xf32>
    %422 = vector.broadcast %28 : vector<1x256xf32> to vector<8x256xf32>
    %423 = arith.cmpf one, %421, %422 : vector<8x256xf32>
    %cst_62 = arith.constant 1.000000e+09 : f32
    %424 = vector.broadcast %cst_62 : f32 to vector<8x256xf32>
    %425 = arith.select %423, %413, %424 : vector<8x256xi1>, vector<8x256xf32>
    %426 = arith.minimumf %401, %419 : vector<8x256xf32>
    %427 = arith.minimumf %402, %425 : vector<8x256xf32>
    %428 = vector.extract_strided_slice %279 {offsets = [40, 0], sizes = [8, 1], strides = [1, 1]} : vector<64x1xf32> to vector<8x1xf32>
    %429 = vector.broadcast %428 : vector<8x1xf32> to vector<8x256xf32>
    %430 = vector.broadcast %39 : vector<1x256xf32> to vector<8x256xf32>
    %431 = arith.subf %429, %430 : vector<8x256xf32>
    %432 = arith.mulf %431, %431 : vector<8x256xf32>
    %433 = vector.extract_strided_slice %280 {offsets = [40, 0], sizes = [8, 1], strides = [1, 1]} : vector<64x1xf32> to vector<8x1xf32>
    %434 = vector.broadcast %433 : vector<8x1xf32> to vector<8x256xf32>
    %435 = vector.broadcast %40 : vector<1x256xf32> to vector<8x256xf32>
    %436 = arith.subf %434, %435 : vector<8x256xf32>
    %437 = arith.mulf %436, %436 : vector<8x256xf32>
    %438 = arith.addf %432, %437 : vector<8x256xf32>
    %439 = vector.extract_strided_slice %298 {offsets = [40, 0], sizes = [8, 1], strides = [1, 1]} : vector<64x1xf32> to vector<8x1xf32>
    %440 = vector.broadcast %439 : vector<8x1xf32> to vector<8x256xf32>
    %441 = vector.broadcast %24 : vector<1x256xf32> to vector<8x256xf32>
    %442 = arith.cmpf one, %440, %441 : vector<8x256xf32>
    %cst_63 = arith.constant 1.000000e+09 : f32
    %443 = vector.broadcast %cst_63 : f32 to vector<8x256xf32>
    %444 = arith.select %442, %438, %443 : vector<8x256xi1>, vector<8x256xf32>
    %445 = vector.extract_strided_slice %302 {offsets = [40, 0], sizes = [8, 1], strides = [1, 1]} : vector<64x1xf32> to vector<8x1xf32>
    %446 = vector.broadcast %445 : vector<8x1xf32> to vector<8x256xf32>
    %447 = vector.broadcast %28 : vector<1x256xf32> to vector<8x256xf32>
    %448 = arith.cmpf one, %446, %447 : vector<8x256xf32>
    %cst_64 = arith.constant 1.000000e+09 : f32
    %449 = vector.broadcast %cst_64 : f32 to vector<8x256xf32>
    %450 = arith.select %448, %438, %449 : vector<8x256xi1>, vector<8x256xf32>
    %451 = arith.minimumf %426, %444 : vector<8x256xf32>
    %452 = arith.minimumf %427, %450 : vector<8x256xf32>
    %453 = vector.extract_strided_slice %279 {offsets = [48, 0], sizes = [8, 1], strides = [1, 1]} : vector<64x1xf32> to vector<8x1xf32>
    %454 = vector.broadcast %453 : vector<8x1xf32> to vector<8x256xf32>
    %455 = vector.broadcast %39 : vector<1x256xf32> to vector<8x256xf32>
    %456 = arith.subf %454, %455 : vector<8x256xf32>
    %457 = arith.mulf %456, %456 : vector<8x256xf32>
    %458 = vector.extract_strided_slice %280 {offsets = [48, 0], sizes = [8, 1], strides = [1, 1]} : vector<64x1xf32> to vector<8x1xf32>
    %459 = vector.broadcast %458 : vector<8x1xf32> to vector<8x256xf32>
    %460 = vector.broadcast %40 : vector<1x256xf32> to vector<8x256xf32>
    %461 = arith.subf %459, %460 : vector<8x256xf32>
    %462 = arith.mulf %461, %461 : vector<8x256xf32>
    %463 = arith.addf %457, %462 : vector<8x256xf32>
    %464 = vector.extract_strided_slice %298 {offsets = [48, 0], sizes = [8, 1], strides = [1, 1]} : vector<64x1xf32> to vector<8x1xf32>
    %465 = vector.broadcast %464 : vector<8x1xf32> to vector<8x256xf32>
    %466 = vector.broadcast %24 : vector<1x256xf32> to vector<8x256xf32>
    %467 = arith.cmpf one, %465, %466 : vector<8x256xf32>
    %cst_65 = arith.constant 1.000000e+09 : f32
    %468 = vector.broadcast %cst_65 : f32 to vector<8x256xf32>
    %469 = arith.select %467, %463, %468 : vector<8x256xi1>, vector<8x256xf32>
    %470 = vector.extract_strided_slice %302 {offsets = [48, 0], sizes = [8, 1], strides = [1, 1]} : vector<64x1xf32> to vector<8x1xf32>
    %471 = vector.broadcast %470 : vector<8x1xf32> to vector<8x256xf32>
    %472 = vector.broadcast %28 : vector<1x256xf32> to vector<8x256xf32>
    %473 = arith.cmpf one, %471, %472 : vector<8x256xf32>
    %cst_66 = arith.constant 1.000000e+09 : f32
    %474 = vector.broadcast %cst_66 : f32 to vector<8x256xf32>
    %475 = arith.select %473, %463, %474 : vector<8x256xi1>, vector<8x256xf32>
    %476 = arith.minimumf %451, %469 : vector<8x256xf32>
    %477 = arith.minimumf %452, %475 : vector<8x256xf32>
    %478 = vector.extract_strided_slice %279 {offsets = [56, 0], sizes = [8, 1], strides = [1, 1]} : vector<64x1xf32> to vector<8x1xf32>
    %479 = vector.broadcast %478 : vector<8x1xf32> to vector<8x256xf32>
    %480 = vector.broadcast %39 : vector<1x256xf32> to vector<8x256xf32>
    %481 = arith.subf %479, %480 : vector<8x256xf32>
    %482 = arith.mulf %481, %481 : vector<8x256xf32>
    %483 = vector.extract_strided_slice %280 {offsets = [56, 0], sizes = [8, 1], strides = [1, 1]} : vector<64x1xf32> to vector<8x1xf32>
    %484 = vector.broadcast %483 : vector<8x1xf32> to vector<8x256xf32>
    %485 = vector.broadcast %40 : vector<1x256xf32> to vector<8x256xf32>
    %486 = arith.subf %484, %485 : vector<8x256xf32>
    %487 = arith.mulf %486, %486 : vector<8x256xf32>
    %488 = arith.addf %482, %487 : vector<8x256xf32>
    %489 = vector.extract_strided_slice %298 {offsets = [56, 0], sizes = [8, 1], strides = [1, 1]} : vector<64x1xf32> to vector<8x1xf32>
    %490 = vector.broadcast %489 : vector<8x1xf32> to vector<8x256xf32>
    %491 = vector.broadcast %24 : vector<1x256xf32> to vector<8x256xf32>
    %492 = arith.cmpf one, %490, %491 : vector<8x256xf32>
    %cst_67 = arith.constant 1.000000e+09 : f32
    %493 = vector.broadcast %cst_67 : f32 to vector<8x256xf32>
    %494 = arith.select %492, %488, %493 : vector<8x256xi1>, vector<8x256xf32>
    %495 = vector.extract_strided_slice %302 {offsets = [56, 0], sizes = [8, 1], strides = [1, 1]} : vector<64x1xf32> to vector<8x1xf32>
    %496 = vector.broadcast %495 : vector<8x1xf32> to vector<8x256xf32>
    %497 = vector.broadcast %28 : vector<1x256xf32> to vector<8x256xf32>
    %498 = arith.cmpf one, %496, %497 : vector<8x256xf32>
    %cst_68 = arith.constant 1.000000e+09 : f32
    %499 = vector.broadcast %cst_68 : f32 to vector<8x256xf32>
    %500 = arith.select %498, %488, %499 : vector<8x256xi1>, vector<8x256xf32>
    %501 = arith.minimumf %476, %494 : vector<8x256xf32>
    %502 = arith.minimumf %477, %500 : vector<8x256xf32>
    %c2_i32 = arith.constant 2 : i32
    %c64_i32_69 = arith.constant 64 : i32
    %503 = arith.muli %c2_i32, %c64_i32_69 : i32
    %504 = tpu.assume_multiple %503, 64 : i32
    %c0_70 = arith.constant 0 : index
    %505 = arith.index_cast %504 : i32 to index
    %c0_71 = arith.constant 0 : index
    %506 = vector.load %arg3[%c0_70, %505, %c0_71] : memref<1x256x4xf32, #tpu.memory_space<vmem>>, vector<1x64x4xf32>
    %507 = vector.shape_cast %506 : vector<1x64x4xf32> to vector<64x4xf32>
    %c0_72 = arith.constant 0 : index
    %508 = arith.index_cast %504 : i32 to index
    %c0_73 = arith.constant 0 : index
    %509 = vector.load %arg5[%c0_72, %508, %c0_73] : memref<1x256x1xf32, #tpu.memory_space<vmem>>, vector<1x64x1xf32>
    %510 = vector.shape_cast %509 : vector<1x64x1xf32> to vector<64x1xf32>
    %511 = arith.index_cast %504 : i32 to index
    %c0_74 = arith.constant 0 : index
    %512 = vector.load %arg7[%511, %c0_74] : memref<256x2xf32, #tpu.memory_space<vmem>>, vector<64x2xf32>
    %513 = vector.extract_strided_slice %512 {offsets = [0, 0], sizes = [64, 1], strides = [1, 1]} : vector<64x2xf32> to vector<64x1xf32>
    %514 = vector.extract_strided_slice %512 {offsets = [0, 1], sizes = [64, 1], strides = [1, 1]} : vector<64x2xf32> to vector<64x1xf32>
    %cst_75 = arith.constant dense<0xFF800000> : vector<64xf32>
    %515 = vector.multi_reduction <maximumf>, %507, %cst_75 [1] : vector<64x4xf32> to vector<64xf32>
    %516 = vector.shape_cast %515 : vector<64xf32> to vector<64x1xf32>
    %517 = vector.broadcast %516 : vector<64x1xf32> to vector<64x4xf32>
    %518 = arith.subf %507, %517 : vector<64x4xf32>
    %519 = math.exp %518 : vector<64x4xf32>
    %cst_76 = arith.constant dense<0.000000e+00> : vector<64xf32>
    %520 = vector.multi_reduction <add>, %519, %cst_76 [1] : vector<64x4xf32> to vector<64xf32>
    %521 = vector.shape_cast %520 : vector<64xf32> to vector<64x1xf32>
    %522 = vector.broadcast %arg1 : i32 to vector<64x4xi32>
    %523 = arith.cmpi eq, %41, %522 : vector<64x4xi32>
    %cst_77 = arith.constant 0.000000e+00 : f32
    %524 = vector.broadcast %cst_77 : f32 to vector<64x4xf32>
    %525 = arith.select %523, %519, %524 : vector<64x4xi1>, vector<64x4xf32>
    %cst_78 = arith.constant dense<0.000000e+00> : vector<64xf32>
    %526 = vector.multi_reduction <add>, %525, %cst_78 [1] : vector<64x4xf32> to vector<64xf32>
    %527 = vector.shape_cast %526 : vector<64xf32> to vector<64x1xf32>
    %cst_79 = arith.constant 5.000000e-01 : f32
    %528 = vector.broadcast %cst_79 : f32 to vector<64x1xf32>
    %529 = arith.mulf %528, %521 : vector<64x1xf32>
    %530 = arith.cmpf ogt, %527, %529 : vector<64x1xf32>
    %531 = arith.extui %530 : vector<64x1xi1> to vector<64x1xi32>
    %532 = arith.sitofp %531 : vector<64x1xi32> to vector<64x1xf32>
    %533 = vector.broadcast %0 : f32 to vector<64x1xf32>
    %534 = arith.cmpf oeq, %510, %533 : vector<64x1xf32>
    %535 = arith.extui %534 : vector<64x1xi1> to vector<64x1xi32>
    %536 = arith.sitofp %535 : vector<64x1xi32> to vector<64x1xf32>
    %537 = vector.extract_strided_slice %513 {offsets = [0, 0], sizes = [8, 1], strides = [1, 1]} : vector<64x1xf32> to vector<8x1xf32>
    %538 = vector.broadcast %537 : vector<8x1xf32> to vector<8x256xf32>
    %539 = vector.broadcast %39 : vector<1x256xf32> to vector<8x256xf32>
    %540 = arith.subf %538, %539 : vector<8x256xf32>
    %541 = arith.mulf %540, %540 : vector<8x256xf32>
    %542 = vector.extract_strided_slice %514 {offsets = [0, 0], sizes = [8, 1], strides = [1, 1]} : vector<64x1xf32> to vector<8x1xf32>
    %543 = vector.broadcast %542 : vector<8x1xf32> to vector<8x256xf32>
    %544 = vector.broadcast %40 : vector<1x256xf32> to vector<8x256xf32>
    %545 = arith.subf %543, %544 : vector<8x256xf32>
    %546 = arith.mulf %545, %545 : vector<8x256xf32>
    %547 = arith.addf %541, %546 : vector<8x256xf32>
    %548 = vector.extract_strided_slice %532 {offsets = [0, 0], sizes = [8, 1], strides = [1, 1]} : vector<64x1xf32> to vector<8x1xf32>
    %549 = vector.broadcast %548 : vector<8x1xf32> to vector<8x256xf32>
    %550 = vector.broadcast %24 : vector<1x256xf32> to vector<8x256xf32>
    %551 = arith.cmpf one, %549, %550 : vector<8x256xf32>
    %cst_80 = arith.constant 1.000000e+09 : f32
    %552 = vector.broadcast %cst_80 : f32 to vector<8x256xf32>
    %553 = arith.select %551, %547, %552 : vector<8x256xi1>, vector<8x256xf32>
    %554 = vector.extract_strided_slice %536 {offsets = [0, 0], sizes = [8, 1], strides = [1, 1]} : vector<64x1xf32> to vector<8x1xf32>
    %555 = vector.broadcast %554 : vector<8x1xf32> to vector<8x256xf32>
    %556 = vector.broadcast %28 : vector<1x256xf32> to vector<8x256xf32>
    %557 = arith.cmpf one, %555, %556 : vector<8x256xf32>
    %cst_81 = arith.constant 1.000000e+09 : f32
    %558 = vector.broadcast %cst_81 : f32 to vector<8x256xf32>
    %559 = arith.select %557, %547, %558 : vector<8x256xi1>, vector<8x256xf32>
    %560 = arith.minimumf %501, %553 : vector<8x256xf32>
    %561 = arith.minimumf %502, %559 : vector<8x256xf32>
    %562 = vector.extract_strided_slice %513 {offsets = [8, 0], sizes = [8, 1], strides = [1, 1]} : vector<64x1xf32> to vector<8x1xf32>
    %563 = vector.broadcast %562 : vector<8x1xf32> to vector<8x256xf32>
    %564 = vector.broadcast %39 : vector<1x256xf32> to vector<8x256xf32>
    %565 = arith.subf %563, %564 : vector<8x256xf32>
    %566 = arith.mulf %565, %565 : vector<8x256xf32>
    %567 = vector.extract_strided_slice %514 {offsets = [8, 0], sizes = [8, 1], strides = [1, 1]} : vector<64x1xf32> to vector<8x1xf32>
    %568 = vector.broadcast %567 : vector<8x1xf32> to vector<8x256xf32>
    %569 = vector.broadcast %40 : vector<1x256xf32> to vector<8x256xf32>
    %570 = arith.subf %568, %569 : vector<8x256xf32>
    %571 = arith.mulf %570, %570 : vector<8x256xf32>
    %572 = arith.addf %566, %571 : vector<8x256xf32>
    %573 = vector.extract_strided_slice %532 {offsets = [8, 0], sizes = [8, 1], strides = [1, 1]} : vector<64x1xf32> to vector<8x1xf32>
    %574 = vector.broadcast %573 : vector<8x1xf32> to vector<8x256xf32>
    %575 = vector.broadcast %24 : vector<1x256xf32> to vector<8x256xf32>
    %576 = arith.cmpf one, %574, %575 : vector<8x256xf32>
    %cst_82 = arith.constant 1.000000e+09 : f32
    %577 = vector.broadcast %cst_82 : f32 to vector<8x256xf32>
    %578 = arith.select %576, %572, %577 : vector<8x256xi1>, vector<8x256xf32>
    %579 = vector.extract_strided_slice %536 {offsets = [8, 0], sizes = [8, 1], strides = [1, 1]} : vector<64x1xf32> to vector<8x1xf32>
    %580 = vector.broadcast %579 : vector<8x1xf32> to vector<8x256xf32>
    %581 = vector.broadcast %28 : vector<1x256xf32> to vector<8x256xf32>
    %582 = arith.cmpf one, %580, %581 : vector<8x256xf32>
    %cst_83 = arith.constant 1.000000e+09 : f32
    %583 = vector.broadcast %cst_83 : f32 to vector<8x256xf32>
    %584 = arith.select %582, %572, %583 : vector<8x256xi1>, vector<8x256xf32>
    %585 = arith.minimumf %560, %578 : vector<8x256xf32>
    %586 = arith.minimumf %561, %584 : vector<8x256xf32>
    %587 = vector.extract_strided_slice %513 {offsets = [16, 0], sizes = [8, 1], strides = [1, 1]} : vector<64x1xf32> to vector<8x1xf32>
    %588 = vector.broadcast %587 : vector<8x1xf32> to vector<8x256xf32>
    %589 = vector.broadcast %39 : vector<1x256xf32> to vector<8x256xf32>
    %590 = arith.subf %588, %589 : vector<8x256xf32>
    %591 = arith.mulf %590, %590 : vector<8x256xf32>
    %592 = vector.extract_strided_slice %514 {offsets = [16, 0], sizes = [8, 1], strides = [1, 1]} : vector<64x1xf32> to vector<8x1xf32>
    %593 = vector.broadcast %592 : vector<8x1xf32> to vector<8x256xf32>
    %594 = vector.broadcast %40 : vector<1x256xf32> to vector<8x256xf32>
    %595 = arith.subf %593, %594 : vector<8x256xf32>
    %596 = arith.mulf %595, %595 : vector<8x256xf32>
    %597 = arith.addf %591, %596 : vector<8x256xf32>
    %598 = vector.extract_strided_slice %532 {offsets = [16, 0], sizes = [8, 1], strides = [1, 1]} : vector<64x1xf32> to vector<8x1xf32>
    %599 = vector.broadcast %598 : vector<8x1xf32> to vector<8x256xf32>
    %600 = vector.broadcast %24 : vector<1x256xf32> to vector<8x256xf32>
    %601 = arith.cmpf one, %599, %600 : vector<8x256xf32>
    %cst_84 = arith.constant 1.000000e+09 : f32
    %602 = vector.broadcast %cst_84 : f32 to vector<8x256xf32>
    %603 = arith.select %601, %597, %602 : vector<8x256xi1>, vector<8x256xf32>
    %604 = vector.extract_strided_slice %536 {offsets = [16, 0], sizes = [8, 1], strides = [1, 1]} : vector<64x1xf32> to vector<8x1xf32>
    %605 = vector.broadcast %604 : vector<8x1xf32> to vector<8x256xf32>
    %606 = vector.broadcast %28 : vector<1x256xf32> to vector<8x256xf32>
    %607 = arith.cmpf one, %605, %606 : vector<8x256xf32>
    %cst_85 = arith.constant 1.000000e+09 : f32
    %608 = vector.broadcast %cst_85 : f32 to vector<8x256xf32>
    %609 = arith.select %607, %597, %608 : vector<8x256xi1>, vector<8x256xf32>
    %610 = arith.minimumf %585, %603 : vector<8x256xf32>
    %611 = arith.minimumf %586, %609 : vector<8x256xf32>
    %612 = vector.extract_strided_slice %513 {offsets = [24, 0], sizes = [8, 1], strides = [1, 1]} : vector<64x1xf32> to vector<8x1xf32>
    %613 = vector.broadcast %612 : vector<8x1xf32> to vector<8x256xf32>
    %614 = vector.broadcast %39 : vector<1x256xf32> to vector<8x256xf32>
    %615 = arith.subf %613, %614 : vector<8x256xf32>
    %616 = arith.mulf %615, %615 : vector<8x256xf32>
    %617 = vector.extract_strided_slice %514 {offsets = [24, 0], sizes = [8, 1], strides = [1, 1]} : vector<64x1xf32> to vector<8x1xf32>
    %618 = vector.broadcast %617 : vector<8x1xf32> to vector<8x256xf32>
    %619 = vector.broadcast %40 : vector<1x256xf32> to vector<8x256xf32>
    %620 = arith.subf %618, %619 : vector<8x256xf32>
    %621 = arith.mulf %620, %620 : vector<8x256xf32>
    %622 = arith.addf %616, %621 : vector<8x256xf32>
    %623 = vector.extract_strided_slice %532 {offsets = [24, 0], sizes = [8, 1], strides = [1, 1]} : vector<64x1xf32> to vector<8x1xf32>
    %624 = vector.broadcast %623 : vector<8x1xf32> to vector<8x256xf32>
    %625 = vector.broadcast %24 : vector<1x256xf32> to vector<8x256xf32>
    %626 = arith.cmpf one, %624, %625 : vector<8x256xf32>
    %cst_86 = arith.constant 1.000000e+09 : f32
    %627 = vector.broadcast %cst_86 : f32 to vector<8x256xf32>
    %628 = arith.select %626, %622, %627 : vector<8x256xi1>, vector<8x256xf32>
    %629 = vector.extract_strided_slice %536 {offsets = [24, 0], sizes = [8, 1], strides = [1, 1]} : vector<64x1xf32> to vector<8x1xf32>
    %630 = vector.broadcast %629 : vector<8x1xf32> to vector<8x256xf32>
    %631 = vector.broadcast %28 : vector<1x256xf32> to vector<8x256xf32>
    %632 = arith.cmpf one, %630, %631 : vector<8x256xf32>
    %cst_87 = arith.constant 1.000000e+09 : f32
    %633 = vector.broadcast %cst_87 : f32 to vector<8x256xf32>
    %634 = arith.select %632, %622, %633 : vector<8x256xi1>, vector<8x256xf32>
    %635 = arith.minimumf %610, %628 : vector<8x256xf32>
    %636 = arith.minimumf %611, %634 : vector<8x256xf32>
    %637 = vector.extract_strided_slice %513 {offsets = [32, 0], sizes = [8, 1], strides = [1, 1]} : vector<64x1xf32> to vector<8x1xf32>
    %638 = vector.broadcast %637 : vector<8x1xf32> to vector<8x256xf32>
    %639 = vector.broadcast %39 : vector<1x256xf32> to vector<8x256xf32>
    %640 = arith.subf %638, %639 : vector<8x256xf32>
    %641 = arith.mulf %640, %640 : vector<8x256xf32>
    %642 = vector.extract_strided_slice %514 {offsets = [32, 0], sizes = [8, 1], strides = [1, 1]} : vector<64x1xf32> to vector<8x1xf32>
    %643 = vector.broadcast %642 : vector<8x1xf32> to vector<8x256xf32>
    %644 = vector.broadcast %40 : vector<1x256xf32> to vector<8x256xf32>
    %645 = arith.subf %643, %644 : vector<8x256xf32>
    %646 = arith.mulf %645, %645 : vector<8x256xf32>
    %647 = arith.addf %641, %646 : vector<8x256xf32>
    %648 = vector.extract_strided_slice %532 {offsets = [32, 0], sizes = [8, 1], strides = [1, 1]} : vector<64x1xf32> to vector<8x1xf32>
    %649 = vector.broadcast %648 : vector<8x1xf32> to vector<8x256xf32>
    %650 = vector.broadcast %24 : vector<1x256xf32> to vector<8x256xf32>
    %651 = arith.cmpf one, %649, %650 : vector<8x256xf32>
    %cst_88 = arith.constant 1.000000e+09 : f32
    %652 = vector.broadcast %cst_88 : f32 to vector<8x256xf32>
    %653 = arith.select %651, %647, %652 : vector<8x256xi1>, vector<8x256xf32>
    %654 = vector.extract_strided_slice %536 {offsets = [32, 0], sizes = [8, 1], strides = [1, 1]} : vector<64x1xf32> to vector<8x1xf32>
    %655 = vector.broadcast %654 : vector<8x1xf32> to vector<8x256xf32>
    %656 = vector.broadcast %28 : vector<1x256xf32> to vector<8x256xf32>
    %657 = arith.cmpf one, %655, %656 : vector<8x256xf32>
    %cst_89 = arith.constant 1.000000e+09 : f32
    %658 = vector.broadcast %cst_89 : f32 to vector<8x256xf32>
    %659 = arith.select %657, %647, %658 : vector<8x256xi1>, vector<8x256xf32>
    %660 = arith.minimumf %635, %653 : vector<8x256xf32>
    %661 = arith.minimumf %636, %659 : vector<8x256xf32>
    %662 = vector.extract_strided_slice %513 {offsets = [40, 0], sizes = [8, 1], strides = [1, 1]} : vector<64x1xf32> to vector<8x1xf32>
    %663 = vector.broadcast %662 : vector<8x1xf32> to vector<8x256xf32>
    %664 = vector.broadcast %39 : vector<1x256xf32> to vector<8x256xf32>
    %665 = arith.subf %663, %664 : vector<8x256xf32>
    %666 = arith.mulf %665, %665 : vector<8x256xf32>
    %667 = vector.extract_strided_slice %514 {offsets = [40, 0], sizes = [8, 1], strides = [1, 1]} : vector<64x1xf32> to vector<8x1xf32>
    %668 = vector.broadcast %667 : vector<8x1xf32> to vector<8x256xf32>
    %669 = vector.broadcast %40 : vector<1x256xf32> to vector<8x256xf32>
    %670 = arith.subf %668, %669 : vector<8x256xf32>
    %671 = arith.mulf %670, %670 : vector<8x256xf32>
    %672 = arith.addf %666, %671 : vector<8x256xf32>
    %673 = vector.extract_strided_slice %532 {offsets = [40, 0], sizes = [8, 1], strides = [1, 1]} : vector<64x1xf32> to vector<8x1xf32>
    %674 = vector.broadcast %673 : vector<8x1xf32> to vector<8x256xf32>
    %675 = vector.broadcast %24 : vector<1x256xf32> to vector<8x256xf32>
    %676 = arith.cmpf one, %674, %675 : vector<8x256xf32>
    %cst_90 = arith.constant 1.000000e+09 : f32
    %677 = vector.broadcast %cst_90 : f32 to vector<8x256xf32>
    %678 = arith.select %676, %672, %677 : vector<8x256xi1>, vector<8x256xf32>
    %679 = vector.extract_strided_slice %536 {offsets = [40, 0], sizes = [8, 1], strides = [1, 1]} : vector<64x1xf32> to vector<8x1xf32>
    %680 = vector.broadcast %679 : vector<8x1xf32> to vector<8x256xf32>
    %681 = vector.broadcast %28 : vector<1x256xf32> to vector<8x256xf32>
    %682 = arith.cmpf one, %680, %681 : vector<8x256xf32>
    %cst_91 = arith.constant 1.000000e+09 : f32
    %683 = vector.broadcast %cst_91 : f32 to vector<8x256xf32>
    %684 = arith.select %682, %672, %683 : vector<8x256xi1>, vector<8x256xf32>
    %685 = arith.minimumf %660, %678 : vector<8x256xf32>
    %686 = arith.minimumf %661, %684 : vector<8x256xf32>
    %687 = vector.extract_strided_slice %513 {offsets = [48, 0], sizes = [8, 1], strides = [1, 1]} : vector<64x1xf32> to vector<8x1xf32>
    %688 = vector.broadcast %687 : vector<8x1xf32> to vector<8x256xf32>
    %689 = vector.broadcast %39 : vector<1x256xf32> to vector<8x256xf32>
    %690 = arith.subf %688, %689 : vector<8x256xf32>
    %691 = arith.mulf %690, %690 : vector<8x256xf32>
    %692 = vector.extract_strided_slice %514 {offsets = [48, 0], sizes = [8, 1], strides = [1, 1]} : vector<64x1xf32> to vector<8x1xf32>
    %693 = vector.broadcast %692 : vector<8x1xf32> to vector<8x256xf32>
    %694 = vector.broadcast %40 : vector<1x256xf32> to vector<8x256xf32>
    %695 = arith.subf %693, %694 : vector<8x256xf32>
    %696 = arith.mulf %695, %695 : vector<8x256xf32>
    %697 = arith.addf %691, %696 : vector<8x256xf32>
    %698 = vector.extract_strided_slice %532 {offsets = [48, 0], sizes = [8, 1], strides = [1, 1]} : vector<64x1xf32> to vector<8x1xf32>
    %699 = vector.broadcast %698 : vector<8x1xf32> to vector<8x256xf32>
    %700 = vector.broadcast %24 : vector<1x256xf32> to vector<8x256xf32>
    %701 = arith.cmpf one, %699, %700 : vector<8x256xf32>
    %cst_92 = arith.constant 1.000000e+09 : f32
    %702 = vector.broadcast %cst_92 : f32 to vector<8x256xf32>
    %703 = arith.select %701, %697, %702 : vector<8x256xi1>, vector<8x256xf32>
    %704 = vector.extract_strided_slice %536 {offsets = [48, 0], sizes = [8, 1], strides = [1, 1]} : vector<64x1xf32> to vector<8x1xf32>
    %705 = vector.broadcast %704 : vector<8x1xf32> to vector<8x256xf32>
    %706 = vector.broadcast %28 : vector<1x256xf32> to vector<8x256xf32>
    %707 = arith.cmpf one, %705, %706 : vector<8x256xf32>
    %cst_93 = arith.constant 1.000000e+09 : f32
    %708 = vector.broadcast %cst_93 : f32 to vector<8x256xf32>
    %709 = arith.select %707, %697, %708 : vector<8x256xi1>, vector<8x256xf32>
    %710 = arith.minimumf %685, %703 : vector<8x256xf32>
    %711 = arith.minimumf %686, %709 : vector<8x256xf32>
    %712 = vector.extract_strided_slice %513 {offsets = [56, 0], sizes = [8, 1], strides = [1, 1]} : vector<64x1xf32> to vector<8x1xf32>
    %713 = vector.broadcast %712 : vector<8x1xf32> to vector<8x256xf32>
    %714 = vector.broadcast %39 : vector<1x256xf32> to vector<8x256xf32>
    %715 = arith.subf %713, %714 : vector<8x256xf32>
    %716 = arith.mulf %715, %715 : vector<8x256xf32>
    %717 = vector.extract_strided_slice %514 {offsets = [56, 0], sizes = [8, 1], strides = [1, 1]} : vector<64x1xf32> to vector<8x1xf32>
    %718 = vector.broadcast %717 : vector<8x1xf32> to vector<8x256xf32>
    %719 = vector.broadcast %40 : vector<1x256xf32> to vector<8x256xf32>
    %720 = arith.subf %718, %719 : vector<8x256xf32>
    %721 = arith.mulf %720, %720 : vector<8x256xf32>
    %722 = arith.addf %716, %721 : vector<8x256xf32>
    %723 = vector.extract_strided_slice %532 {offsets = [56, 0], sizes = [8, 1], strides = [1, 1]} : vector<64x1xf32> to vector<8x1xf32>
    %724 = vector.broadcast %723 : vector<8x1xf32> to vector<8x256xf32>
    %725 = vector.broadcast %24 : vector<1x256xf32> to vector<8x256xf32>
    %726 = arith.cmpf one, %724, %725 : vector<8x256xf32>
    %cst_94 = arith.constant 1.000000e+09 : f32
    %727 = vector.broadcast %cst_94 : f32 to vector<8x256xf32>
    %728 = arith.select %726, %722, %727 : vector<8x256xi1>, vector<8x256xf32>
    %729 = vector.extract_strided_slice %536 {offsets = [56, 0], sizes = [8, 1], strides = [1, 1]} : vector<64x1xf32> to vector<8x1xf32>
    %730 = vector.broadcast %729 : vector<8x1xf32> to vector<8x256xf32>
    %731 = vector.broadcast %28 : vector<1x256xf32> to vector<8x256xf32>
    %732 = arith.cmpf one, %730, %731 : vector<8x256xf32>
    %cst_95 = arith.constant 1.000000e+09 : f32
    %733 = vector.broadcast %cst_95 : f32 to vector<8x256xf32>
    %734 = arith.select %732, %722, %733 : vector<8x256xi1>, vector<8x256xf32>
    %735 = arith.minimumf %710, %728 : vector<8x256xf32>
    %736 = arith.minimumf %711, %734 : vector<8x256xf32>
    %c3_i32 = arith.constant 3 : i32
    %c64_i32_96 = arith.constant 64 : i32
    %737 = arith.muli %c3_i32, %c64_i32_96 : i32
    %738 = tpu.assume_multiple %737, 64 : i32
    %c0_97 = arith.constant 0 : index
    %739 = arith.index_cast %738 : i32 to index
    %c0_98 = arith.constant 0 : index
    %740 = vector.load %arg3[%c0_97, %739, %c0_98] : memref<1x256x4xf32, #tpu.memory_space<vmem>>, vector<1x64x4xf32>
    %741 = vector.shape_cast %740 : vector<1x64x4xf32> to vector<64x4xf32>
    %c0_99 = arith.constant 0 : index
    %742 = arith.index_cast %738 : i32 to index
    %c0_100 = arith.constant 0 : index
    %743 = vector.load %arg5[%c0_99, %742, %c0_100] : memref<1x256x1xf32, #tpu.memory_space<vmem>>, vector<1x64x1xf32>
    %744 = vector.shape_cast %743 : vector<1x64x1xf32> to vector<64x1xf32>
    %745 = arith.index_cast %738 : i32 to index
    %c0_101 = arith.constant 0 : index
    %746 = vector.load %arg7[%745, %c0_101] : memref<256x2xf32, #tpu.memory_space<vmem>>, vector<64x2xf32>
    %747 = vector.extract_strided_slice %746 {offsets = [0, 0], sizes = [64, 1], strides = [1, 1]} : vector<64x2xf32> to vector<64x1xf32>
    %748 = vector.extract_strided_slice %746 {offsets = [0, 1], sizes = [64, 1], strides = [1, 1]} : vector<64x2xf32> to vector<64x1xf32>
    %cst_102 = arith.constant dense<0xFF800000> : vector<64xf32>
    %749 = vector.multi_reduction <maximumf>, %741, %cst_102 [1] : vector<64x4xf32> to vector<64xf32>
    %750 = vector.shape_cast %749 : vector<64xf32> to vector<64x1xf32>
    %751 = vector.broadcast %750 : vector<64x1xf32> to vector<64x4xf32>
    %752 = arith.subf %741, %751 : vector<64x4xf32>
    %753 = math.exp %752 : vector<64x4xf32>
    %cst_103 = arith.constant dense<0.000000e+00> : vector<64xf32>
    %754 = vector.multi_reduction <add>, %753, %cst_103 [1] : vector<64x4xf32> to vector<64xf32>
    %755 = vector.shape_cast %754 : vector<64xf32> to vector<64x1xf32>
    %756 = vector.broadcast %arg1 : i32 to vector<64x4xi32>
    %757 = arith.cmpi eq, %41, %756 : vector<64x4xi32>
    %cst_104 = arith.constant 0.000000e+00 : f32
    %758 = vector.broadcast %cst_104 : f32 to vector<64x4xf32>
    %759 = arith.select %757, %753, %758 : vector<64x4xi1>, vector<64x4xf32>
    %cst_105 = arith.constant dense<0.000000e+00> : vector<64xf32>
    %760 = vector.multi_reduction <add>, %759, %cst_105 [1] : vector<64x4xf32> to vector<64xf32>
    %761 = vector.shape_cast %760 : vector<64xf32> to vector<64x1xf32>
    %cst_106 = arith.constant 5.000000e-01 : f32
    %762 = vector.broadcast %cst_106 : f32 to vector<64x1xf32>
    %763 = arith.mulf %762, %755 : vector<64x1xf32>
    %764 = arith.cmpf ogt, %761, %763 : vector<64x1xf32>
    %765 = arith.extui %764 : vector<64x1xi1> to vector<64x1xi32>
    %766 = arith.sitofp %765 : vector<64x1xi32> to vector<64x1xf32>
    %767 = vector.broadcast %0 : f32 to vector<64x1xf32>
    %768 = arith.cmpf oeq, %744, %767 : vector<64x1xf32>
    %769 = arith.extui %768 : vector<64x1xi1> to vector<64x1xi32>
    %770 = arith.sitofp %769 : vector<64x1xi32> to vector<64x1xf32>
    %771 = vector.extract_strided_slice %747 {offsets = [0, 0], sizes = [8, 1], strides = [1, 1]} : vector<64x1xf32> to vector<8x1xf32>
    %772 = vector.broadcast %771 : vector<8x1xf32> to vector<8x256xf32>
    %773 = vector.broadcast %39 : vector<1x256xf32> to vector<8x256xf32>
    %774 = arith.subf %772, %773 : vector<8x256xf32>
    %775 = arith.mulf %774, %774 : vector<8x256xf32>
    %776 = vector.extract_strided_slice %748 {offsets = [0, 0], sizes = [8, 1], strides = [1, 1]} : vector<64x1xf32> to vector<8x1xf32>
    %777 = vector.broadcast %776 : vector<8x1xf32> to vector<8x256xf32>
    %778 = vector.broadcast %40 : vector<1x256xf32> to vector<8x256xf32>
    %779 = arith.subf %777, %778 : vector<8x256xf32>
    %780 = arith.mulf %779, %779 : vector<8x256xf32>
    %781 = arith.addf %775, %780 : vector<8x256xf32>
    %782 = vector.extract_strided_slice %766 {offsets = [0, 0], sizes = [8, 1], strides = [1, 1]} : vector<64x1xf32> to vector<8x1xf32>
    %783 = vector.broadcast %782 : vector<8x1xf32> to vector<8x256xf32>
    %784 = vector.broadcast %24 : vector<1x256xf32> to vector<8x256xf32>
    %785 = arith.cmpf one, %783, %784 : vector<8x256xf32>
    %cst_107 = arith.constant 1.000000e+09 : f32
    %786 = vector.broadcast %cst_107 : f32 to vector<8x256xf32>
    %787 = arith.select %785, %781, %786 : vector<8x256xi1>, vector<8x256xf32>
    %788 = vector.extract_strided_slice %770 {offsets = [0, 0], sizes = [8, 1], strides = [1, 1]} : vector<64x1xf32> to vector<8x1xf32>
    %789 = vector.broadcast %788 : vector<8x1xf32> to vector<8x256xf32>
    %790 = vector.broadcast %28 : vector<1x256xf32> to vector<8x256xf32>
    %791 = arith.cmpf one, %789, %790 : vector<8x256xf32>
    %cst_108 = arith.constant 1.000000e+09 : f32
    %792 = vector.broadcast %cst_108 : f32 to vector<8x256xf32>
    %793 = arith.select %791, %781, %792 : vector<8x256xi1>, vector<8x256xf32>
    %794 = arith.minimumf %735, %787 : vector<8x256xf32>
    %795 = arith.minimumf %736, %793 : vector<8x256xf32>
    %796 = vector.extract_strided_slice %747 {offsets = [8, 0], sizes = [8, 1], strides = [1, 1]} : vector<64x1xf32> to vector<8x1xf32>
    %797 = vector.broadcast %796 : vector<8x1xf32> to vector<8x256xf32>
    %798 = vector.broadcast %39 : vector<1x256xf32> to vector<8x256xf32>
    %799 = arith.subf %797, %798 : vector<8x256xf32>
    %800 = arith.mulf %799, %799 : vector<8x256xf32>
    %801 = vector.extract_strided_slice %748 {offsets = [8, 0], sizes = [8, 1], strides = [1, 1]} : vector<64x1xf32> to vector<8x1xf32>
    %802 = vector.broadcast %801 : vector<8x1xf32> to vector<8x256xf32>
    %803 = vector.broadcast %40 : vector<1x256xf32> to vector<8x256xf32>
    %804 = arith.subf %802, %803 : vector<8x256xf32>
    %805 = arith.mulf %804, %804 : vector<8x256xf32>
    %806 = arith.addf %800, %805 : vector<8x256xf32>
    %807 = vector.extract_strided_slice %766 {offsets = [8, 0], sizes = [8, 1], strides = [1, 1]} : vector<64x1xf32> to vector<8x1xf32>
    %808 = vector.broadcast %807 : vector<8x1xf32> to vector<8x256xf32>
    %809 = vector.broadcast %24 : vector<1x256xf32> to vector<8x256xf32>
    %810 = arith.cmpf one, %808, %809 : vector<8x256xf32>
    %cst_109 = arith.constant 1.000000e+09 : f32
    %811 = vector.broadcast %cst_109 : f32 to vector<8x256xf32>
    %812 = arith.select %810, %806, %811 : vector<8x256xi1>, vector<8x256xf32>
    %813 = vector.extract_strided_slice %770 {offsets = [8, 0], sizes = [8, 1], strides = [1, 1]} : vector<64x1xf32> to vector<8x1xf32>
    %814 = vector.broadcast %813 : vector<8x1xf32> to vector<8x256xf32>
    %815 = vector.broadcast %28 : vector<1x256xf32> to vector<8x256xf32>
    %816 = arith.cmpf one, %814, %815 : vector<8x256xf32>
    %cst_110 = arith.constant 1.000000e+09 : f32
    %817 = vector.broadcast %cst_110 : f32 to vector<8x256xf32>
    %818 = arith.select %816, %806, %817 : vector<8x256xi1>, vector<8x256xf32>
    %819 = arith.minimumf %794, %812 : vector<8x256xf32>
    %820 = arith.minimumf %795, %818 : vector<8x256xf32>
    %821 = vector.extract_strided_slice %747 {offsets = [16, 0], sizes = [8, 1], strides = [1, 1]} : vector<64x1xf32> to vector<8x1xf32>
    %822 = vector.broadcast %821 : vector<8x1xf32> to vector<8x256xf32>
    %823 = vector.broadcast %39 : vector<1x256xf32> to vector<8x256xf32>
    %824 = arith.subf %822, %823 : vector<8x256xf32>
    %825 = arith.mulf %824, %824 : vector<8x256xf32>
    %826 = vector.extract_strided_slice %748 {offsets = [16, 0], sizes = [8, 1], strides = [1, 1]} : vector<64x1xf32> to vector<8x1xf32>
    %827 = vector.broadcast %826 : vector<8x1xf32> to vector<8x256xf32>
    %828 = vector.broadcast %40 : vector<1x256xf32> to vector<8x256xf32>
    %829 = arith.subf %827, %828 : vector<8x256xf32>
    %830 = arith.mulf %829, %829 : vector<8x256xf32>
    %831 = arith.addf %825, %830 : vector<8x256xf32>
    %832 = vector.extract_strided_slice %766 {offsets = [16, 0], sizes = [8, 1], strides = [1, 1]} : vector<64x1xf32> to vector<8x1xf32>
    %833 = vector.broadcast %832 : vector<8x1xf32> to vector<8x256xf32>
    %834 = vector.broadcast %24 : vector<1x256xf32> to vector<8x256xf32>
    %835 = arith.cmpf one, %833, %834 : vector<8x256xf32>
    %cst_111 = arith.constant 1.000000e+09 : f32
    %836 = vector.broadcast %cst_111 : f32 to vector<8x256xf32>
    %837 = arith.select %835, %831, %836 : vector<8x256xi1>, vector<8x256xf32>
    %838 = vector.extract_strided_slice %770 {offsets = [16, 0], sizes = [8, 1], strides = [1, 1]} : vector<64x1xf32> to vector<8x1xf32>
    %839 = vector.broadcast %838 : vector<8x1xf32> to vector<8x256xf32>
    %840 = vector.broadcast %28 : vector<1x256xf32> to vector<8x256xf32>
    %841 = arith.cmpf one, %839, %840 : vector<8x256xf32>
    %cst_112 = arith.constant 1.000000e+09 : f32
    %842 = vector.broadcast %cst_112 : f32 to vector<8x256xf32>
    %843 = arith.select %841, %831, %842 : vector<8x256xi1>, vector<8x256xf32>
    %844 = arith.minimumf %819, %837 : vector<8x256xf32>
    %845 = arith.minimumf %820, %843 : vector<8x256xf32>
    %846 = vector.extract_strided_slice %747 {offsets = [24, 0], sizes = [8, 1], strides = [1, 1]} : vector<64x1xf32> to vector<8x1xf32>
    %847 = vector.broadcast %846 : vector<8x1xf32> to vector<8x256xf32>
    %848 = vector.broadcast %39 : vector<1x256xf32> to vector<8x256xf32>
    %849 = arith.subf %847, %848 : vector<8x256xf32>
    %850 = arith.mulf %849, %849 : vector<8x256xf32>
    %851 = vector.extract_strided_slice %748 {offsets = [24, 0], sizes = [8, 1], strides = [1, 1]} : vector<64x1xf32> to vector<8x1xf32>
    %852 = vector.broadcast %851 : vector<8x1xf32> to vector<8x256xf32>
    %853 = vector.broadcast %40 : vector<1x256xf32> to vector<8x256xf32>
    %854 = arith.subf %852, %853 : vector<8x256xf32>
    %855 = arith.mulf %854, %854 : vector<8x256xf32>
    %856 = arith.addf %850, %855 : vector<8x256xf32>
    %857 = vector.extract_strided_slice %766 {offsets = [24, 0], sizes = [8, 1], strides = [1, 1]} : vector<64x1xf32> to vector<8x1xf32>
    %858 = vector.broadcast %857 : vector<8x1xf32> to vector<8x256xf32>
    %859 = vector.broadcast %24 : vector<1x256xf32> to vector<8x256xf32>
    %860 = arith.cmpf one, %858, %859 : vector<8x256xf32>
    %cst_113 = arith.constant 1.000000e+09 : f32
    %861 = vector.broadcast %cst_113 : f32 to vector<8x256xf32>
    %862 = arith.select %860, %856, %861 : vector<8x256xi1>, vector<8x256xf32>
    %863 = vector.extract_strided_slice %770 {offsets = [24, 0], sizes = [8, 1], strides = [1, 1]} : vector<64x1xf32> to vector<8x1xf32>
    %864 = vector.broadcast %863 : vector<8x1xf32> to vector<8x256xf32>
    %865 = vector.broadcast %28 : vector<1x256xf32> to vector<8x256xf32>
    %866 = arith.cmpf one, %864, %865 : vector<8x256xf32>
    %cst_114 = arith.constant 1.000000e+09 : f32
    %867 = vector.broadcast %cst_114 : f32 to vector<8x256xf32>
    %868 = arith.select %866, %856, %867 : vector<8x256xi1>, vector<8x256xf32>
    %869 = arith.minimumf %844, %862 : vector<8x256xf32>
    %870 = arith.minimumf %845, %868 : vector<8x256xf32>
    %871 = vector.extract_strided_slice %747 {offsets = [32, 0], sizes = [8, 1], strides = [1, 1]} : vector<64x1xf32> to vector<8x1xf32>
    %872 = vector.broadcast %871 : vector<8x1xf32> to vector<8x256xf32>
    %873 = vector.broadcast %39 : vector<1x256xf32> to vector<8x256xf32>
    %874 = arith.subf %872, %873 : vector<8x256xf32>
    %875 = arith.mulf %874, %874 : vector<8x256xf32>
    %876 = vector.extract_strided_slice %748 {offsets = [32, 0], sizes = [8, 1], strides = [1, 1]} : vector<64x1xf32> to vector<8x1xf32>
    %877 = vector.broadcast %876 : vector<8x1xf32> to vector<8x256xf32>
    %878 = vector.broadcast %40 : vector<1x256xf32> to vector<8x256xf32>
    %879 = arith.subf %877, %878 : vector<8x256xf32>
    %880 = arith.mulf %879, %879 : vector<8x256xf32>
    %881 = arith.addf %875, %880 : vector<8x256xf32>
    %882 = vector.extract_strided_slice %766 {offsets = [32, 0], sizes = [8, 1], strides = [1, 1]} : vector<64x1xf32> to vector<8x1xf32>
    %883 = vector.broadcast %882 : vector<8x1xf32> to vector<8x256xf32>
    %884 = vector.broadcast %24 : vector<1x256xf32> to vector<8x256xf32>
    %885 = arith.cmpf one, %883, %884 : vector<8x256xf32>
    %cst_115 = arith.constant 1.000000e+09 : f32
    %886 = vector.broadcast %cst_115 : f32 to vector<8x256xf32>
    %887 = arith.select %885, %881, %886 : vector<8x256xi1>, vector<8x256xf32>
    %888 = vector.extract_strided_slice %770 {offsets = [32, 0], sizes = [8, 1], strides = [1, 1]} : vector<64x1xf32> to vector<8x1xf32>
    %889 = vector.broadcast %888 : vector<8x1xf32> to vector<8x256xf32>
    %890 = vector.broadcast %28 : vector<1x256xf32> to vector<8x256xf32>
    %891 = arith.cmpf one, %889, %890 : vector<8x256xf32>
    %cst_116 = arith.constant 1.000000e+09 : f32
    %892 = vector.broadcast %cst_116 : f32 to vector<8x256xf32>
    %893 = arith.select %891, %881, %892 : vector<8x256xi1>, vector<8x256xf32>
    %894 = arith.minimumf %869, %887 : vector<8x256xf32>
    %895 = arith.minimumf %870, %893 : vector<8x256xf32>
    %896 = vector.extract_strided_slice %747 {offsets = [40, 0], sizes = [8, 1], strides = [1, 1]} : vector<64x1xf32> to vector<8x1xf32>
    %897 = vector.broadcast %896 : vector<8x1xf32> to vector<8x256xf32>
    %898 = vector.broadcast %39 : vector<1x256xf32> to vector<8x256xf32>
    %899 = arith.subf %897, %898 : vector<8x256xf32>
    %900 = arith.mulf %899, %899 : vector<8x256xf32>
    %901 = vector.extract_strided_slice %748 {offsets = [40, 0], sizes = [8, 1], strides = [1, 1]} : vector<64x1xf32> to vector<8x1xf32>
    %902 = vector.broadcast %901 : vector<8x1xf32> to vector<8x256xf32>
    %903 = vector.broadcast %40 : vector<1x256xf32> to vector<8x256xf32>
    %904 = arith.subf %902, %903 : vector<8x256xf32>
    %905 = arith.mulf %904, %904 : vector<8x256xf32>
    %906 = arith.addf %900, %905 : vector<8x256xf32>
    %907 = vector.extract_strided_slice %766 {offsets = [40, 0], sizes = [8, 1], strides = [1, 1]} : vector<64x1xf32> to vector<8x1xf32>
    %908 = vector.broadcast %907 : vector<8x1xf32> to vector<8x256xf32>
    %909 = vector.broadcast %24 : vector<1x256xf32> to vector<8x256xf32>
    %910 = arith.cmpf one, %908, %909 : vector<8x256xf32>
    %cst_117 = arith.constant 1.000000e+09 : f32
    %911 = vector.broadcast %cst_117 : f32 to vector<8x256xf32>
    %912 = arith.select %910, %906, %911 : vector<8x256xi1>, vector<8x256xf32>
    %913 = vector.extract_strided_slice %770 {offsets = [40, 0], sizes = [8, 1], strides = [1, 1]} : vector<64x1xf32> to vector<8x1xf32>
    %914 = vector.broadcast %913 : vector<8x1xf32> to vector<8x256xf32>
    %915 = vector.broadcast %28 : vector<1x256xf32> to vector<8x256xf32>
    %916 = arith.cmpf one, %914, %915 : vector<8x256xf32>
    %cst_118 = arith.constant 1.000000e+09 : f32
    %917 = vector.broadcast %cst_118 : f32 to vector<8x256xf32>
    %918 = arith.select %916, %906, %917 : vector<8x256xi1>, vector<8x256xf32>
    %919 = arith.minimumf %894, %912 : vector<8x256xf32>
    %920 = arith.minimumf %895, %918 : vector<8x256xf32>
    %921 = vector.extract_strided_slice %747 {offsets = [48, 0], sizes = [8, 1], strides = [1, 1]} : vector<64x1xf32> to vector<8x1xf32>
    %922 = vector.broadcast %921 : vector<8x1xf32> to vector<8x256xf32>
    %923 = vector.broadcast %39 : vector<1x256xf32> to vector<8x256xf32>
    %924 = arith.subf %922, %923 : vector<8x256xf32>
    %925 = arith.mulf %924, %924 : vector<8x256xf32>
    %926 = vector.extract_strided_slice %748 {offsets = [48, 0], sizes = [8, 1], strides = [1, 1]} : vector<64x1xf32> to vector<8x1xf32>
    %927 = vector.broadcast %926 : vector<8x1xf32> to vector<8x256xf32>
    %928 = vector.broadcast %40 : vector<1x256xf32> to vector<8x256xf32>
    %929 = arith.subf %927, %928 : vector<8x256xf32>
    %930 = arith.mulf %929, %929 : vector<8x256xf32>
    %931 = arith.addf %925, %930 : vector<8x256xf32>
    %932 = vector.extract_strided_slice %766 {offsets = [48, 0], sizes = [8, 1], strides = [1, 1]} : vector<64x1xf32> to vector<8x1xf32>
    %933 = vector.broadcast %932 : vector<8x1xf32> to vector<8x256xf32>
    %934 = vector.broadcast %24 : vector<1x256xf32> to vector<8x256xf32>
    %935 = arith.cmpf one, %933, %934 : vector<8x256xf32>
    %cst_119 = arith.constant 1.000000e+09 : f32
    %936 = vector.broadcast %cst_119 : f32 to vector<8x256xf32>
    %937 = arith.select %935, %931, %936 : vector<8x256xi1>, vector<8x256xf32>
    %938 = vector.extract_strided_slice %770 {offsets = [48, 0], sizes = [8, 1], strides = [1, 1]} : vector<64x1xf32> to vector<8x1xf32>
    %939 = vector.broadcast %938 : vector<8x1xf32> to vector<8x256xf32>
    %940 = vector.broadcast %28 : vector<1x256xf32> to vector<8x256xf32>
    %941 = arith.cmpf one, %939, %940 : vector<8x256xf32>
    %cst_120 = arith.constant 1.000000e+09 : f32
    %942 = vector.broadcast %cst_120 : f32 to vector<8x256xf32>
    %943 = arith.select %941, %931, %942 : vector<8x256xi1>, vector<8x256xf32>
    %944 = arith.minimumf %919, %937 : vector<8x256xf32>
    %945 = arith.minimumf %920, %943 : vector<8x256xf32>
    %946 = vector.extract_strided_slice %747 {offsets = [56, 0], sizes = [8, 1], strides = [1, 1]} : vector<64x1xf32> to vector<8x1xf32>
    %947 = vector.broadcast %946 : vector<8x1xf32> to vector<8x256xf32>
    %948 = vector.broadcast %39 : vector<1x256xf32> to vector<8x256xf32>
    %949 = arith.subf %947, %948 : vector<8x256xf32>
    %950 = arith.mulf %949, %949 : vector<8x256xf32>
    %951 = vector.extract_strided_slice %748 {offsets = [56, 0], sizes = [8, 1], strides = [1, 1]} : vector<64x1xf32> to vector<8x1xf32>
    %952 = vector.broadcast %951 : vector<8x1xf32> to vector<8x256xf32>
    %953 = vector.broadcast %40 : vector<1x256xf32> to vector<8x256xf32>
    %954 = arith.subf %952, %953 : vector<8x256xf32>
    %955 = arith.mulf %954, %954 : vector<8x256xf32>
    %956 = arith.addf %950, %955 : vector<8x256xf32>
    %957 = vector.extract_strided_slice %766 {offsets = [56, 0], sizes = [8, 1], strides = [1, 1]} : vector<64x1xf32> to vector<8x1xf32>
    %958 = vector.broadcast %957 : vector<8x1xf32> to vector<8x256xf32>
    %959 = vector.broadcast %24 : vector<1x256xf32> to vector<8x256xf32>
    %960 = arith.cmpf one, %958, %959 : vector<8x256xf32>
    %cst_121 = arith.constant 1.000000e+09 : f32
    %961 = vector.broadcast %cst_121 : f32 to vector<8x256xf32>
    %962 = arith.select %960, %956, %961 : vector<8x256xi1>, vector<8x256xf32>
    %963 = vector.extract_strided_slice %770 {offsets = [56, 0], sizes = [8, 1], strides = [1, 1]} : vector<64x1xf32> to vector<8x1xf32>
    %964 = vector.broadcast %963 : vector<8x1xf32> to vector<8x256xf32>
    %965 = vector.broadcast %28 : vector<1x256xf32> to vector<8x256xf32>
    %966 = arith.cmpf one, %964, %965 : vector<8x256xf32>
    %cst_122 = arith.constant 1.000000e+09 : f32
    %967 = vector.broadcast %cst_122 : f32 to vector<8x256xf32>
    %968 = arith.select %966, %956, %967 : vector<8x256xi1>, vector<8x256xf32>
    %969 = arith.minimumf %944, %962 : vector<8x256xf32>
    %970 = arith.minimumf %945, %968 : vector<8x256xf32>
    %c3_i32_123 = arith.constant 3 : i32
    %cst_124 = arith.constant dense<0x7F800000> : vector<256xf32>
    %971 = vector.multi_reduction <minimumf>, %969, %cst_124 [0] : vector<8x256xf32> to vector<256xf32>
    %972 = vector.shape_cast %971 : vector<256xf32> to vector<1x256xf32>
    %cst_125 = arith.constant 5.000000e+08 : f32
    %973 = vector.broadcast %cst_125 : f32 to vector<1x256xf32>
    %974 = arith.cmpf oge, %972, %973 : vector<1x256xf32>
    %cst_126 = arith.constant 0.000000e+00 : f32
    %975 = vector.broadcast %cst_126 : f32 to vector<1x256xf32>
    %976 = arith.select %974, %975, %972 : vector<1x256xi1>, vector<1x256xf32>
    %cst_127 = arith.constant dense<0x7F800000> : vector<256xf32>
    %977 = vector.multi_reduction <minimumf>, %970, %cst_127 [0] : vector<8x256xf32> to vector<256xf32>
    %978 = vector.shape_cast %977 : vector<256xf32> to vector<1x256xf32>
    %cst_128 = arith.constant 5.000000e+08 : f32
    %979 = vector.broadcast %cst_128 : f32 to vector<1x256xf32>
    %980 = arith.cmpf oge, %978, %979 : vector<1x256xf32>
    %cst_129 = arith.constant 0.000000e+00 : f32
    %981 = vector.broadcast %cst_129 : f32 to vector<1x256xf32>
    %982 = arith.select %980, %981, %978 : vector<1x256xi1>, vector<1x256xf32>
    %983 = vector.broadcast %34 : f32 to vector<1x256xf32>
    %984 = arith.mulf %976, %983 : vector<1x256xf32>
    %985 = vector.broadcast %38 : f32 to vector<1x256xf32>
    %986 = arith.mulf %982, %985 : vector<1x256xf32>
    %987 = arith.addf %984, %986 : vector<1x256xf32>
    %988 = arith.mulf %30, %987 : vector<1x256xf32>
    %989 = vector.shape_cast %988 : vector<1x256xf32> to vector<1x1x256xf32>
    %cst_130 = arith.constant dense<0.000000e+00> : vector<1xf32>
    %990 = vector.multi_reduction <add>, %989, %cst_130 [1, 2] : vector<1x1x256xf32> to vector<1xf32>
    %991 = vector.shape_cast %990 : vector<1xf32> to vector<1x1x1xf32>
    %992 = vector.extract %991[0, 0, 0] : f32 from vector<1x1x1xf32>
    %993 = vector.broadcast %992 : f32 to vector<1x128xf32>
    %c0_131 = arith.constant 0 : index
    %c0_132 = arith.constant 0 : index
    %c0_133 = arith.constant 0 : index
    %c0_134 = arith.constant 0 : index
    %994 = vector.load %arg8[%c0_131, %c0_132, %c0_133, %c0_134] : memref<1x1x1x128xf32, #tpu.memory_space<vmem>>, vector<1x1x1x128xf32>
    %995 = vector.shape_cast %994 : vector<1x1x1x128xf32> to vector<1x128xf32>
    %996 = vector.shape_cast %993 : vector<1x128xf32> to vector<1x1x1x128xf32>
    tpu.vector_store %arg8[%c0_131, %c0_132, %c0_133, %c0_134], %996 {strides = array<i32>} : memref<1x1x1x128xf32, #tpu.memory_space<vmem>>, vector<1x1x1x128xf32>,
    return
  }
  func.func @transform_0(%arg0: i32, %arg1: i32) -> (i32, i32, i32) {
    %c0_i32 = arith.constant 0 : i32
    %c0_i32_0 = arith.constant 0 : i32
    %c0_i32_1 = arith.constant 0 : i32
    return %arg0, %c0_i32, %c0_i32_0 : i32, i32, i32
  }
  func.func @transform_1(%arg0: i32, %arg1: i32) -> (i32, i32, i32) {
    %c0_i32 = arith.constant 0 : i32
    %c0_i32_0 = arith.constant 0 : i32
    %c0_i32_1 = arith.constant 0 : i32
    return %arg0, %c0_i32, %c0_i32_0 : i32, i32, i32
  }
  func.func @transform_2(%arg0: i32, %arg1: i32) -> (i32, i32, i32) {
    %c0_i32 = arith.constant 0 : i32
    %c0_i32_0 = arith.constant 0 : i32
    %c0_i32_1 = arith.constant 0 : i32
    return %arg0, %c0_i32, %c0_i32_0 : i32, i32, i32
  }
  func.func @transform_3(%arg0: i32, %arg1: i32) -> (i32, i32, i32) {
    %c0_i32 = arith.constant 0 : i32
    %c0_i32_0 = arith.constant 0 : i32
    %c0_i32_1 = arith.constant 0 : i32
    return %arg0, %c0_i32, %c0_i32_0 : i32, i32, i32
  }
  func.func @transform_4(%arg0: i32, %arg1: i32) -> (i32, i32) {
    %c0_i32 = arith.constant 0 : i32
    %c0_i32_0 = arith.constant 0 : i32
    %c0_i32_1 = arith.constant 0 : i32
    return %c0_i32, %c0_i32_0 : i32, i32
  }
  func.func @transform_5(%arg0: i32, %arg1: i32) -> (i32, i32) {
    %c0_i32 = arith.constant 0 : i32
    %c0_i32_0 = arith.constant 0 : i32
    %c0_i32_1 = arith.constant 0 : i32
    return %c0_i32, %c0_i32_0 : i32, i32
  }
  func.func @transform_6(%arg0: i32, %arg1: i32) -> (i32, i32, i32, i32) {
    %c0_i32 = arith.constant 0 : i32
    %c0_i32_0 = arith.constant 0 : i32
    %c0_i32_1 = arith.constant 0 : i32
    return %arg0, %arg1, %c0_i32, %c0_i32_0 : i32, i32, i32, i32
  }
}

</mosaic_0001>

<llo_original>
// kernel: tpu_custom_call.1
$region0: #{tpu_custom_call.1}
  #allocation0 [shape = 'u32[]', space=smem, size = 0x4, offset = 0x4, fixed_abs, tag = 'smem constant byte address 0x4 - core index']
  #allocation1 [shape = 'u32[144,128]{1,0:T(1,128)}', space=vmem, size = 0x12000, scoped, tag = 'internal scratch']
  %s0 = inlined_call_operand.vmem [shape: f32[2,4,256], index: 0, kind: input, shape index: {}]
  %s1 = inlined_call_operand.vmem [shape: f32[2,256,4], index: 1, kind: input, shape index: {}]
  %s2 = inlined_call_operand.vmem [shape: f32[2,1,256], index: 2, kind: input, shape index: {}]
  %s3 = inlined_call_operand.vmem [shape: f32[2,256,1], index: 3, kind: input, shape index: {}]
  %s4 = inlined_call_operand.vmem [shape: f32[2,256], index: 4, kind: input, shape index: {}]
  %s5 = inlined_call_operand.vmem [shape: f32[256,2], index: 5, kind: input, shape index: {}]
  %s6 = inlined_call_operand.hbm [shape: f32[2,4,1,128], index: 6, kind: output, shape index: {}]
  %s7 = sld [smem:[#allocation0]]
  $region57: #{tpu_custom_call.1} parent=0
    _
  %s9 = ssub.s32 1, %s7
  %s10 = scalar_select 0, %s9, %s7
  $region1: #{tpu_custom_call.1} parent=0
    #allocation2 [shape = 'u8[1024]{0}', space=vmem, size = 0x400, scoped, tag = 'output window, operand 0']
    #allocation3 [shape = 's32[2]{0}', space=sflag, size = 0x8, scoped, tag = 'scoped memory for tpu_custom_call.1']
    %11 = vsyncpa [#allocation3], 0
    %s12 = scalar_lea.sflag [#allocation3], 1
    %13 = vsyncpa %s12, 0
    loop: start=0, step=1, limit=10
    $region2: #{tpu_custom_call.1} parent=1 // loop_pre_header
      _
    $region3: #{tpu_custom_call.1} parent=1 // loop_header
      %s15 = sphi 0, %s19
      %p16 = scmp.ge.s32.totalorder %s15, 10
      %s22 = sphi 0, %s34
      %s23 = sphi 0, %s30
      %s24 = sphi 0, %s22
      %s25 = sphi 0, %s23
      %s26 = sphi 0, %s24
      %s27 = sphi 0, %s25
      %s37 = sphi 0, %s39
      %s40 = sphi 0, %s37
      %s41 = sphi 0, %s40
      %s57 = sphi 0, %s41
      %s63 = sphi 0, %s65
      %s66 = sphi 0, %s63
      %s67 = sphi 0, %s66
      %s83 = sphi 0, %s67
      %s89 = sphi 0, %s91
      %s92 = sphi 0, %s89
      %s93 = sphi 0, %s92
      %s109 = sphi 0, %s93
      %s115 = sphi 0, %s117
      %s118 = sphi 0, %s115
      %s119 = sphi 0, %s118
      %s135 = sphi 0, %s119
      %s139 = sphi 0, %s139
      %s141 = sphi 0, %s139
      %s142 = sphi 0, %s141
      %s156 = sphi 0, %s142
      %s160 = sphi 0, %s160
      %s162 = sphi 0, %s160
      %s163 = sphi 0, %s162
      %s177 = sphi 0, %s163
      %s185 = sphi 0, %s187
      %s188 = sphi 0, %s185
      %s189 = sphi 0, %s188
      %s205 = sphi 0, %s189
    $region4: #{tpu_custom_call.1} parent=1 // loop_header_branch
      %18 = sbr.rel (%p16) target = $region8
    $region5: #{tpu_custom_call.1} parent=1 // loop_body
      %s20 = ssub.s32 %s15, 1
      %s21 = ssub.s32 %s15, 2
      %s28 = sadd.s32 1, %s23
      %p29 = scmp.ge.s32.totalorder %s28, 4
      %s30 = scalar_select %p29, 0, %s28
      %s31 = sadd.s32 1, %s22
      %s32 = scalar_select %p29, %s31, %s22
      %p33 = scmp.ge.s32.totalorder %s32, 2
      %s34 = scalar_select %p33, 0, %s32
      %s35 = ssub.s32 %s22, %s34
      %p36 = scmp.eq.s32.totalorder %s35, 0
      %s38 = sadd.s32 %s37, 1
      %s39 = scalar_select %p36, %s37, %s38
      %p42 = pneg %p36
      %p43 = scmp.eq.s32.totalorder %s15, 7
      %p44 = por %p42, %p43
      %p45 = scmp.ne.s32.totalorder %s37, %s40
      %p46 = scmp.eq.s32.totalorder %s15, 0
      %p47 = por %p45, %p46
      %p48 = scmp.ne.s32.totalorder %s37, %s40
      %p49 = scmp.eq.s32.totalorder %s20, 7
      %p50 = por %p48, %p49
      %p51 = scmp.ne.s32.totalorder %s40, %s41
      %p52 = scmp.eq.s32.totalorder %s20, 0
      %p53 = por %p51, %p52
      %p54 = scmp.ne.s32.totalorder %s40, %s41
      %p55 = scmp.eq.s32.totalorder %s21, 7
      %p56 = por %p54, %p55
      %p58 = scmp.ne.s32.totalorder %s41, %s57
      %p59 = scmp.eq.s32.totalorder %s21, 0
      %p60 = por %p58, %p59
      %s61 = ssub.s32 %s22, %s34
      %p62 = scmp.eq.s32.totalorder %s61, 0
      %s64 = sadd.s32 %s63, 1
      %s65 = scalar_select %p62, %s63, %s64
      %p68 = pneg %p62
      %p69 = scmp.eq.s32.totalorder %s15, 7
      %p70 = por %p68, %p69
      %p71 = scmp.ne.s32.totalorder %s63, %s66
      %p72 = scmp.eq.s32.totalorder %s15, 0
      %p73 = por %p71, %p72
      %p74 = scmp.ne.s32.totalorder %s63, %s66
      %p75 = scmp.eq.s32.totalorder %s20, 7
      %p76 = por %p74, %p75
      %p77 = scmp.ne.s32.totalorder %s66, %s67
      %p78 = scmp.eq.s32.totalorder %s20, 0
      %p79 = por %p77, %p78
      %p80 = scmp.ne.s32.totalorder %s66, %s67
      %p81 = scmp.eq.s32.totalorder %s21, 7
      %p82 = por %p80, %p81
      %p84 = scmp.ne.s32.totalorder %s67, %s83
      %p85 = scmp.eq.s32.totalorder %s21, 0
      %p86 = por %p84, %p85
      %s87 = ssub.s32 %s22, %s34
      %p88 = scmp.eq.s32.totalorder %s87, 0
      %s90 = sadd.s32 %s89, 1
      %s91 = scalar_select %p88, %s89, %s90
      %p94 = pneg %p88
      %p95 = scmp.eq.s32.totalorder %s15, 7
      %p96 = por %p94, %p95
      %p97 = scmp.ne.s32.totalorder %s89, %s92
      %p98 = scmp.eq.s32.totalorder %s15, 0
      %p99 = por %p97, %p98
      %p100 = scmp.ne.s32.totalorder %s89, %s92
      %p101 = scmp.eq.s32.totalorder %s20, 7
      %p102 = por %p100, %p101
      %p103 = scmp.ne.s32.totalorder %s92, %s93
      %p104 = scmp.eq.s32.totalorder %s20, 0
      %p105 = por %p103, %p104
      %p106 = scmp.ne.s32.totalorder %s92, %s93
      %p107 = scmp.eq.s32.totalorder %s21, 7
      %p108 = por %p106, %p107
      %p110 = scmp.ne.s32.totalorder %s93, %s109
      %p111 = scmp.eq.s32.totalorder %s21, 0
      %p112 = por %p110, %p111
      %s113 = ssub.s32 %s22, %s34
      %p114 = scmp.eq.s32.totalorder %s113, 0
      %s116 = sadd.s32 %s115, 1
      %s117 = scalar_select %p114, %s115, %s116
      %p120 = pneg %p114
      %p121 = scmp.eq.s32.totalorder %s15, 7
      %p122 = por %p120, %p121
      %p123 = scmp.ne.s32.totalorder %s115, %s118
      %p124 = scmp.eq.s32.totalorder %s15, 0
      %p125 = por %p123, %p124
      %p126 = scmp.ne.s32.totalorder %s115, %s118
      %p127 = scmp.eq.s32.totalorder %s20, 7
      %p128 = por %p126, %p127
      %p129 = scmp.ne.s32.totalorder %s118, %s119
      %p130 = scmp.eq.s32.totalorder %s20, 0
      %p131 = por %p129, %p130
      %p132 = scmp.ne.s32.totalorder %s118, %s119
      %p133 = scmp.eq.s32.totalorder %s21, 7
      %p134 = por %p132, %p133
      %p136 = scmp.ne.s32.totalorder %s119, %s135
      %p137 = scmp.eq.s32.totalorder %s21, 0
      %p138 = por %p136, %p137
      %s140 = sadd.s32 %s139, 1
      %p143 = scmp.eq.s32.totalorder %s15, 7
      %p144 = scmp.ne.s32.totalorder %s139, %s141
      %p145 = scmp.eq.s32.totalorder %s15, 0
      %p146 = por %p144, %p145
      %p147 = scmp.ne.s32.totalorder %s139, %s141
      %p148 = scmp.eq.s32.totalorder %s20, 7
      %p149 = por %p147, %p148
      %p150 = scmp.ne.s32.totalorder %s141, %s142
      %p151 = scmp.eq.s32.totalorder %s20, 0
      %p152 = por %p150, %p151
      %p153 = scmp.ne.s32.totalorder %s141, %s142
      %p154 = scmp.eq.s32.totalorder %s21, 7
      %p155 = por %p153, %p154
      %p157 = scmp.ne.s32.totalorder %s142, %s156
      %p158 = scmp.eq.s32.totalorder %s21, 0
      %p159 = por %p157, %p158
      %s161 = sadd.s32 %s160, 1
      %p164 = scmp.eq.s32.totalorder %s15, 7
      %p165 = scmp.ne.s32.totalorder %s160, %s162
      %p166 = scmp.eq.s32.totalorder %s15, 0
      %p167 = por %p165, %p166
      %p168 = scmp.ne.s32.totalorder %s160, %s162
      %p169 = scmp.eq.s32.totalorder %s20, 7
      %p170 = por %p168, %p169
      %p171 = scmp.ne.s32.totalorder %s162, %s163
      %p172 = scmp.eq.s32.totalorder %s20, 0
      %p173 = por %p171, %p172
      %p174 = scmp.ne.s32.totalorder %s162, %s163
      %p175 = scmp.eq.s32.totalorder %s21, 7
      %p176 = por %p174, %p175
      %p178 = scmp.ne.s32.totalorder %s163, %s177
      %p179 = scmp.eq.s32.totalorder %s21, 0
      %p180 = por %p178, %p179
      %s181 = ssub.s32 %s22, %s34
      %s182 = ssub.s32 %s23, %s30
      %s183 = sor.u32 %s181, %s182
      %p184 = scmp.eq.s32.totalorder %s183, 0
      %s186 = sadd.s32 %s185, 1
      %s187 = scalar_select %p184, %s185, %s186
      %p190 = pneg %p184
      %p191 = scmp.eq.s32.totalorder %s15, 7
      %p192 = por %p190, %p191
      %p193 = scmp.ne.s32.totalorder %s185, %s188
      %p194 = scmp.eq.s32.totalorder %s15, 0
      %p195 = por %p193, %p194
      %p196 = scmp.ne.s32.totalorder %s185, %s188
      %p197 = scmp.eq.s32.totalorder %s20, 7
      %p198 = por %p196, %p197
      %p199 = scmp.ne.s32.totalorder %s188, %s189
      %p200 = scmp.eq.s32.totalorder %s20, 0
      %p201 = por %p199, %p200
      %p202 = scmp.ne.s32.totalorder %s188, %s189
      %p203 = scmp.eq.s32.totalorder %s21, 7
      %p204 = por %p202, %p203
      %p206 = scmp.ne.s32.totalorder %s189, %s205
      %p207 = scmp.eq.s32.totalorder %s21, 0
      %p208 = por %p206, %p207
      %p209 = scmp.le.s32.totalorder 1, %s15
      %p210 = scmp.lt.s32.totalorder %s15, 9
      %p211 = pnand %p209, %p210
      %p212 = pneg %p211
      // Predicated region
      $region9: #{tpu_custom_call.1} parent=5 // pred_check
        _
      $region10: #{tpu_custom_call.1} parent=5 // pred_check_branch
        %214 = sbr.rel (%p211) target = $region12
      $region11: #{tpu_custom_call.1} parent=5 // pred_region
        %s215 = ssub.s32 %s15, 1
        // Predicated region
        $region13: #{tpu_custom_call.1} parent=11 // pred_check
          %p216 = pneg %p152
        $region14: #{tpu_custom_call.1} parent=11 // pred_check_branch
          %218 = sbr.rel (%p216) target = $region16
        $region15: #{tpu_custom_call.1} parent=11 // pred_region
          _
        $region16: #{tpu_custom_call.1} parent=11 // pred_fallthru
          _
        // Predicated region
        $region17: #{tpu_custom_call.1} parent=11 // pred_check
          %p219 = pneg %p173
        $region18: #{tpu_custom_call.1} parent=11 // pred_check_branch
          %221 = sbr.rel (%p219) target = $region20
        $region19: #{tpu_custom_call.1} parent=11 // pred_region
          _
        $region20: #{tpu_custom_call.1} parent=11 // pred_fallthru
          _
      $region12: #{tpu_custom_call.1} parent=5 // pred_fallthru
        _
      %p222 = scmp.lt.s32.totalorder %s15, 8
      // Predicated region
      $region21: #{tpu_custom_call.1} parent=5 // pred_check
        %p223 = pneg %p222
      $region22: #{tpu_custom_call.1} parent=5 // pred_check_branch
        %225 = sbr.rel (%p223) target = $region24
      $region23: #{tpu_custom_call.1} parent=5 // pred_region
        // Predicated region
        $region25: #{tpu_custom_call.1} parent=23 // pred_check
          %p226 = pneg %p47
        $region26: #{tpu_custom_call.1} parent=23 // pred_check_branch
          %228 = sbr.rel (%p226) target = $region28
        $region27: #{tpu_custom_call.1} parent=23 // pred_region
          %p229 = scmp.lt.s32.totalorder %s22, 1
          %s230 = scalar_select %p229, %s22, 1
          %s231 = smul.addr %s230, 2
          %s232 = smul.addr %s231, 4
          %s233 = scalar_lea.vmem %s0, %s232
        $region28: #{tpu_custom_call.1} parent=23 // pred_fallthru
          _
        // Predicated region
        $region29: #{tpu_custom_call.1} parent=23 // pred_check
          %p234 = pneg %p73
        $region30: #{tpu_custom_call.1} parent=23 // pred_check_branch
          %236 = sbr.rel (%p234) target = $region32
        $region31: #{tpu_custom_call.1} parent=23 // pred_region
          %p237 = scmp.lt.s32.totalorder %s22, 1
          %s238 = scalar_select %p237, %s22, 1
          %s239 = smul.addr %s238, 32
          %s240 = smul.addr %s239, 8
          %s241 = scalar_lea.vmem %s1, %s240
        $region32: #{tpu_custom_call.1} parent=23 // pred_fallthru
          _
        // Predicated region
        $region33: #{tpu_custom_call.1} parent=23 // pred_check
          %p242 = pneg %p99
        $region34: #{tpu_custom_call.1} parent=23 // pred_check_branch
          %244 = sbr.rel (%p242) target = $region36
        $region35: #{tpu_custom_call.1} parent=23 // pred_region
          %p245 = scmp.lt.s32.totalorder %s22, 1
          %s246 = scalar_select %p245, %s22, 1
          %s247 = smul.addr %s246, 2
          %s248 = scalar_lea.vmem %s2, %s247
        $region36: #{tpu_custom_call.1} parent=23 // pred_fallthru
          _
        // Predicated region
        $region37: #{tpu_custom_call.1} parent=23 // pred_check
          %p249 = pneg %p125
        $region38: #{tpu_custom_call.1} parent=23 // pred_check_branch
          %251 = sbr.rel (%p249) target = $region40
        $region39: #{tpu_custom_call.1} parent=23 // pred_region
          %p252 = scmp.lt.s32.totalorder %s22, 1
          %s253 = scalar_select %p252, %s22, 1
          %s254 = smul.addr %s253, 32
          %s255 = smul.addr %s254, 8
          %s256 = scalar_lea.vmem %s3, %s255
        $region40: #{tpu_custom_call.1} parent=23 // pred_fallthru
          _
      $region24: #{tpu_custom_call.1} parent=5 // pred_fallthru
        _
      %p257 = scmp.le.s32.totalorder 1, %s15
      %p258 = scmp.lt.s32.totalorder %s15, 9
      %p259 = pnand %p257, %p258
      %p260 = pneg %p259
      // Predicated region
      $region41: #{tpu_custom_call.1} parent=5 // pred_check
        _
      $region42: #{tpu_custom_call.1} parent=5 // pred_check_branch
        %262 = sbr.rel (%p259) target = $region44
      $region43: #{tpu_custom_call.1} parent=5 // pred_region
        %s263 = ssub.s32 %s15, 1
        %p264 = scmp.lt.s32.totalorder %s24, 1
        %s265 = scalar_select %p264, %s24, 1
        %s266 = smul.addr %s265, 2
        %s267 = smul.addr %s266, 4
        %s268 = scalar_lea.vmem %s0, %s267
        %p269 = pneg %p53
        %p270 = pneg %p50
        %p271 = scmp.lt.s32.totalorder %s24, 1
        %s272 = scalar_select %p271, %s24, 1
        %s273 = smul.addr %s272, 32
        %s274 = smul.addr %s273, 8
        %s275 = scalar_lea.vmem %s1, %s274
        %p276 = pneg %p79
        %p277 = pneg %p76
        %p278 = scmp.lt.s32.totalorder %s24, 1
        %s279 = scalar_select %p278, %s24, 1
        %s280 = smul.addr %s279, 2
        %s281 = scalar_lea.vmem %s2, %s280
        %p282 = pneg %p105
        %p283 = pneg %p102
        %p284 = scmp.lt.s32.totalorder %s24, 1
        %s285 = scalar_select %p284, %s24, 1
        %s286 = smul.addr %s285, 32
        %s287 = smul.addr %s286, 8
        %s288 = scalar_lea.vmem %s3, %s287
        %p289 = pneg %p131
        %p290 = pneg %p128
        %p291 = pneg %p152
        %p292 = pneg %p149
        %p293 = pneg %p173
        %p294 = pneg %p170
        %p295 = pneg %p201
        %p296 = pneg %p198
        %s297 = sand.u32 %s188, 1
        %s298 = scalar_lea.sflag [#allocation3], %s297
        %s299 = sand.u32 %s188, 1
        %s300 = scalar_lea.vmem [#allocation2], %s299
        %p301 = scmp.lt.s32.totalorder %s24, 1
        %s302 = scalar_select %p301, %s24, 1
        %s303 = smul.addr %s302, 2
        %s304 = smul.addr %s303, 4
        %s305 = scalar_lea.vmem %s0, %s304
        %p306 = scmp.lt.s32.totalorder %s24, 1
        %s307 = scalar_select %p306, %s24, 1
        %s308 = smul.addr %s307, 32
        %s309 = smul.addr %s308, 8
        %s310 = scalar_lea.vmem %s1, %s309
        %p311 = scmp.lt.s32.totalorder %s24, 1
        %s312 = scalar_select %p311, %s24, 1
        %s313 = smul.addr %s312, 2
        %s314 = scalar_lea.vmem %s2, %s313
        %p315 = scmp.lt.s32.totalorder %s24, 1
        %s316 = scalar_select %p315, %s24, 1
        %s317 = smul.addr %s316, 32
        %s318 = smul.addr %s317, 8
        %s319 = scalar_lea.vmem %s3, %s318
        %s320 = scvt.s32.f32 %s25
        %v321 = vld [vmem:[%s305] sm:$0xff]
        %v322 = vld [vmem:[%s314] sm:$0x3]
        %v323 = vlaneseq
        %v324 = vshrl.u32 %v323, 7
        %v326 = vcombine.high %v321, %v321
        %vm328 = vcmask 1043456
        %v329 = vsel %vm328, %v321, -inf
        %v330 = vrot.slane %v329, 4
        %v331 = vmax.f32 %v329, %v330
        %v332 = vrot.slane %v331, 2
        %v333 = vmax.f32 %v331, %v332
        %v334 = vrot.slane %v333, 1
        %v335 = vmax.f32 %v333, %v334
        %v336 = vsel %vm328, %v326, -inf
        %v337 = vrot.slane %v336, 4
        %v338 = vmax.f32 %v336, %v337
        %v339 = vrot.slane %v338, 2
        %v340 = vmax.f32 %v338, %v339
        %v341 = vrot.slane %v340, 1
        %v342 = vmax.f32 %v340, %v341
        %v345 = vcombine.low %v335, %v342
        %v347 = vsub.f32 %v321, %v345
        %v348 = vmul.f32 %v347, 1.442695
        %v349 = vpow.pop %v348
        %v351 = vcombine.high %v349, %v349
        %v353 = vsel %vm328, %v349, 0.0
        %v354 = vrot.slane %v353, 4
        %v355 = vadd.f32 %v353, %v354
        %v356 = vrot.slane %v355, 2
        %v357 = vadd.f32 %v355, %v356
        %v358 = vrot.slane %v357, 1
        %v359 = vadd.f32 %v357, %v358
        %v360 = vsel %vm328, %v351, 0.0
        %v361 = vrot.slane %v360, 4
        %v362 = vadd.f32 %v360, %v361
        %v363 = vrot.slane %v362, 2
        %v364 = vadd.f32 %v362, %v363
        %v365 = vrot.slane %v364, 1
        %v366 = vadd.f32 %v364, %v365
        %v367 = vstv %s25
        %vm368 = vcmp.eq.s32.totalorder %v324, %v367
        %v369 = vsel %vm368, %v349, 0.0
        %v370 = vsel %vm368, %v351, 0.0
        %v371 = vsel %vm328, %v369, 0.0
        %v372 = vrot.slane %v371, 4
        %v373 = vadd.f32 %v371, %v372
        %v374 = vrot.slane %v373, 2
        %v375 = vadd.f32 %v373, %v374
        %v376 = vrot.slane %v375, 1
        %v377 = vadd.f32 %v375, %v376
        %v378 = vsel %vm328, %v370, 0.0
        %v379 = vrot.slane %v378, 4
        %v380 = vadd.f32 %v378, %v379
        %v381 = vrot.slane %v380, 2
        %v382 = vadd.f32 %v380, %v381
        %v383 = vrot.slane %v382, 1
        %v384 = vadd.f32 %v382, %v383
        %v385 = vrcp.pop %v359
        %v386 = vmul.f32 %v377, %v385
        %v387 = vrcp.pop %v366
        %v388 = vmul.f32 %v384, %v387
        %v389 = vmul.f32 %v359, 0.5
        %v390 = vmul.f32 %v366, 0.5
        %vm391 = vcmp.gt.f32.partialorder %v377, %v389
        %vm392 = vcmp.gt.f32.partialorder %v384, %v390
        %v393 = vsel %vm391, 1, 0
        %v394 = vsel %vm392, 1, 0
        %v395 = vcvt.s32.f32 %v393
        %v396 = vcvt.s32.f32 %v394
        %v397 = vstv %s320
        %vm398 = vcmp.eq.f32.partialorder %v322, %v397
        %v399 = vsel %vm398, 1, 0
        %v400 = vcvt.s32.f32 %v399
        %v402 = vlaneseq
        %v403 = vshrl.u32 %v402, 7
        %v404 = vsub.s32 0, %v403
        %v405 = vrot.slane %v400, %v404
        %v406 = vlaneseq
        %v407 = vshrl.u32 %v406, 7
        %v408 = vsub.s32 1, %v407
        %v409 = vrot.slane %v400, %v408
        %v412 = vsub.f32 %v386, %v405
        %v413 = vsub.f32 %v388, %v409
        %v414 = vmul.f32 %v412, %v412
        %v415 = vmul.f32 %v413, %v413
        %v416 = vmax.f32 %v395, %v396
        %417 = vmax.xlane.f32.xlu0 %v416
        %v418 = vpop.xlane.xlu0 %417
        %s419 = vtos %v418
        %vm420 = vcmask 1040384
        %v421 = vsel %vm420, %v405, -inf
        %v422 = vsel %vm420, %v409, -inf
        %v423 = vmax.f32 %v421, %v422
        %424 = vmax.xlane.f32.xlu0 %v423
        %v425 = vpop.xlane.xlu0 %424
        %v426 = vrot.slane %v425, 4
        %v427 = vmax.f32 %v425, %v426
        %v428 = vrot.slane %v427, 2
        %v429 = vmax.f32 %v427, %v428
        %v430 = vrot.slane %v429, 1
        %v431 = vmax.f32 %v429, %v430
        %s432 = vtos %v431
        %v433 = vld [vmem:[%s4] ss:$2 sm:$0x3]
        %s434 = scalar_lea.vmem %s4, 1
        %v435 = vld [vmem:[%s434] ss:$2 sm:$0x3]
        %v436 = vlaneseq
        %v437 = vand.u32 %v436, 127
        %v438 = vld [vmem:[%s310] sm:$0xff]
        %v439 = vld [vmem:[%s310 + $0x8] sm:$0xff]
        %v440 = vld [vmem:[%s310 + $0x10] sm:$0xff]
        %v441 = vld [vmem:[%s310 + $0x18] sm:$0xff]
        %v442 = vld [vmem:[%s310 + $0x20] sm:$0xff]
        %v443 = vld [vmem:[%s310 + $0x28] sm:$0xff]
        %v444 = vld [vmem:[%s310 + $0x30] sm:$0xff]
        %v445 = vld [vmem:[%s310 + $0x38] sm:$0xff]
        %v446 = vld [vmem:[%s319] sm:$0xff]
        %v447 = vld [vmem:[%s319 + $0x8] sm:$0xff]
        %v448 = vld [vmem:[%s319 + $0x10] sm:$0xff]
        %v449 = vld [vmem:[%s319 + $0x18] sm:$0xff]
        %v450 = vld [vmem:[%s319 + $0x20] sm:$0xff]
        %v451 = vld [vmem:[%s319 + $0x28] sm:$0xff]
        %v452 = vld [vmem:[%s319 + $0x30] sm:$0xff]
        %v453 = vld [vmem:[%s319 + $0x38] sm:$0xff]
        %v454 = vld [vmem:[%s5] sm:$0xff]
        %v455 = vld [vmem:[%s5 + $0x8] sm:$0xff]
        %v456 = vld [vmem:[%s5 + $0x10] sm:$0xff]
        %v457 = vld [vmem:[%s5 + $0x18] sm:$0xff]
        %v458 = vld [vmem:[%s5 + $0x20] sm:$0xff]
        %v459 = vld [vmem:[%s5 + $0x28] sm:$0xff]
        %v460 = vld [vmem:[%s5 + $0x30] sm:$0xff]
        %v461 = vld [vmem:[%s5 + $0x38] sm:$0xff]
        %vm462 = vcmask 31744
        %v463 = vsel %vm462, %v438, -inf
        %464 = vmax.xlane.f32.xlu0 %v463
        %v465 = vpop.xlane.xlu0 %464
        %v466 = vsel %vm462, %v439, -inf
        %467 = vmax.xlane.f32.xlu0 %v466
        %v468 = vpop.xlane.xlu0 %467
        %v469 = vsel %vm462, %v440, -inf
        %470 = vmax.xlane.f32.xlu0 %v469
        %v471 = vpop.xlane.xlu0 %470
        %v472 = vsel %vm462, %v441, -inf
        %473 = vmax.xlane.f32.xlu0 %v472
        %v474 = vpop.xlane.xlu0 %473
        %v475 = vsel %vm462, %v442, -inf
        %476 = vmax.xlane.f32.xlu0 %v475
        %v477 = vpop.xlane.xlu0 %476
        %v478 = vsel %vm462, %v443, -inf
        %479 = vmax.xlane.f32.xlu0 %v478
        %v480 = vpop.xlane.xlu0 %479
        %v481 = vsel %vm462, %v444, -inf
        %482 = vmax.xlane.f32.xlu0 %v481
        %v483 = vpop.xlane.xlu0 %482
        %v484 = vsel %vm462, %v445, -inf
        %485 = vmax.xlane.f32.xlu0 %v484
        %v486 = vpop.xlane.xlu0 %485
        %v487 = vsub.f32 %v438, %v465
        %v488 = vsub.f32 %v439, %v468
        %v489 = vsub.f32 %v440, %v471
        %v490 = vsub.f32 %v441, %v474
        %v491 = vsub.f32 %v442, %v477
        %v492 = vsub.f32 %v443, %v480
        %v493 = vsub.f32 %v444, %v483
        %v494 = vsub.f32 %v445, %v486
        %v495 = vmul.f32 %v487, 1.442695
        %v496 = vpow.pop %v495
        %v497 = vmul.f32 %v488, 1.442695
        %v498 = vpow.pop %v497
        %v499 = vmul.f32 %v489, 1.442695
        %v500 = vpow.pop %v499
        %v501 = vmul.f32 %v490, 1.442695
        %v502 = vpow.pop %v501
        %v503 = vmul.f32 %v491, 1.442695
        %v504 = vpow.pop %v503
        %v505 = vmul.f32 %v492, 1.442695
        %v506 = vpow.pop %v505
        %v507 = vmul.f32 %v493, 1.442695
        %v508 = vpow.pop %v507
        %v509 = vmul.f32 %v494, 1.442695
        %v510 = vpow.pop %v509
        %v511 = vsel %vm462, %v496, 0.0
        %512 = vadd.xlane.f32.xlu0 %v511
        %v513 = vpop.xlane.xlu0 %512
        %v514 = vsel %vm462, %v498, 0.0
        %515 = vadd.xlane.f32.xlu0 %v514
        %v516 = vpop.xlane.xlu0 %515
        %v517 = vsel %vm462, %v500, 0.0
        %518 = vadd.xlane.f32.xlu0 %v517
        %v519 = vpop.xlane.xlu0 %518
        %v520 = vsel %vm462, %v502, 0.0
        %521 = vadd.xlane.f32.xlu0 %v520
        %v522 = vpop.xlane.xlu0 %521
        %v523 = vsel %vm462, %v504, 0.0
        %524 = vadd.xlane.f32.xlu0 %v523
        %v525 = vpop.xlane.xlu0 %524
        %v526 = vsel %vm462, %v506, 0.0
        %527 = vadd.xlane.f32.xlu0 %v526
        %v528 = vpop.xlane.xlu0 %527
        %v529 = vsel %vm462, %v508, 0.0
        %530 = vadd.xlane.f32.xlu0 %v529
        %v531 = vpop.xlane.xlu0 %530
        %v532 = vsel %vm462, %v510, 0.0
        %533 = vadd.xlane.f32.xlu0 %v532
        %v534 = vpop.xlane.xlu0 %533
        %vm535 = vcmp.eq.s32.totalorder %v437, %v367
        %v536 = vsel %vm535, %v496, 0.0
        %v537 = vsel %vm535, %v498, 0.0
        %v538 = vsel %vm535, %v500, 0.0
        %v539 = vsel %vm535, %v502, 0.0
        %v540 = vsel %vm535, %v504, 0.0
        %v541 = vsel %vm535, %v506, 0.0
        %v542 = vsel %vm535, %v508, 0.0
        %v543 = vsel %vm535, %v510, 0.0
        %v544 = vsel %vm462, %v536, 0.0
        %545 = vadd.xlane.f32.xlu0 %v544
        %v546 = vpop.xlane.xlu0 %545
        %v547 = vsel %vm462, %v537, 0.0
        %548 = vadd.xlane.f32.xlu0 %v547
        %v549 = vpop.xlane.xlu0 %548
        %v550 = vsel %vm462, %v538, 0.0
        %551 = vadd.xlane.f32.xlu0 %v550
        %v552 = vpop.xlane.xlu0 %551
        %v553 = vsel %vm462, %v539, 0.0
        %554 = vadd.xlane.f32.xlu0 %v553
        %v555 = vpop.xlane.xlu0 %554
        %v556 = vsel %vm462, %v540, 0.0
        %557 = vadd.xlane.f32.xlu0 %v556
        %v558 = vpop.xlane.xlu0 %557
        %v559 = vsel %vm462, %v541, 0.0
        %560 = vadd.xlane.f32.xlu0 %v559
        %v561 = vpop.xlane.xlu0 %560
        %v562 = vsel %vm462, %v542, 0.0
        %563 = vadd.xlane.f32.xlu0 %v562
        %v564 = vpop.xlane.xlu0 %563
        %v565 = vsel %vm462, %v543, 0.0
        %566 = vadd.xlane.f32.xlu0 %v565
        %v567 = vpop.xlane.xlu0 %566
        %v568 = vmul.f32 %v513, 0.5
        %v569 = vmul.f32 %v516, 0.5
        %v570 = vmul.f32 %v519, 0.5
        %v571 = vmul.f32 %v522, 0.5
        %v572 = vmul.f32 %v525, 0.5
        %v573 = vmul.f32 %v528, 0.5
        %v574 = vmul.f32 %v531, 0.5
        %v575 = vmul.f32 %v534, 0.5
        %vm576 = vcmp.gt.f32.partialorder %v546, %v568
        %vm577 = vcmp.gt.f32.partialorder %v549, %v569
        %vm578 = vcmp.gt.f32.partialorder %v552, %v570
        %vm579 = vcmp.gt.f32.partialorder %v555, %v571
        %vm580 = vcmp.gt.f32.partialorder %v558, %v572
        %vm581 = vcmp.gt.f32.partialorder %v561, %v573
        %vm582 = vcmp.gt.f32.partialorder %v564, %v574
        %vm583 = vcmp.gt.f32.partialorder %v567, %v575
        %v584 = vsel %vm576, 1, 0
        %v585 = vsel %vm577, 1, 0
        %v586 = vsel %vm578, 1, 0
        %v587 = vsel %vm579, 1, 0
        %v588 = vsel %vm580, 1, 0
        %v589 = vsel %vm581, 1, 0
        %v590 = vsel %vm582, 1, 0
        %v591 = vsel %vm583, 1, 0
        %v592 = vcvt.s32.f32 %v584
        %v593 = vcvt.s32.f32 %v585
        %v594 = vcvt.s32.f32 %v586
        %v595 = vcvt.s32.f32 %v587
        %v596 = vcvt.s32.f32 %v588
        %v597 = vcvt.s32.f32 %v589
        %v598 = vcvt.s32.f32 %v590
        %v599 = vcvt.s32.f32 %v591
        %vm600 = vcmp.eq.f32.partialorder %v446, %v397
        %vm601 = vcmp.eq.f32.partialorder %v447, %v397
        %vm602 = vcmp.eq.f32.partialorder %v448, %v397
        %vm603 = vcmp.eq.f32.partialorder %v449, %v397
        %vm604 = vcmp.eq.f32.partialorder %v450, %v397
        %vm605 = vcmp.eq.f32.partialorder %v451, %v397
        %vm606 = vcmp.eq.f32.partialorder %v452, %v397
        %vm607 = vcmp.eq.f32.partialorder %v453, %v397
        %v608 = vsel %vm600, 1, 0
        %v609 = vsel %vm601, 1, 0
        %v610 = vsel %vm602, 1, 0
        %v611 = vsel %vm603, 1, 0
        %v612 = vsel %vm604, 1, 0
        %v613 = vsel %vm605, 1, 0
        %v614 = vsel %vm606, 1, 0
        %v615 = vsel %vm607, 1, 0
        %v616 = vcvt.s32.f32 %v608
        %v617 = vcvt.s32.f32 %v609
        %v618 = vcvt.s32.f32 %v610
        %v619 = vcvt.s32.f32 %v611
        %v620 = vcvt.s32.f32 %v612
        %v621 = vcvt.s32.f32 %v613
        %v622 = vcvt.s32.f32 %v614
        %v623 = vcvt.s32.f32 %v615
        %625 = vset.pattern.permute.xlu0 0
        %626 = vperm.xlu0 %625, %v454
        %v627 = vpop.permute.xlu0 %626
        %v630 = vlaneseq
        %v631 = vshrl.u32 %v630, 7
        %v632 = vsub.s32 0, %v631
        %v633 = vrot.slane %v433, %v632
        %v634 = vlaneseq
        %v635 = vshrl.u32 %v634, 7
        %v636 = vsub.s32 1, %v635
        %v637 = vrot.slane %v433, %v636
        %v640 = vsub.f32 %v627, %v633
        %v641 = vsub.f32 %v627, %v637
        %v642 = vmul.f32 %v640, %v640
        %v643 = vmul.f32 %v641, %v641
        %644 = vset.pattern.permute.xlu0 1
        %645 = vperm.xlu0 %644, %v454
        %v646 = vpop.permute.xlu0 %645
        %v649 = vlaneseq
        %v650 = vshrl.u32 %v649, 7
        %v651 = vsub.s32 0, %v650
        %v652 = vrot.slane %v435, %v651
        %v653 = vlaneseq
        %v654 = vshrl.u32 %v653, 7
        %v655 = vsub.s32 1, %v654
        %v656 = vrot.slane %v435, %v655
        %v659 = vsub.f32 %v646, %v652
        %v660 = vsub.f32 %v646, %v656
        %v661 = vmul.f32 %v659, %v659
        %v662 = vmul.f32 %v660, %v660
        %v663 = vadd.f32 %v642, %v661
        %v664 = vadd.f32 %v643, %v662
        %vm665 = vcmp.ne.f32.partialorder %v592, %v395
        %vm666 = vcmp.ne.f32.partialorder %v592, %v396
        %v667 = vsel %vm665, %v663, 1e+09
        %v668 = vsel %vm666, %v664, 1e+09
        %670 = vset.pattern.permute.xlu0 0
        %671 = vperm.xlu0 %670, %v616
        %v672 = vpop.permute.xlu0 %671
        %vm674 = vcmp.ne.f32.partialorder %v672, %v405
        %vm675 = vcmp.ne.f32.partialorder %v672, %v409
        %v676 = vsel %vm674, %v663, 1e+09
        %v677 = vsel %vm675, %v664, 1e+09
        %679 = vset.pattern.permute.xlu0 0
        %680 = vperm.xlu0 %679, %v455
        %v681 = vpop.permute.xlu0 %680
        %v683 = vsub.f32 %v681, %v633
        %v684 = vsub.f32 %v681, %v637
        %v685 = vmul.f32 %v683, %v683
        %v686 = vmul.f32 %v684, %v684
        %687 = vset.pattern.permute.xlu0 1
        %688 = vperm.xlu0 %687, %v455
        %v689 = vpop.permute.xlu0 %688
        %v691 = vsub.f32 %v689, %v652
        %v692 = vsub.f32 %v689, %v656
        %v693 = vmul.f32 %v691, %v691
        %v694 = vmul.f32 %v692, %v692
        %v695 = vadd.f32 %v685, %v693
        %v696 = vadd.f32 %v686, %v694
        %vm697 = vcmp.ne.f32.partialorder %v593, %v395
        %vm698 = vcmp.ne.f32.partialorder %v593, %v396
        %v699 = vsel %vm697, %v695, 1e+09
        %v700 = vsel %vm698, %v696, 1e+09
        %702 = vset.pattern.permute.xlu0 0
        %703 = vperm.xlu0 %702, %v617
        %v704 = vpop.permute.xlu0 %703
        %vm706 = vcmp.ne.f32.partialorder %v704, %v405
        %vm707 = vcmp.ne.f32.partialorder %v704, %v409
        %v708 = vsel %vm706, %v695, 1e+09
        %v709 = vsel %vm707, %v696, 1e+09
        %v710 = vmin.f32 %v667, %v699
        %v711 = vmin.f32 %v668, %v700
        %v712 = vmin.f32 %v676, %v708
        %v713 = vmin.f32 %v677, %v709
        %715 = vset.pattern.permute.xlu0 0
        %716 = vperm.xlu0 %715, %v456
        %v717 = vpop.permute.xlu0 %716
        %v719 = vsub.f32 %v717, %v633
        %v720 = vsub.f32 %v717, %v637
        %v721 = vmul.f32 %v719, %v719
        %v722 = vmul.f32 %v720, %v720
        %723 = vset.pattern.permute.xlu0 1
        %724 = vperm.xlu0 %723, %v456
        %v725 = vpop.permute.xlu0 %724
        %v727 = vsub.f32 %v725, %v652
        %v728 = vsub.f32 %v725, %v656
        %v729 = vmul.f32 %v727, %v727
        %v730 = vmul.f32 %v728, %v728
        %v731 = vadd.f32 %v721, %v729
        %v732 = vadd.f32 %v722, %v730
        %vm733 = vcmp.ne.f32.partialorder %v594, %v395
        %vm734 = vcmp.ne.f32.partialorder %v594, %v396
        %v735 = vsel %vm733, %v731, 1e+09
        %v736 = vsel %vm734, %v732, 1e+09
        %738 = vset.pattern.permute.xlu0 0
        %739 = vperm.xlu0 %738, %v618
        %v740 = vpop.permute.xlu0 %739
        %vm742 = vcmp.ne.f32.partialorder %v740, %v405
        %vm743 = vcmp.ne.f32.partialorder %v740, %v409
        %v744 = vsel %vm742, %v731, 1e+09
        %v745 = vsel %vm743, %v732, 1e+09
        %v746 = vmin.f32 %v710, %v735
        %v747 = vmin.f32 %v711, %v736
        %v748 = vmin.f32 %v712, %v744
        %v749 = vmin.f32 %v713, %v745
        %751 = vset.pattern.permute.xlu0 0
        %752 = vperm.xlu0 %751, %v457
        %v753 = vpop.permute.xlu0 %752
        %v755 = vsub.f32 %v753, %v633
        %v756 = vsub.f32 %v753, %v637
        %v757 = vmul.f32 %v755, %v755
        %v758 = vmul.f32 %v756, %v756
        %759 = vset.pattern.permute.xlu0 1
        %760 = vperm.xlu0 %759, %v457
        %v761 = vpop.permute.xlu0 %760
        %v763 = vsub.f32 %v761, %v652
        %v764 = vsub.f32 %v761, %v656
        %v765 = vmul.f32 %v763, %v763
        %v766 = vmul.f32 %v764, %v764
        %v767 = vadd.f32 %v757, %v765
        %v768 = vadd.f32 %v758, %v766
        %vm769 = vcmp.ne.f32.partialorder %v595, %v395
        %vm770 = vcmp.ne.f32.partialorder %v595, %v396
        %v771 = vsel %vm769, %v767, 1e+09
        %v772 = vsel %vm770, %v768, 1e+09
        %774 = vset.pattern.permute.xlu0 0
        %775 = vperm.xlu0 %774, %v619
        %v776 = vpop.permute.xlu0 %775
        %vm778 = vcmp.ne.f32.partialorder %v776, %v405
        %vm779 = vcmp.ne.f32.partialorder %v776, %v409
        %v780 = vsel %vm778, %v767, 1e+09
        %v781 = vsel %vm779, %v768, 1e+09
        %v782 = vmin.f32 %v746, %v771
        %v783 = vmin.f32 %v747, %v772
        %v784 = vmin.f32 %v748, %v780
        %v785 = vmin.f32 %v749, %v781
        %787 = vset.pattern.permute.xlu0 0
        %788 = vperm.xlu0 %787, %v458
        %v789 = vpop.permute.xlu0 %788
        %v791 = vsub.f32 %v789, %v633
        %v792 = vsub.f32 %v789, %v637
        %v793 = vmul.f32 %v791, %v791
        %v794 = vmul.f32 %v792, %v792
        %795 = vset.pattern.permute.xlu0 1
        %796 = vperm.xlu0 %795, %v458
        %v797 = vpop.permute.xlu0 %796
        %v799 = vsub.f32 %v797, %v652
        %v800 = vsub.f32 %v797, %v656
        %v801 = vmul.f32 %v799, %v799
        %v802 = vmul.f32 %v800, %v800
        %v803 = vadd.f32 %v793, %v801
        %v804 = vadd.f32 %v794, %v802
        %vm805 = vcmp.ne.f32.partialorder %v596, %v395
        %vm806 = vcmp.ne.f32.partialorder %v596, %v396
        %v807 = vsel %vm805, %v803, 1e+09
        %v808 = vsel %vm806, %v804, 1e+09
        %810 = vset.pattern.permute.xlu0 0
        %811 = vperm.xlu0 %810, %v620
        %v812 = vpop.permute.xlu0 %811
        %vm814 = vcmp.ne.f32.partialorder %v812, %v405
        %vm815 = vcmp.ne.f32.partialorder %v812, %v409
        %v816 = vsel %vm814, %v803, 1e+09
        %v817 = vsel %vm815, %v804, 1e+09
        %v818 = vmin.f32 %v782, %v807
        %v819 = vmin.f32 %v783, %v808
        %v820 = vmin.f32 %v784, %v816
        %v821 = vmin.f32 %v785, %v817
        %823 = vset.pattern.permute.xlu0 0
        %824 = vperm.xlu0 %823, %v459
        %v825 = vpop.permute.xlu0 %824
        %v827 = vsub.f32 %v825, %v633
        %v828 = vsub.f32 %v825, %v637
        %v829 = vmul.f32 %v827, %v827
        %v830 = vmul.f32 %v828, %v828
        %831 = vset.pattern.permute.xlu0 1
        %832 = vperm.xlu0 %831, %v459
        %v833 = vpop.permute.xlu0 %832
        %v835 = vsub.f32 %v833, %v652
        %v836 = vsub.f32 %v833, %v656
        %v837 = vmul.f32 %v835, %v835
        %v838 = vmul.f32 %v836, %v836
        %v839 = vadd.f32 %v829, %v837
        %v840 = vadd.f32 %v830, %v838
        %vm841 = vcmp.ne.f32.partialorder %v597, %v395
        %vm842 = vcmp.ne.f32.partialorder %v597, %v396
        %v843 = vsel %vm841, %v839, 1e+09
        %v844 = vsel %vm842, %v840, 1e+09
        %846 = vset.pattern.permute.xlu0 0
        %847 = vperm.xlu0 %846, %v621
        %v848 = vpop.permute.xlu0 %847
        %vm850 = vcmp.ne.f32.partialorder %v848, %v405
        %vm851 = vcmp.ne.f32.partialorder %v848, %v409
        %v852 = vsel %vm850, %v839, 1e+09
        %v853 = vsel %vm851, %v840, 1e+09
        %v854 = vmin.f32 %v818, %v843
        %v855 = vmin.f32 %v819, %v844
        %v856 = vmin.f32 %v820, %v852
        %v857 = vmin.f32 %v821, %v853
        %859 = vset.pattern.permute.xlu0 0
        %860 = vperm.xlu0 %859, %v460
        %v861 = vpop.permute.xlu0 %860
        %v863 = vsub.f32 %v861, %v633
        %v864 = vsub.f32 %v861, %v637
        %v865 = vmul.f32 %v863, %v863
        %v866 = vmul.f32 %v864, %v864
        %867 = vset.pattern.permute.xlu0 1
        %868 = vperm.xlu0 %867, %v460
        %v869 = vpop.permute.xlu0 %868
        %v871 = vsub.f32 %v869, %v652
        %v872 = vsub.f32 %v869, %v656
        %v873 = vmul.f32 %v871, %v871
        %v874 = vmul.f32 %v872, %v872
        %v875 = vadd.f32 %v865, %v873
        %v876 = vadd.f32 %v866, %v874
        %vm877 = vcmp.ne.f32.partialorder %v598, %v395
        %vm878 = vcmp.ne.f32.partialorder %v598, %v396
        %v879 = vsel %vm877, %v875, 1e+09
        %v880 = vsel %vm878, %v876, 1e+09
        %882 = vset.pattern.permute.xlu0 0
        %883 = vperm.xlu0 %882, %v622
        %v884 = vpop.permute.xlu0 %883
        %vm886 = vcmp.ne.f32.partialorder %v884, %v405
        %vm887 = vcmp.ne.f32.partialorder %v884, %v409
        %v888 = vsel %vm886, %v875, 1e+09
        %v889 = vsel %vm887, %v876, 1e+09
        %v890 = vmin.f32 %v854, %v879
        %v891 = vmin.f32 %v855, %v880
        %v892 = vmin.f32 %v856, %v888
        %v893 = vmin.f32 %v857, %v889
        %895 = vset.pattern.permute.xlu0 0
        %896 = vperm.xlu0 %895, %v461
        %v897 = vpop.permute.xlu0 %896
        %v899 = vsub.f32 %v897, %v633
        %v900 = vsub.f32 %v897, %v637
        %v901 = vmul.f32 %v899, %v899
        %v902 = vmul.f32 %v900, %v900
        %903 = vset.pattern.permute.xlu0 1
        %904 = vperm.xlu0 %903, %v461
        %v905 = vpop.permute.xlu0 %904
        %v907 = vsub.f32 %v905, %v652
        %v908 = vsub.f32 %v905, %v656
        %v909 = vmul.f32 %v907, %v907
        %v910 = vmul.f32 %v908, %v908
        %v911 = vadd.f32 %v901, %v909
        %v912 = vadd.f32 %v902, %v910
        %vm913 = vcmp.ne.f32.partialorder %v599, %v395
        %vm914 = vcmp.ne.f32.partialorder %v599, %v396
        %v915 = vsel %vm913, %v911, 1e+09
        %v916 = vsel %vm914, %v912, 1e+09
        %918 = vset.pattern.permute.xlu0 0
        %919 = vperm.xlu0 %918, %v623
        %v920 = vpop.permute.xlu0 %919
        %vm922 = vcmp.ne.f32.partialorder %v920, %v405
        %vm923 = vcmp.ne.f32.partialorder %v920, %v409
        %v924 = vsel %vm922, %v911, 1e+09
        %v925 = vsel %vm923, %v912, 1e+09
        %v926 = vmin.f32 %v890, %v915
        %v927 = vmin.f32 %v891, %v916
        %v928 = vmin.f32 %v892, %v924
        %v929 = vmin.f32 %v893, %v925
        %s930 = scalar_lea.vmem %s310, 64
        %v931 = vld [vmem:[%s930] sm:$0xff]
        %v932 = vld [vmem:[%s930 + $0x8] sm:$0xff]
        %v933 = vld [vmem:[%s930 + $0x10] sm:$0xff]
        %v934 = vld [vmem:[%s930 + $0x18] sm:$0xff]
        %v935 = vld [vmem:[%s930 + $0x20] sm:$0xff]
        %v936 = vld [vmem:[%s930 + $0x28] sm:$0xff]
        %v937 = vld [vmem:[%s930 + $0x30] sm:$0xff]
        %v938 = vld [vmem:[%s930 + $0x38] sm:$0xff]
        %s939 = scalar_lea.vmem %s319, 64
        %v940 = vld [vmem:[%s939] sm:$0xff]
        %v941 = vld [vmem:[%s939 + $0x8] sm:$0xff]
        %v942 = vld [vmem:[%s939 + $0x10] sm:$0xff]
        %v943 = vld [vmem:[%s939 + $0x18] sm:$0xff]
        %v944 = vld [vmem:[%s939 + $0x20] sm:$0xff]
        %v945 = vld [vmem:[%s939 + $0x28] sm:$0xff]
        %v946 = vld [vmem:[%s939 + $0x30] sm:$0xff]
        %v947 = vld [vmem:[%s939 + $0x38] sm:$0xff]
        %s948 = scalar_lea.vmem %s5, 64
        %v949 = vld [vmem:[%s948] sm:$0xff]
        %v950 = vld [vmem:[%s948 + $0x8] sm:$0xff]
        %v951 = vld [vmem:[%s948 + $0x10] sm:$0xff]
        %v952 = vld [vmem:[%s948 + $0x18] sm:$0xff]
        %v953 = vld [vmem:[%s948 + $0x20] sm:$0xff]
        %v954 = vld [vmem:[%s948 + $0x28] sm:$0xff]
        %v955 = vld [vmem:[%s948 + $0x30] sm:$0xff]
        %v956 = vld [vmem:[%s948 + $0x38] sm:$0xff]
        %v957 = vsel %vm462, %v931, -inf
        %958 = vmax.xlane.f32.xlu0 %v957
        %v959 = vpop.xlane.xlu0 %958
        %v960 = vsel %vm462, %v932, -inf
        %961 = vmax.xlane.f32.xlu0 %v960
        %v962 = vpop.xlane.xlu0 %961
        %v963 = vsel %vm462, %v933, -inf
        %964 = vmax.xlane.f32.xlu0 %v963
        %v965 = vpop.xlane.xlu0 %964
        %v966 = vsel %vm462, %v934, -inf
        %967 = vmax.xlane.f32.xlu0 %v966
        %v968 = vpop.xlane.xlu0 %967
        %v969 = vsel %vm462, %v935, -inf
        %970 = vmax.xlane.f32.xlu0 %v969
        %v971 = vpop.xlane.xlu0 %970
        %v972 = vsel %vm462, %v936, -inf
        %973 = vmax.xlane.f32.xlu0 %v972
        %v974 = vpop.xlane.xlu0 %973
        %v975 = vsel %vm462, %v937, -inf
        %976 = vmax.xlane.f32.xlu0 %v975
        %v977 = vpop.xlane.xlu0 %976
        %v978 = vsel %vm462, %v938, -inf
        %979 = vmax.xlane.f32.xlu0 %v978
        %v980 = vpop.xlane.xlu0 %979
        %v981 = vsub.f32 %v931, %v959
        %v982 = vsub.f32 %v932, %v962
        %v983 = vsub.f32 %v933, %v965
        %v984 = vsub.f32 %v934, %v968
        %v985 = vsub.f32 %v935, %v971
        %v986 = vsub.f32 %v936, %v974
        %v987 = vsub.f32 %v937, %v977
        %v988 = vsub.f32 %v938, %v980
        %v989 = vmul.f32 %v981, 1.442695
        %v990 = vpow.pop %v989
        %v991 = vmul.f32 %v982, 1.442695
        %v992 = vpow.pop %v991
        %v993 = vmul.f32 %v983, 1.442695
        %v994 = vpow.pop %v993
        %v995 = vmul.f32 %v984, 1.442695
        %v996 = vpow.pop %v995
        %v997 = vmul.f32 %v985, 1.442695
        %v998 = vpow.pop %v997
        %v999 = vmul.f32 %v986, 1.442695
        %v1000 = vpow.pop %v999
        %v1001 = vmul.f32 %v987, 1.442695
        %v1002 = vpow.pop %v1001
        %v1003 = vmul.f32 %v988, 1.442695
        %v1004 = vpow.pop %v1003
        %v1005 = vsel %vm462, %v990, 0.0
        %1006 = vadd.xlane.f32.xlu0 %v1005
        %v1007 = vpop.xlane.xlu0 %1006
        %v1008 = vsel %vm462, %v992, 0.0
        %1009 = vadd.xlane.f32.xlu0 %v1008
        %v1010 = vpop.xlane.xlu0 %1009
        %v1011 = vsel %vm462, %v994, 0.0
        %1012 = vadd.xlane.f32.xlu0 %v1011
        %v1013 = vpop.xlane.xlu0 %1012
        %v1014 = vsel %vm462, %v996, 0.0
        %1015 = vadd.xlane.f32.xlu0 %v1014
        %v1016 = vpop.xlane.xlu0 %1015
        %v1017 = vsel %vm462, %v998, 0.0
        %1018 = vadd.xlane.f32.xlu0 %v1017
        %v1019 = vpop.xlane.xlu0 %1018
        %v1020 = vsel %vm462, %v1000, 0.0
        %1021 = vadd.xlane.f32.xlu0 %v1020
        %v1022 = vpop.xlane.xlu0 %1021
        %v1023 = vsel %vm462, %v1002, 0.0
        %1024 = vadd.xlane.f32.xlu0 %v1023
        %v1025 = vpop.xlane.xlu0 %1024
        %v1026 = vsel %vm462, %v1004, 0.0
        %1027 = vadd.xlane.f32.xlu0 %v1026
        %v1028 = vpop.xlane.xlu0 %1027
        %v1029 = vsel %vm535, %v990, 0.0
        %v1030 = vsel %vm535, %v992, 0.0
        %v1031 = vsel %vm535, %v994, 0.0
        %v1032 = vsel %vm535, %v996, 0.0
        %v1033 = vsel %vm535, %v998, 0.0
        %v1034 = vsel %vm535, %v1000, 0.0
        %v1035 = vsel %vm535, %v1002, 0.0
        %v1036 = vsel %vm535, %v1004, 0.0
        %v1037 = vsel %vm462, %v1029, 0.0
        %1038 = vadd.xlane.f32.xlu0 %v1037
        %v1039 = vpop.xlane.xlu0 %1038
        %v1040 = vsel %vm462, %v1030, 0.0
        %1041 = vadd.xlane.f32.xlu0 %v1040
        %v1042 = vpop.xlane.xlu0 %1041
        %v1043 = vsel %vm462, %v1031, 0.0
        %1044 = vadd.xlane.f32.xlu0 %v1043
        %v1045 = vpop.xlane.xlu0 %1044
        %v1046 = vsel %vm462, %v1032, 0.0
        %1047 = vadd.xlane.f32.xlu0 %v1046
        %v1048 = vpop.xlane.xlu0 %1047
        %v1049 = vsel %vm462, %v1033, 0.0
        %1050 = vadd.xlane.f32.xlu0 %v1049
        %v1051 = vpop.xlane.xlu0 %1050
        %v1052 = vsel %vm462, %v1034, 0.0
        %1053 = vadd.xlane.f32.xlu0 %v1052
        %v1054 = vpop.xlane.xlu0 %1053
        %v1055 = vsel %vm462, %v1035, 0.0
        %1056 = vadd.xlane.f32.xlu0 %v1055
        %v1057 = vpop.xlane.xlu0 %1056
        %v1058 = vsel %vm462, %v1036, 0.0
        %1059 = vadd.xlane.f32.xlu0 %v1058
        %v1060 = vpop.xlane.xlu0 %1059
        %v1061 = vmul.f32 %v1007, 0.5
        %v1062 = vmul.f32 %v1010, 0.5
        %v1063 = vmul.f32 %v1013, 0.5
        %v1064 = vmul.f32 %v1016, 0.5
        %v1065 = vmul.f32 %v1019, 0.5
        %v1066 = vmul.f32 %v1022, 0.5
        %v1067 = vmul.f32 %v1025, 0.5
        %v1068 = vmul.f32 %v1028, 0.5
        %vm1069 = vcmp.gt.f32.partialorder %v1039, %v1061
        %vm1070 = vcmp.gt.f32.partialorder %v1042, %v1062
        %vm1071 = vcmp.gt.f32.partialorder %v1045, %v1063
        %vm1072 = vcmp.gt.f32.partialorder %v1048, %v1064
        %vm1073 = vcmp.gt.f32.partialorder %v1051, %v1065
        %vm1074 = vcmp.gt.f32.partialorder %v1054, %v1066
        %vm1075 = vcmp.gt.f32.partialorder %v1057, %v1067
        %vm1076 = vcmp.gt.f32.partialorder %v1060, %v1068
        %v1077 = vsel %vm1069, 1, 0
        %v1078 = vsel %vm1070, 1, 0
        %v1079 = vsel %vm1071, 1, 0
        %v1080 = vsel %vm1072, 1, 0
        %v1081 = vsel %vm1073, 1, 0
        %v1082 = vsel %vm1074, 1, 0
        %v1083 = vsel %vm1075, 1, 0
        %v1084 = vsel %vm1076, 1, 0
        %v1085 = vcvt.s32.f32 %v1077
        %v1086 = vcvt.s32.f32 %v1078
        %v1087 = vcvt.s32.f32 %v1079
        %v1088 = vcvt.s32.f32 %v1080
        %v1089 = vcvt.s32.f32 %v1081
        %v1090 = vcvt.s32.f32 %v1082
        %v1091 = vcvt.s32.f32 %v1083
        %v1092 = vcvt.s32.f32 %v1084
        %vm1093 = vcmp.eq.f32.partialorder %v940, %v397
        %vm1094 = vcmp.eq.f32.partialorder %v941, %v397
        %vm1095 = vcmp.eq.f32.partialorder %v942, %v397
        %vm1096 = vcmp.eq.f32.partialorder %v943, %v397
        %vm1097 = vcmp.eq.f32.partialorder %v944, %v397
        %vm1098 = vcmp.eq.f32.partialorder %v945, %v397
        %vm1099 = vcmp.eq.f32.partialorder %v946, %v397
        %vm1100 = vcmp.eq.f32.partialorder %v947, %v397
        %v1101 = vsel %vm1093, 1, 0
        %v1102 = vsel %vm1094, 1, 0
        %v1103 = vsel %vm1095, 1, 0
        %v1104 = vsel %vm1096, 1, 0
        %v1105 = vsel %vm1097, 1, 0
        %v1106 = vsel %vm1098, 1, 0
        %v1107 = vsel %vm1099, 1, 0
        %v1108 = vsel %vm1100, 1, 0
        %v1109 = vcvt.s32.f32 %v1101
        %v1110 = vcvt.s32.f32 %v1102
        %v1111 = vcvt.s32.f32 %v1103
        %v1112 = vcvt.s32.f32 %v1104
        %v1113 = vcvt.s32.f32 %v1105
        %v1114 = vcvt.s32.f32 %v1106
        %v1115 = vcvt.s32.f32 %v1107
        %v1116 = vcvt.s32.f32 %v1108
        %1118 = vset.pattern.permute.xlu0 0
        %1119 = vperm.xlu0 %1118, %v949
        %v1120 = vpop.permute.xlu0 %1119
        %v1122 = vsub.f32 %v1120, %v633
        %v1123 = vsub.f32 %v1120, %v637
        %v1124 = vmul.f32 %v1122, %v1122
        %v1125 = vmul.f32 %v1123, %v1123
        %1126 = vset.pattern.permute.xlu0 1
        %1127 = vperm.xlu0 %1126, %v949
        %v1128 = vpop.permute.xlu0 %1127
        %v1130 = vsub.f32 %v1128, %v652
        %v1131 = vsub.f32 %v1128, %v656
        %v1132 = vmul.f32 %v1130, %v1130
        %v1133 = vmul.f32 %v1131, %v1131
        %v1134 = vadd.f32 %v1124, %v1132
        %v1135 = vadd.f32 %v1125, %v1133
        %vm1136 = vcmp.ne.f32.partialorder %v1085, %v395
        %vm1137 = vcmp.ne.f32.partialorder %v1085, %v396
        %v1138 = vsel %vm1136, %v1134, 1e+09
        %v1139 = vsel %vm1137, %v1135, 1e+09
        %1141 = vset.pattern.permute.xlu0 0
        %1142 = vperm.xlu0 %1141, %v1109
        %v1143 = vpop.permute.xlu0 %1142
        %vm1145 = vcmp.ne.f32.partialorder %v1143, %v405
        %vm1146 = vcmp.ne.f32.partialorder %v1143, %v409
        %v1147 = vsel %vm1145, %v1134, 1e+09
        %v1148 = vsel %vm1146, %v1135, 1e+09
        %v1149 = vmin.f32 %v926, %v1138
        %v1150 = vmin.f32 %v927, %v1139
        %v1151 = vmin.f32 %v928, %v1147
        %v1152 = vmin.f32 %v929, %v1148
        %1154 = vset.pattern.permute.xlu0 0
        %1155 = vperm.xlu0 %1154, %v950
        %v1156 = vpop.permute.xlu0 %1155
        %v1158 = vsub.f32 %v1156, %v633
        %v1159 = vsub.f32 %v1156, %v637
        %v1160 = vmul.f32 %v1158, %v1158
        %v1161 = vmul.f32 %v1159, %v1159
        %1162 = vset.pattern.permute.xlu0 1
        %1163 = vperm.xlu0 %1162, %v950
        %v1164 = vpop.permute.xlu0 %1163
        %v1166 = vsub.f32 %v1164, %v652
        %v1167 = vsub.f32 %v1164, %v656
        %v1168 = vmul.f32 %v1166, %v1166
        %v1169 = vmul.f32 %v1167, %v1167
        %v1170 = vadd.f32 %v1160, %v1168
        %v1171 = vadd.f32 %v1161, %v1169
        %vm1172 = vcmp.ne.f32.partialorder %v1086, %v395
        %vm1173 = vcmp.ne.f32.partialorder %v1086, %v396
        %v1174 = vsel %vm1172, %v1170, 1e+09
        %v1175 = vsel %vm1173, %v1171, 1e+09
        %1177 = vset.pattern.permute.xlu0 0
        %1178 = vperm.xlu0 %1177, %v1110
        %v1179 = vpop.permute.xlu0 %1178
        %vm1181 = vcmp.ne.f32.partialorder %v1179, %v405
        %vm1182 = vcmp.ne.f32.partialorder %v1179, %v409
        %v1183 = vsel %vm1181, %v1170, 1e+09
        %v1184 = vsel %vm1182, %v1171, 1e+09
        %v1185 = vmin.f32 %v1149, %v1174
        %v1186 = vmin.f32 %v1150, %v1175
        %v1187 = vmin.f32 %v1151, %v1183
        %v1188 = vmin.f32 %v1152, %v1184
        %1190 = vset.pattern.permute.xlu0 0
        %1191 = vperm.xlu0 %1190, %v951
        %v1192 = vpop.permute.xlu0 %1191
        %v1194 = vsub.f32 %v1192, %v633
        %v1195 = vsub.f32 %v1192, %v637
        %v1196 = vmul.f32 %v1194, %v1194
        %v1197 = vmul.f32 %v1195, %v1195
        %1198 = vset.pattern.permute.xlu0 1
        %1199 = vperm.xlu0 %1198, %v951
        %v1200 = vpop.permute.xlu0 %1199
        %v1202 = vsub.f32 %v1200, %v652
        %v1203 = vsub.f32 %v1200, %v656
        %v1204 = vmul.f32 %v1202, %v1202
        %v1205 = vmul.f32 %v1203, %v1203
        %v1206 = vadd.f32 %v1196, %v1204
        %v1207 = vadd.f32 %v1197, %v1205
        %vm1208 = vcmp.ne.f32.partialorder %v1087, %v395
        %vm1209 = vcmp.ne.f32.partialorder %v1087, %v396
        %v1210 = vsel %vm1208, %v1206, 1e+09
        %v1211 = vsel %vm1209, %v1207, 1e+09
        %1213 = vset.pattern.permute.xlu0 0
        %1214 = vperm.xlu0 %1213, %v1111
        %v1215 = vpop.permute.xlu0 %1214
        %vm1217 = vcmp.ne.f32.partialorder %v1215, %v405
        %vm1218 = vcmp.ne.f32.partialorder %v1215, %v409
        %v1219 = vsel %vm1217, %v1206, 1e+09
        %v1220 = vsel %vm1218, %v1207, 1e+09
        %v1221 = vmin.f32 %v1185, %v1210
        %v1222 = vmin.f32 %v1186, %v1211
        %v1223 = vmin.f32 %v1187, %v1219
        %v1224 = vmin.f32 %v1188, %v1220
        %1226 = vset.pattern.permute.xlu0 0
        %1227 = vperm.xlu0 %1226, %v952
        %v1228 = vpop.permute.xlu0 %1227
        %v1230 = vsub.f32 %v1228, %v633
        %v1231 = vsub.f32 %v1228, %v637
        %v1232 = vmul.f32 %v1230, %v1230
        %v1233 = vmul.f32 %v1231, %v1231
        %1234 = vset.pattern.permute.xlu0 1
        %1235 = vperm.xlu0 %1234, %v952
        %v1236 = vpop.permute.xlu0 %1235
        %v1238 = vsub.f32 %v1236, %v652
        %v1239 = vsub.f32 %v1236, %v656
        %v1240 = vmul.f32 %v1238, %v1238
        %v1241 = vmul.f32 %v1239, %v1239
        %v1242 = vadd.f32 %v1232, %v1240
        %v1243 = vadd.f32 %v1233, %v1241
        %vm1244 = vcmp.ne.f32.partialorder %v1088, %v395
        %vm1245 = vcmp.ne.f32.partialorder %v1088, %v396
        %v1246 = vsel %vm1244, %v1242, 1e+09
        %v1247 = vsel %vm1245, %v1243, 1e+09
        %1249 = vset.pattern.permute.xlu0 0
        %1250 = vperm.xlu0 %1249, %v1112
        %v1251 = vpop.permute.xlu0 %1250
        %vm1253 = vcmp.ne.f32.partialorder %v1251, %v405
        %vm1254 = vcmp.ne.f32.partialorder %v1251, %v409
        %v1255 = vsel %vm1253, %v1242, 1e+09
        %v1256 = vsel %vm1254, %v1243, 1e+09
        %v1257 = vmin.f32 %v1221, %v1246
        %v1258 = vmin.f32 %v1222, %v1247
        %v1259 = vmin.f32 %v1223, %v1255
        %v1260 = vmin.f32 %v1224, %v1256
        %1262 = vset.pattern.permute.xlu0 0
        %1263 = vperm.xlu0 %1262, %v953
        %v1264 = vpop.permute.xlu0 %1263
        %v1266 = vsub.f32 %v1264, %v633
        %v1267 = vsub.f32 %v1264, %v637
        %v1268 = vmul.f32 %v1266, %v1266
        %v1269 = vmul.f32 %v1267, %v1267
        %1270 = vset.pattern.permute.xlu0 1
        %1271 = vperm.xlu0 %1270, %v953
        %v1272 = vpop.permute.xlu0 %1271
        %v1274 = vsub.f32 %v1272, %v652
        %v1275 = vsub.f32 %v1272, %v656
        %v1276 = vmul.f32 %v1274, %v1274
        %v1277 = vmul.f32 %v1275, %v1275
        %v1278 = vadd.f32 %v1268, %v1276
        %v1279 = vadd.f32 %v1269, %v1277
        %vm1280 = vcmp.ne.f32.partialorder %v1089, %v395
        %vm1281 = vcmp.ne.f32.partialorder %v1089, %v396
        %v1282 = vsel %vm1280, %v1278, 1e+09
        %v1283 = vsel %vm1281, %v1279, 1e+09
        %1285 = vset.pattern.permute.xlu0 0
        %1286 = vperm.xlu0 %1285, %v1113
        %v1287 = vpop.permute.xlu0 %1286
        %vm1289 = vcmp.ne.f32.partialorder %v1287, %v405
        %vm1290 = vcmp.ne.f32.partialorder %v1287, %v409
        %v1291 = vsel %vm1289, %v1278, 1e+09
        %v1292 = vsel %vm1290, %v1279, 1e+09
        %v1293 = vmin.f32 %v1257, %v1282
        %v1294 = vmin.f32 %v1258, %v1283
        %v1295 = vmin.f32 %v1259, %v1291
        %v1296 = vmin.f32 %v1260, %v1292
        %1298 = vset.pattern.permute.xlu0 0
        %1299 = vperm.xlu0 %1298, %v954
        %v1300 = vpop.permute.xlu0 %1299
        %v1302 = vsub.f32 %v1300, %v633
        %v1303 = vsub.f32 %v1300, %v637
        %v1304 = vmul.f32 %v1302, %v1302
        %v1305 = vmul.f32 %v1303, %v1303
        %1306 = vset.pattern.permute.xlu0 1
        %1307 = vperm.xlu0 %1306, %v954
        %v1308 = vpop.permute.xlu0 %1307
        %v1310 = vsub.f32 %v1308, %v652
        %v1311 = vsub.f32 %v1308, %v656
        %v1312 = vmul.f32 %v1310, %v1310
        %v1313 = vmul.f32 %v1311, %v1311
        %v1314 = vadd.f32 %v1304, %v1312
        %v1315 = vadd.f32 %v1305, %v1313
        %vm1316 = vcmp.ne.f32.partialorder %v1090, %v395
        %vm1317 = vcmp.ne.f32.partialorder %v1090, %v396
        %v1318 = vsel %vm1316, %v1314, 1e+09
        %v1319 = vsel %vm1317, %v1315, 1e+09
        %1321 = vset.pattern.permute.xlu0 0
        %1322 = vperm.xlu0 %1321, %v1114
        %v1323 = vpop.permute.xlu0 %1322
        %vm1325 = vcmp.ne.f32.partialorder %v1323, %v405
        %vm1326 = vcmp.ne.f32.partialorder %v1323, %v409
        %v1327 = vsel %vm1325, %v1314, 1e+09
        %v1328 = vsel %vm1326, %v1315, 1e+09
        %v1329 = vmin.f32 %v1293, %v1318
        %v1330 = vmin.f32 %v1294, %v1319
        %v1331 = vmin.f32 %v1295, %v1327
        %v1332 = vmin.f32 %v1296, %v1328
        %1334 = vset.pattern.permute.xlu0 0
        %1335 = vperm.xlu0 %1334, %v955
        %v1336 = vpop.permute.xlu0 %1335
        %v1338 = vsub.f32 %v1336, %v633
        %v1339 = vsub.f32 %v1336, %v637
        %v1340 = vmul.f32 %v1338, %v1338
        %v1341 = vmul.f32 %v1339, %v1339
        %1342 = vset.pattern.permute.xlu0 1
        %1343 = vperm.xlu0 %1342, %v955
        %v1344 = vpop.permute.xlu0 %1343
        %v1346 = vsub.f32 %v1344, %v652
        %v1347 = vsub.f32 %v1344, %v656
        %v1348 = vmul.f32 %v1346, %v1346
        %v1349 = vmul.f32 %v1347, %v1347
        %v1350 = vadd.f32 %v1340, %v1348
        %v1351 = vadd.f32 %v1341, %v1349
        %vm1352 = vcmp.ne.f32.partialorder %v1091, %v395
        %vm1353 = vcmp.ne.f32.partialorder %v1091, %v396
        %v1354 = vsel %vm1352, %v1350, 1e+09
        %v1355 = vsel %vm1353, %v1351, 1e+09
        %1357 = vset.pattern.permute.xlu0 0
        %1358 = vperm.xlu0 %1357, %v1115
        %v1359 = vpop.permute.xlu0 %1358
        %vm1361 = vcmp.ne.f32.partialorder %v1359, %v405
        %vm1362 = vcmp.ne.f32.partialorder %v1359, %v409
        %v1363 = vsel %vm1361, %v1350, 1e+09
        %v1364 = vsel %vm1362, %v1351, 1e+09
        %v1365 = vmin.f32 %v1329, %v1354
        %v1366 = vmin.f32 %v1330, %v1355
        %v1367 = vmin.f32 %v1331, %v1363
        %v1368 = vmin.f32 %v1332, %v1364
        %1370 = vset.pattern.permute.xlu0 0
        %1371 = vperm.xlu0 %1370, %v956
        %v1372 = vpop.permute.xlu0 %1371
        %v1374 = vsub.f32 %v1372, %v633
        %v1375 = vsub.f32 %v1372, %v637
        %v1376 = vmul.f32 %v1374, %v1374
        %v1377 = vmul.f32 %v1375, %v1375
        %1378 = vset.pattern.permute.xlu0 1
        %1379 = vperm.xlu0 %1378, %v956
        %v1380 = vpop.permute.xlu0 %1379
        %v1382 = vsub.f32 %v1380, %v652
        %v1383 = vsub.f32 %v1380, %v656
        %v1384 = vmul.f32 %v1382, %v1382
        %v1385 = vmul.f32 %v1383, %v1383
        %v1386 = vadd.f32 %v1376, %v1384
        %v1387 = vadd.f32 %v1377, %v1385
        %vm1388 = vcmp.ne.f32.partialorder %v1092, %v395
        %vm1389 = vcmp.ne.f32.partialorder %v1092, %v396
        %v1390 = vsel %vm1388, %v1386, 1e+09
        %v1391 = vsel %vm1389, %v1387, 1e+09
        %1393 = vset.pattern.permute.xlu0 0
        %1394 = vperm.xlu0 %1393, %v1116
        %v1395 = vpop.permute.xlu0 %1394
        %vm1397 = vcmp.ne.f32.partialorder %v1395, %v405
        %vm1398 = vcmp.ne.f32.partialorder %v1395, %v409
        %v1399 = vsel %vm1397, %v1386, 1e+09
        %v1400 = vsel %vm1398, %v1387, 1e+09
        %v1401 = vmin.f32 %v1365, %v1390
        %v1402 = vmin.f32 %v1366, %v1391
        %v1403 = vmin.f32 %v1367, %v1399
        %v1404 = vmin.f32 %v1368, %v1400
        %s1405 = scalar_lea.vmem %s310, 128
        %v1406 = vld [vmem:[%s1405] sm:$0xff]
        %v1407 = vld [vmem:[%s1405 + $0x8] sm:$0xff]
        %v1408 = vld [vmem:[%s1405 + $0x10] sm:$0xff]
        %v1409 = vld [vmem:[%s1405 + $0x18] sm:$0xff]
        %v1410 = vld [vmem:[%s1405 + $0x20] sm:$0xff]
        %v1411 = vld [vmem:[%s1405 + $0x28] sm:$0xff]
        %v1412 = vld [vmem:[%s1405 + $0x30] sm:$0xff]
        %v1413 = vld [vmem:[%s1405 + $0x38] sm:$0xff]
        %s1414 = scalar_lea.vmem %s319, 128
        %v1415 = vld [vmem:[%s1414] sm:$0xff]
        %v1416 = vld [vmem:[%s1414 + $0x8] sm:$0xff]
        %v1417 = vld [vmem:[%s1414 + $0x10] sm:$0xff]
        %v1418 = vld [vmem:[%s1414 + $0x18] sm:$0xff]
        %v1419 = vld [vmem:[%s1414 + $0x20] sm:$0xff]
        %v1420 = vld [vmem:[%s1414 + $0x28] sm:$0xff]
        %v1421 = vld [vmem:[%s1414 + $0x30] sm:$0xff]
        %v1422 = vld [vmem:[%s1414 + $0x38] sm:$0xff]
        %s1423 = scalar_lea.vmem %s5, 128
        %v1424 = vld [vmem:[%s1423] sm:$0xff]
        %v1425 = vld [vmem:[%s1423 + $0x8] sm:$0xff]
        %v1426 = vld [vmem:[%s1423 + $0x10] sm:$0xff]
        %v1427 = vld [vmem:[%s1423 + $0x18] sm:$0xff]
        %v1428 = vld [vmem:[%s1423 + $0x20] sm:$0xff]
        %v1429 = vld [vmem:[%s1423 + $0x28] sm:$0xff]
        %v1430 = vld [vmem:[%s1423 + $0x30] sm:$0xff]
        %v1431 = vld [vmem:[%s1423 + $0x38] sm:$0xff]
        %v1432 = vsel %vm462, %v1406, -inf
        %1433 = vmax.xlane.f32.xlu0 %v1432
        %v1434 = vpop.xlane.xlu0 %1433
        %v1435 = vsel %vm462, %v1407, -inf
        %1436 = vmax.xlane.f32.xlu0 %v1435
        %v1437 = vpop.xlane.xlu0 %1436
        %v1438 = vsel %vm462, %v1408, -inf
        %1439 = vmax.xlane.f32.xlu0 %v1438
        %v1440 = vpop.xlane.xlu0 %1439
        %v1441 = vsel %vm462, %v1409, -inf
        %1442 = vmax.xlane.f32.xlu0 %v1441
        %v1443 = vpop.xlane.xlu0 %1442
        %v1444 = vsel %vm462, %v1410, -inf
        %1445 = vmax.xlane.f32.xlu0 %v1444
        %v1446 = vpop.xlane.xlu0 %1445
        %v1447 = vsel %vm462, %v1411, -inf
        %1448 = vmax.xlane.f32.xlu0 %v1447
        %v1449 = vpop.xlane.xlu0 %1448
        %v1450 = vsel %vm462, %v1412, -inf
        %1451 = vmax.xlane.f32.xlu0 %v1450
        %v1452 = vpop.xlane.xlu0 %1451
        %v1453 = vsel %vm462, %v1413, -inf
        %1454 = vmax.xlane.f32.xlu0 %v1453
        %v1455 = vpop.xlane.xlu0 %1454
        %v1456 = vsub.f32 %v1406, %v1434
        %v1457 = vsub.f32 %v1407, %v1437
        %v1458 = vsub.f32 %v1408, %v1440
        %v1459 = vsub.f32 %v1409, %v1443
        %v1460 = vsub.f32 %v1410, %v1446
        %v1461 = vsub.f32 %v1411, %v1449
        %v1462 = vsub.f32 %v1412, %v1452
        %v1463 = vsub.f32 %v1413, %v1455
        %v1464 = vmul.f32 %v1456, 1.442695
        %v1465 = vpow.pop %v1464
        %v1466 = vmul.f32 %v1457, 1.442695
        %v1467 = vpow.pop %v1466
        %v1468 = vmul.f32 %v1458, 1.442695
        %v1469 = vpow.pop %v1468
        %v1470 = vmul.f32 %v1459, 1.442695
        %v1471 = vpow.pop %v1470
        %v1472 = vmul.f32 %v1460, 1.442695
        %v1473 = vpow.pop %v1472
        %v1474 = vmul.f32 %v1461, 1.442695
        %v1475 = vpow.pop %v1474
        %v1476 = vmul.f32 %v1462, 1.442695
        %v1477 = vpow.pop %v1476
        %v1478 = vmul.f32 %v1463, 1.442695
        %v1479 = vpow.pop %v1478
        %v1480 = vsel %vm462, %v1465, 0.0
        %1481 = vadd.xlane.f32.xlu0 %v1480
        %v1482 = vpop.xlane.xlu0 %1481
        %v1483 = vsel %vm462, %v1467, 0.0
        %1484 = vadd.xlane.f32.xlu0 %v1483
        %v1485 = vpop.xlane.xlu0 %1484
        %v1486 = vsel %vm462, %v1469, 0.0
        %1487 = vadd.xlane.f32.xlu0 %v1486
        %v1488 = vpop.xlane.xlu0 %1487
        %v1489 = vsel %vm462, %v1471, 0.0
        %1490 = vadd.xlane.f32.xlu0 %v1489
        %v1491 = vpop.xlane.xlu0 %1490
        %v1492 = vsel %vm462, %v1473, 0.0
        %1493 = vadd.xlane.f32.xlu0 %v1492
        %v1494 = vpop.xlane.xlu0 %1493
        %v1495 = vsel %vm462, %v1475, 0.0
        %1496 = vadd.xlane.f32.xlu0 %v1495
        %v1497 = vpop.xlane.xlu0 %1496
        %v1498 = vsel %vm462, %v1477, 0.0
        %1499 = vadd.xlane.f32.xlu0 %v1498
        %v1500 = vpop.xlane.xlu0 %1499
        %v1501 = vsel %vm462, %v1479, 0.0
        %1502 = vadd.xlane.f32.xlu0 %v1501
        %v1503 = vpop.xlane.xlu0 %1502
        %v1504 = vsel %vm535, %v1465, 0.0
        %v1505 = vsel %vm535, %v1467, 0.0
        %v1506 = vsel %vm535, %v1469, 0.0
        %v1507 = vsel %vm535, %v1471, 0.0
        %v1508 = vsel %vm535, %v1473, 0.0
        %v1509 = vsel %vm535, %v1475, 0.0
        %v1510 = vsel %vm535, %v1477, 0.0
        %v1511 = vsel %vm535, %v1479, 0.0
        %v1512 = vsel %vm462, %v1504, 0.0
        %1513 = vadd.xlane.f32.xlu0 %v1512
        %v1514 = vpop.xlane.xlu0 %1513
        %v1515 = vsel %vm462, %v1505, 0.0
        %1516 = vadd.xlane.f32.xlu0 %v1515
        %v1517 = vpop.xlane.xlu0 %1516
        %v1518 = vsel %vm462, %v1506, 0.0
        %1519 = vadd.xlane.f32.xlu0 %v1518
        %v1520 = vpop.xlane.xlu0 %1519
        %v1521 = vsel %vm462, %v1507, 0.0
        %1522 = vadd.xlane.f32.xlu0 %v1521
        %v1523 = vpop.xlane.xlu0 %1522
        %v1524 = vsel %vm462, %v1508, 0.0
        %1525 = vadd.xlane.f32.xlu0 %v1524
        %v1526 = vpop.xlane.xlu0 %1525
        %v1527 = vsel %vm462, %v1509, 0.0
        %1528 = vadd.xlane.f32.xlu0 %v1527
        %v1529 = vpop.xlane.xlu0 %1528
        %v1530 = vsel %vm462, %v1510, 0.0
        %1531 = vadd.xlane.f32.xlu0 %v1530
        %v1532 = vpop.xlane.xlu0 %1531
        %v1533 = vsel %vm462, %v1511, 0.0
        %1534 = vadd.xlane.f32.xlu0 %v1533
        %v1535 = vpop.xlane.xlu0 %1534
        %v1536 = vmul.f32 %v1482, 0.5
        %v1537 = vmul.f32 %v1485, 0.5
        %v1538 = vmul.f32 %v1488, 0.5
        %v1539 = vmul.f32 %v1491, 0.5
        %v1540 = vmul.f32 %v1494, 0.5
        %v1541 = vmul.f32 %v1497, 0.5
        %v1542 = vmul.f32 %v1500, 0.5
        %v1543 = vmul.f32 %v1503, 0.5
        %vm1544 = vcmp.gt.f32.partialorder %v1514, %v1536
        %vm1545 = vcmp.gt.f32.partialorder %v1517, %v1537
        %vm1546 = vcmp.gt.f32.partialorder %v1520, %v1538
        %vm1547 = vcmp.gt.f32.partialorder %v1523, %v1539
        %vm1548 = vcmp.gt.f32.partialorder %v1526, %v1540
        %vm1549 = vcmp.gt.f32.partialorder %v1529, %v1541
        %vm1550 = vcmp.gt.f32.partialorder %v1532, %v1542
        %vm1551 = vcmp.gt.f32.partialorder %v1535, %v1543
        %v1552 = vsel %vm1544, 1, 0
        %v1553 = vsel %vm1545, 1, 0
        %v1554 = vsel %vm1546, 1, 0
        %v1555 = vsel %vm1547, 1, 0
        %v1556 = vsel %vm1548, 1, 0
        %v1557 = vsel %vm1549, 1, 0
        %v1558 = vsel %vm1550, 1, 0
        %v1559 = vsel %vm1551, 1, 0
        %v1560 = vcvt.s32.f32 %v1552
        %v1561 = vcvt.s32.f32 %v1553
        %v1562 = vcvt.s32.f32 %v1554
        %v1563 = vcvt.s32.f32 %v1555
        %v1564 = vcvt.s32.f32 %v1556
        %v1565 = vcvt.s32.f32 %v1557
        %v1566 = vcvt.s32.f32 %v1558
        %v1567 = vcvt.s32.f32 %v1559
        %vm1568 = vcmp.eq.f32.partialorder %v1415, %v397
        %vm1569 = vcmp.eq.f32.partialorder %v1416, %v397
        %vm1570 = vcmp.eq.f32.partialorder %v1417, %v397
        %vm1571 = vcmp.eq.f32.partialorder %v1418, %v397
        %vm1572 = vcmp.eq.f32.partialorder %v1419, %v397
        %vm1573 = vcmp.eq.f32.partialorder %v1420, %v397
        %vm1574 = vcmp.eq.f32.partialorder %v1421, %v397
        %vm1575 = vcmp.eq.f32.partialorder %v1422, %v397
        %v1576 = vsel %vm1568, 1, 0
        %v1577 = vsel %vm1569, 1, 0
        %v1578 = vsel %vm1570, 1, 0
        %v1579 = vsel %vm1571, 1, 0
        %v1580 = vsel %vm1572, 1, 0
        %v1581 = vsel %vm1573, 1, 0
        %v1582 = vsel %vm1574, 1, 0
        %v1583 = vsel %vm1575, 1, 0
        %v1584 = vcvt.s32.f32 %v1576
        %v1585 = vcvt.s32.f32 %v1577
        %v1586 = vcvt.s32.f32 %v1578
        %v1587 = vcvt.s32.f32 %v1579
        %v1588 = vcvt.s32.f32 %v1580
        %v1589 = vcvt.s32.f32 %v1581
        %v1590 = vcvt.s32.f32 %v1582
        %v1591 = vcvt.s32.f32 %v1583
        %1593 = vset.pattern.permute.xlu0 0
        %1594 = vperm.xlu0 %1593, %v1424
        %v1595 = vpop.permute.xlu0 %1594
        %v1597 = vsub.f32 %v1595, %v633
        %v1598 = vsub.f32 %v1595, %v637
        %v1599 = vmul.f32 %v1597, %v1597
        %v1600 = vmul.f32 %v1598, %v1598
        %1601 = vset.pattern.permute.xlu0 1
        %1602 = vperm.xlu0 %1601, %v1424
        %v1603 = vpop.permute.xlu0 %1602
        %v1605 = vsub.f32 %v1603, %v652
        %v1606 = vsub.f32 %v1603, %v656
        %v1607 = vmul.f32 %v1605, %v1605
        %v1608 = vmul.f32 %v1606, %v1606
        %v1609 = vadd.f32 %v1599, %v1607
        %v1610 = vadd.f32 %v1600, %v1608
        %vm1611 = vcmp.ne.f32.partialorder %v1560, %v395
        %vm1612 = vcmp.ne.f32.partialorder %v1560, %v396
        %v1613 = vsel %vm1611, %v1609, 1e+09
        %v1614 = vsel %vm1612, %v1610, 1e+09
        %1616 = vset.pattern.permute.xlu0 0
        %1617 = vperm.xlu0 %1616, %v1584
        %v1618 = vpop.permute.xlu0 %1617
        %vm1620 = vcmp.ne.f32.partialorder %v1618, %v405
        %vm1621 = vcmp.ne.f32.partialorder %v1618, %v409
        %v1622 = vsel %vm1620, %v1609, 1e+09
        %v1623 = vsel %vm1621, %v1610, 1e+09
        %v1624 = vmin.f32 %v1401, %v1613
        %v1625 = vmin.f32 %v1402, %v1614
        %v1626 = vmin.f32 %v1403, %v1622
        %v1627 = vmin.f32 %v1404, %v1623
        %1629 = vset.pattern.permute.xlu0 0
        %1630 = vperm.xlu0 %1629, %v1425
        %v1631 = vpop.permute.xlu0 %1630
        %v1633 = vsub.f32 %v1631, %v633
        %v1634 = vsub.f32 %v1631, %v637
        %v1635 = vmul.f32 %v1633, %v1633
        %v1636 = vmul.f32 %v1634, %v1634
        %1637 = vset.pattern.permute.xlu0 1
        %1638 = vperm.xlu0 %1637, %v1425
        %v1639 = vpop.permute.xlu0 %1638
        %v1641 = vsub.f32 %v1639, %v652
        %v1642 = vsub.f32 %v1639, %v656
        %v1643 = vmul.f32 %v1641, %v1641
        %v1644 = vmul.f32 %v1642, %v1642
        %v1645 = vadd.f32 %v1635, %v1643
        %v1646 = vadd.f32 %v1636, %v1644
        %vm1647 = vcmp.ne.f32.partialorder %v1561, %v395
        %vm1648 = vcmp.ne.f32.partialorder %v1561, %v396
        %v1649 = vsel %vm1647, %v1645, 1e+09
        %v1650 = vsel %vm1648, %v1646, 1e+09
        %1652 = vset.pattern.permute.xlu0 0
        %1653 = vperm.xlu0 %1652, %v1585
        %v1654 = vpop.permute.xlu0 %1653
        %vm1656 = vcmp.ne.f32.partialorder %v1654, %v405
        %vm1657 = vcmp.ne.f32.partialorder %v1654, %v409
        %v1658 = vsel %vm1656, %v1645, 1e+09
        %v1659 = vsel %vm1657, %v1646, 1e+09
        %v1660 = vmin.f32 %v1624, %v1649
        %v1661 = vmin.f32 %v1625, %v1650
        %v1662 = vmin.f32 %v1626, %v1658
        %v1663 = vmin.f32 %v1627, %v1659
        %1665 = vset.pattern.permute.xlu0 0
        %1666 = vperm.xlu0 %1665, %v1426
        %v1667 = vpop.permute.xlu0 %1666
        %v1669 = vsub.f32 %v1667, %v633
        %v1670 = vsub.f32 %v1667, %v637
        %v1671 = vmul.f32 %v1669, %v1669
        %v1672 = vmul.f32 %v1670, %v1670
        %1673 = vset.pattern.permute.xlu0 1
        %1674 = vperm.xlu0 %1673, %v1426
        %v1675 = vpop.permute.xlu0 %1674
        %v1677 = vsub.f32 %v1675, %v652
        %v1678 = vsub.f32 %v1675, %v656
        %v1679 = vmul.f32 %v1677, %v1677
        %v1680 = vmul.f32 %v1678, %v1678
        %v1681 = vadd.f32 %v1671, %v1679
        %v1682 = vadd.f32 %v1672, %v1680
        %vm1683 = vcmp.ne.f32.partialorder %v1562, %v395
        %vm1684 = vcmp.ne.f32.partialorder %v1562, %v396
        %v1685 = vsel %vm1683, %v1681, 1e+09
        %v1686 = vsel %vm1684, %v1682, 1e+09
        %1688 = vset.pattern.permute.xlu0 0
        %1689 = vperm.xlu0 %1688, %v1586
        %v1690 = vpop.permute.xlu0 %1689
        %vm1692 = vcmp.ne.f32.partialorder %v1690, %v405
        %vm1693 = vcmp.ne.f32.partialorder %v1690, %v409
        %v1694 = vsel %vm1692, %v1681, 1e+09
        %v1695 = vsel %vm1693, %v1682, 1e+09
        %v1696 = vmin.f32 %v1660, %v1685
        %v1697 = vmin.f32 %v1661, %v1686
        %v1698 = vmin.f32 %v1662, %v1694
        %v1699 = vmin.f32 %v1663, %v1695
        %1701 = vset.pattern.permute.xlu0 0
        %1702 = vperm.xlu0 %1701, %v1427
        %v1703 = vpop.permute.xlu0 %1702
        %v1705 = vsub.f32 %v1703, %v633
        %v1706 = vsub.f32 %v1703, %v637
        %v1707 = vmul.f32 %v1705, %v1705
        %v1708 = vmul.f32 %v1706, %v1706
        %1709 = vset.pattern.permute.xlu0 1
        %1710 = vperm.xlu0 %1709, %v1427
        %v1711 = vpop.permute.xlu0 %1710
        %v1713 = vsub.f32 %v1711, %v652
        %v1714 = vsub.f32 %v1711, %v656
        %v1715 = vmul.f32 %v1713, %v1713
        %v1716 = vmul.f32 %v1714, %v1714
        %v1717 = vadd.f32 %v1707, %v1715
        %v1718 = vadd.f32 %v1708, %v1716
        %vm1719 = vcmp.ne.f32.partialorder %v1563, %v395
        %vm1720 = vcmp.ne.f32.partialorder %v1563, %v396
        %v1721 = vsel %vm1719, %v1717, 1e+09
        %v1722 = vsel %vm1720, %v1718, 1e+09
        %1724 = vset.pattern.permute.xlu0 0
        %1725 = vperm.xlu0 %1724, %v1587
        %v1726 = vpop.permute.xlu0 %1725
        %vm1728 = vcmp.ne.f32.partialorder %v1726, %v405
        %vm1729 = vcmp.ne.f32.partialorder %v1726, %v409
        %v1730 = vsel %vm1728, %v1717, 1e+09
        %v1731 = vsel %vm1729, %v1718, 1e+09
        %v1732 = vmin.f32 %v1696, %v1721
        %v1733 = vmin.f32 %v1697, %v1722
        %v1734 = vmin.f32 %v1698, %v1730
        %v1735 = vmin.f32 %v1699, %v1731
        %1737 = vset.pattern.permute.xlu0 0
        %1738 = vperm.xlu0 %1737, %v1428
        %v1739 = vpop.permute.xlu0 %1738
        %v1741 = vsub.f32 %v1739, %v633
        %v1742 = vsub.f32 %v1739, %v637
        %v1743 = vmul.f32 %v1741, %v1741
        %v1744 = vmul.f32 %v1742, %v1742
        %1745 = vset.pattern.permute.xlu0 1
        %1746 = vperm.xlu0 %1745, %v1428
        %v1747 = vpop.permute.xlu0 %1746
        %v1749 = vsub.f32 %v1747, %v652
        %v1750 = vsub.f32 %v1747, %v656
        %v1751 = vmul.f32 %v1749, %v1749
        %v1752 = vmul.f32 %v1750, %v1750
        %v1753 = vadd.f32 %v1743, %v1751
        %v1754 = vadd.f32 %v1744, %v1752
        %vm1755 = vcmp.ne.f32.partialorder %v1564, %v395
        %vm1756 = vcmp.ne.f32.partialorder %v1564, %v396
        %v1757 = vsel %vm1755, %v1753, 1e+09
        %v1758 = vsel %vm1756, %v1754, 1e+09
        %1760 = vset.pattern.permute.xlu0 0
        %1761 = vperm.xlu0 %1760, %v1588
        %v1762 = vpop.permute.xlu0 %1761
        %vm1764 = vcmp.ne.f32.partialorder %v1762, %v405
        %vm1765 = vcmp.ne.f32.partialorder %v1762, %v409
        %v1766 = vsel %vm1764, %v1753, 1e+09
        %v1767 = vsel %vm1765, %v1754, 1e+09
        %v1768 = vmin.f32 %v1732, %v1757
        %v1769 = vmin.f32 %v1733, %v1758
        %v1770 = vmin.f32 %v1734, %v1766
        %v1771 = vmin.f32 %v1735, %v1767
        %1773 = vset.pattern.permute.xlu0 0
        %1774 = vperm.xlu0 %1773, %v1429
        %v1775 = vpop.permute.xlu0 %1774
        %v1777 = vsub.f32 %v1775, %v633
        %v1778 = vsub.f32 %v1775, %v637
        %v1779 = vmul.f32 %v1777, %v1777
        %v1780 = vmul.f32 %v1778, %v1778
        %1781 = vset.pattern.permute.xlu0 1
        %1782 = vperm.xlu0 %1781, %v1429
        %v1783 = vpop.permute.xlu0 %1782
        %v1785 = vsub.f32 %v1783, %v652
        %v1786 = vsub.f32 %v1783, %v656
        %v1787 = vmul.f32 %v1785, %v1785
        %v1788 = vmul.f32 %v1786, %v1786
        %v1789 = vadd.f32 %v1779, %v1787
        %v1790 = vadd.f32 %v1780, %v1788
        %vm1791 = vcmp.ne.f32.partialorder %v1565, %v395
        %vm1792 = vcmp.ne.f32.partialorder %v1565, %v396
        %v1793 = vsel %vm1791, %v1789, 1e+09
        %v1794 = vsel %vm1792, %v1790, 1e+09
        %1796 = vset.pattern.permute.xlu0 0
        %1797 = vperm.xlu0 %1796, %v1589
        %v1798 = vpop.permute.xlu0 %1797
        %vm1800 = vcmp.ne.f32.partialorder %v1798, %v405
        %vm1801 = vcmp.ne.f32.partialorder %v1798, %v409
        %v1802 = vsel %vm1800, %v1789, 1e+09
        %v1803 = vsel %vm1801, %v1790, 1e+09
        %v1804 = vmin.f32 %v1768, %v1793
        %v1805 = vmin.f32 %v1769, %v1794
        %v1806 = vmin.f32 %v1770, %v1802
        %v1807 = vmin.f32 %v1771, %v1803
        %1809 = vset.pattern.permute.xlu0 0
        %1810 = vperm.xlu0 %1809, %v1430
        %v1811 = vpop.permute.xlu0 %1810
        %v1813 = vsub.f32 %v1811, %v633
        %v1814 = vsub.f32 %v1811, %v637
        %v1815 = vmul.f32 %v1813, %v1813
        %v1816 = vmul.f32 %v1814, %v1814
        %1817 = vset.pattern.permute.xlu0 1
        %1818 = vperm.xlu0 %1817, %v1430
        %v1819 = vpop.permute.xlu0 %1818
        %v1821 = vsub.f32 %v1819, %v652
        %v1822 = vsub.f32 %v1819, %v656
        %v1823 = vmul.f32 %v1821, %v1821
        %v1824 = vmul.f32 %v1822, %v1822
        %v1825 = vadd.f32 %v1815, %v1823
        %v1826 = vadd.f32 %v1816, %v1824
        %vm1827 = vcmp.ne.f32.partialorder %v1566, %v395
        %vm1828 = vcmp.ne.f32.partialorder %v1566, %v396
        %v1829 = vsel %vm1827, %v1825, 1e+09
        %v1830 = vsel %vm1828, %v1826, 1e+09
        %1832 = vset.pattern.permute.xlu0 0
        %1833 = vperm.xlu0 %1832, %v1590
        %v1834 = vpop.permute.xlu0 %1833
        %vm1836 = vcmp.ne.f32.partialorder %v1834, %v405
        %vm1837 = vcmp.ne.f32.partialorder %v1834, %v409
        %v1838 = vsel %vm1836, %v1825, 1e+09
        %v1839 = vsel %vm1837, %v1826, 1e+09
        %v1840 = vmin.f32 %v1804, %v1829
        %v1841 = vmin.f32 %v1805, %v1830
        %v1842 = vmin.f32 %v1806, %v1838
        %v1843 = vmin.f32 %v1807, %v1839
        %1845 = vset.pattern.permute.xlu0 0
        %1846 = vperm.xlu0 %1845, %v1431
        %v1847 = vpop.permute.xlu0 %1846
        %v1849 = vsub.f32 %v1847, %v633
        %v1850 = vsub.f32 %v1847, %v637
        %v1851 = vmul.f32 %v1849, %v1849
        %v1852 = vmul.f32 %v1850, %v1850
        %1853 = vset.pattern.permute.xlu0 1
        %1854 = vperm.xlu0 %1853, %v1431
        %v1855 = vpop.permute.xlu0 %1854
        %v1857 = vsub.f32 %v1855, %v652
        %v1858 = vsub.f32 %v1855, %v656
        %v1859 = vmul.f32 %v1857, %v1857
        %v1860 = vmul.f32 %v1858, %v1858
        %v1861 = vadd.f32 %v1851, %v1859
        %v1862 = vadd.f32 %v1852, %v1860
        %vm1863 = vcmp.ne.f32.partialorder %v1567, %v395
        %vm1864 = vcmp.ne.f32.partialorder %v1567, %v396
        %v1865 = vsel %vm1863, %v1861, 1e+09
        %v1866 = vsel %vm1864, %v1862, 1e+09
        %1868 = vset.pattern.permute.xlu0 0
        %1869 = vperm.xlu0 %1868, %v1591
        %v1870 = vpop.permute.xlu0 %1869
        %vm1872 = vcmp.ne.f32.partialorder %v1870, %v405
        %vm1873 = vcmp.ne.f32.partialorder %v1870, %v409
        %v1874 = vsel %vm1872, %v1861, 1e+09
        %v1875 = vsel %vm1873, %v1862, 1e+09
        %v1876 = vmin.f32 %v1840, %v1865
        %v1877 = vmin.f32 %v1841, %v1866
        %v1878 = vmin.f32 %v1842, %v1874
        %v1879 = vmin.f32 %v1843, %v1875
        %s1880 = scalar_lea.vmem %s310, 192
        %v1881 = vld [vmem:[%s1880] sm:$0xff]
        %v1882 = vld [vmem:[%s1880 + $0x8] sm:$0xff]
        %v1883 = vld [vmem:[%s1880 + $0x10] sm:$0xff]
        %v1884 = vld [vmem:[%s1880 + $0x18] sm:$0xff]
        %v1885 = vld [vmem:[%s1880 + $0x20] sm:$0xff]
        %v1886 = vld [vmem:[%s1880 + $0x28] sm:$0xff]
        %v1887 = vld [vmem:[%s1880 + $0x30] sm:$0xff]
        %v1888 = vld [vmem:[%s1880 + $0x38] sm:$0xff]
        %s1889 = scalar_lea.vmem %s319, 192
        %v1890 = vld [vmem:[%s1889] sm:$0xff]
        %v1891 = vld [vmem:[%s1889 + $0x8] sm:$0xff]
        %v1892 = vld [vmem:[%s1889 + $0x10] sm:$0xff]
        %v1893 = vld [vmem:[%s1889 + $0x18] sm:$0xff]
        %v1894 = vld [vmem:[%s1889 + $0x20] sm:$0xff]
        %v1895 = vld [vmem:[%s1889 + $0x28] sm:$0xff]
        %v1896 = vld [vmem:[%s1889 + $0x30] sm:$0xff]
        %v1897 = vld [vmem:[%s1889 + $0x38] sm:$0xff]
        %s1898 = scalar_lea.vmem %s5, 192
        %v1899 = vld [vmem:[%s1898] sm:$0xff]
        %v1900 = vld [vmem:[%s1898 + $0x8] sm:$0xff]
        %v1901 = vld [vmem:[%s1898 + $0x10] sm:$0xff]
        %v1902 = vld [vmem:[%s1898 + $0x18] sm:$0xff]
        %v1903 = vld [vmem:[%s1898 + $0x20] sm:$0xff]
        %v1904 = vld [vmem:[%s1898 + $0x28] sm:$0xff]
        %v1905 = vld [vmem:[%s1898 + $0x30] sm:$0xff]
        %v1906 = vld [vmem:[%s1898 + $0x38] sm:$0xff]
        %v1907 = vsel %vm462, %v1881, -inf
        %1908 = vmax.xlane.f32.xlu0 %v1907
        %v1909 = vpop.xlane.xlu0 %1908
        %v1910 = vsel %vm462, %v1882, -inf
        %1911 = vmax.xlane.f32.xlu0 %v1910
        %v1912 = vpop.xlane.xlu0 %1911
        %v1913 = vsel %vm462, %v1883, -inf
        %1914 = vmax.xlane.f32.xlu0 %v1913
        %v1915 = vpop.xlane.xlu0 %1914
        %v1916 = vsel %vm462, %v1884, -inf
        %1917 = vmax.xlane.f32.xlu0 %v1916
        %v1918 = vpop.xlane.xlu0 %1917
        %v1919 = vsel %vm462, %v1885, -inf
        %1920 = vmax.xlane.f32.xlu0 %v1919
        %v1921 = vpop.xlane.xlu0 %1920
        %v1922 = vsel %vm462, %v1886, -inf
        %1923 = vmax.xlane.f32.xlu0 %v1922
        %v1924 = vpop.xlane.xlu0 %1923
        %v1925 = vsel %vm462, %v1887, -inf
        %1926 = vmax.xlane.f32.xlu0 %v1925
        %v1927 = vpop.xlane.xlu0 %1926
        %v1928 = vsel %vm462, %v1888, -inf
        %1929 = vmax.xlane.f32.xlu0 %v1928
        %v1930 = vpop.xlane.xlu0 %1929
        %v1931 = vsub.f32 %v1881, %v1909
        %v1932 = vsub.f32 %v1882, %v1912
        %v1933 = vsub.f32 %v1883, %v1915
        %v1934 = vsub.f32 %v1884, %v1918
        %v1935 = vsub.f32 %v1885, %v1921
        %v1936 = vsub.f32 %v1886, %v1924
        %v1937 = vsub.f32 %v1887, %v1927
        %v1938 = vsub.f32 %v1888, %v1930
        %v1939 = vmul.f32 %v1931, 1.442695
        %v1940 = vpow.pop %v1939
        %v1941 = vmul.f32 %v1932, 1.442695
        %v1942 = vpow.pop %v1941
        %v1943 = vmul.f32 %v1933, 1.442695
        %v1944 = vpow.pop %v1943
        %v1945 = vmul.f32 %v1934, 1.442695
        %v1946 = vpow.pop %v1945
        %v1947 = vmul.f32 %v1935, 1.442695
        %v1948 = vpow.pop %v1947
        %v1949 = vmul.f32 %v1936, 1.442695
        %v1950 = vpow.pop %v1949
        %v1951 = vmul.f32 %v1937, 1.442695
        %v1952 = vpow.pop %v1951
        %v1953 = vmul.f32 %v1938, 1.442695
        %v1954 = vpow.pop %v1953
        %v1955 = vsel %vm462, %v1940, 0.0
        %1956 = vadd.xlane.f32.xlu0 %v1955
        %v1957 = vpop.xlane.xlu0 %1956
        %v1958 = vsel %vm462, %v1942, 0.0
        %1959 = vadd.xlane.f32.xlu0 %v1958
        %v1960 = vpop.xlane.xlu0 %1959
        %v1961 = vsel %vm462, %v1944, 0.0
        %1962 = vadd.xlane.f32.xlu0 %v1961
        %v1963 = vpop.xlane.xlu0 %1962
        %v1964 = vsel %vm462, %v1946, 0.0
        %1965 = vadd.xlane.f32.xlu0 %v1964
        %v1966 = vpop.xlane.xlu0 %1965
        %v1967 = vsel %vm462, %v1948, 0.0
        %1968 = vadd.xlane.f32.xlu0 %v1967
        %v1969 = vpop.xlane.xlu0 %1968
        %v1970 = vsel %vm462, %v1950, 0.0
        %1971 = vadd.xlane.f32.xlu0 %v1970
        %v1972 = vpop.xlane.xlu0 %1971
        %v1973 = vsel %vm462, %v1952, 0.0
        %1974 = vadd.xlane.f32.xlu0 %v1973
        %v1975 = vpop.xlane.xlu0 %1974
        %v1976 = vsel %vm462, %v1954, 0.0
        %1977 = vadd.xlane.f32.xlu0 %v1976
        %v1978 = vpop.xlane.xlu0 %1977
        %v1979 = vsel %vm535, %v1940, 0.0
        %v1980 = vsel %vm535, %v1942, 0.0
        %v1981 = vsel %vm535, %v1944, 0.0
        %v1982 = vsel %vm535, %v1946, 0.0
        %v1983 = vsel %vm535, %v1948, 0.0
        %v1984 = vsel %vm535, %v1950, 0.0
        %v1985 = vsel %vm535, %v1952, 0.0
        %v1986 = vsel %vm535, %v1954, 0.0
        %v1987 = vsel %vm462, %v1979, 0.0
        %1988 = vadd.xlane.f32.xlu0 %v1987
        %v1989 = vpop.xlane.xlu0 %1988
        %v1990 = vsel %vm462, %v1980, 0.0
        %1991 = vadd.xlane.f32.xlu0 %v1990
        %v1992 = vpop.xlane.xlu0 %1991
        %v1993 = vsel %vm462, %v1981, 0.0
        %1994 = vadd.xlane.f32.xlu0 %v1993
        %v1995 = vpop.xlane.xlu0 %1994
        %v1996 = vsel %vm462, %v1982, 0.0
        %1997 = vadd.xlane.f32.xlu0 %v1996
        %v1998 = vpop.xlane.xlu0 %1997
        %v1999 = vsel %vm462, %v1983, 0.0
        %2000 = vadd.xlane.f32.xlu0 %v1999
        %v2001 = vpop.xlane.xlu0 %2000
        %v2002 = vsel %vm462, %v1984, 0.0
        %2003 = vadd.xlane.f32.xlu0 %v2002
        %v2004 = vpop.xlane.xlu0 %2003
        %v2005 = vsel %vm462, %v1985, 0.0
        %2006 = vadd.xlane.f32.xlu0 %v2005
        %v2007 = vpop.xlane.xlu0 %2006
        %v2008 = vsel %vm462, %v1986, 0.0
        %2009 = vadd.xlane.f32.xlu0 %v2008
        %v2010 = vpop.xlane.xlu0 %2009
        %v2011 = vmul.f32 %v1957, 0.5
        %v2012 = vmul.f32 %v1960, 0.5
        %v2013 = vmul.f32 %v1963, 0.5
        %v2014 = vmul.f32 %v1966, 0.5
        %v2015 = vmul.f32 %v1969, 0.5
        %v2016 = vmul.f32 %v1972, 0.5
        %v2017 = vmul.f32 %v1975, 0.5
        %v2018 = vmul.f32 %v1978, 0.5
        %vm2019 = vcmp.gt.f32.partialorder %v1989, %v2011
        %vm2020 = vcmp.gt.f32.partialorder %v1992, %v2012
        %vm2021 = vcmp.gt.f32.partialorder %v1995, %v2013
        %vm2022 = vcmp.gt.f32.partialorder %v1998, %v2014
        %vm2023 = vcmp.gt.f32.partialorder %v2001, %v2015
        %vm2024 = vcmp.gt.f32.partialorder %v2004, %v2016
        %vm2025 = vcmp.gt.f32.partialorder %v2007, %v2017
        %vm2026 = vcmp.gt.f32.partialorder %v2010, %v2018
        %v2027 = vsel %vm2019, 1, 0
        %v2028 = vsel %vm2020, 1, 0
        %v2029 = vsel %vm2021, 1, 0
        %v2030 = vsel %vm2022, 1, 0
        %v2031 = vsel %vm2023, 1, 0
        %v2032 = vsel %vm2024, 1, 0
        %v2033 = vsel %vm2025, 1, 0
        %v2034 = vsel %vm2026, 1, 0
        %v2035 = vcvt.s32.f32 %v2027
        %v2036 = vcvt.s32.f32 %v2028
        %v2037 = vcvt.s32.f32 %v2029
        %v2038 = vcvt.s32.f32 %v2030
        %v2039 = vcvt.s32.f32 %v2031
        %v2040 = vcvt.s32.f32 %v2032
        %v2041 = vcvt.s32.f32 %v2033
        %v2042 = vcvt.s32.f32 %v2034
        %vm2043 = vcmp.eq.f32.partialorder %v1890, %v397
        %vm2044 = vcmp.eq.f32.partialorder %v1891, %v397
        %vm2045 = vcmp.eq.f32.partialorder %v1892, %v397
        %vm2046 = vcmp.eq.f32.partialorder %v1893, %v397
        %vm2047 = vcmp.eq.f32.partialorder %v1894, %v397
        %vm2048 = vcmp.eq.f32.partialorder %v1895, %v397
        %vm2049 = vcmp.eq.f32.partialorder %v1896, %v397
        %vm2050 = vcmp.eq.f32.partialorder %v1897, %v397
        %v2051 = vsel %vm2043, 1, 0
        %v2052 = vsel %vm2044, 1, 0
        %v2053 = vsel %vm2045, 1, 0
        %v2054 = vsel %vm2046, 1, 0
        %v2055 = vsel %vm2047, 1, 0
        %v2056 = vsel %vm2048, 1, 0
        %v2057 = vsel %vm2049, 1, 0
        %v2058 = vsel %vm2050, 1, 0
        %v2059 = vcvt.s32.f32 %v2051
        %v2060 = vcvt.s32.f32 %v2052
        %v2061 = vcvt.s32.f32 %v2053
        %v2062 = vcvt.s32.f32 %v2054
        %v2063 = vcvt.s32.f32 %v2055
        %v2064 = vcvt.s32.f32 %v2056
        %v2065 = vcvt.s32.f32 %v2057
        %v2066 = vcvt.s32.f32 %v2058
        %2068 = vset.pattern.permute.xlu0 0
        %2069 = vperm.xlu0 %2068, %v1899
        %v2070 = vpop.permute.xlu0 %2069
        %v2072 = vsub.f32 %v2070, %v633
        %v2073 = vsub.f32 %v2070, %v637
        %v2074 = vmul.f32 %v2072, %v2072
        %v2075 = vmul.f32 %v2073, %v2073
        %2076 = vset.pattern.permute.xlu0 1
        %2077 = vperm.xlu0 %2076, %v1899
        %v2078 = vpop.permute.xlu0 %2077
        %v2080 = vsub.f32 %v2078, %v652
        %v2081 = vsub.f32 %v2078, %v656
        %v2082 = vmul.f32 %v2080, %v2080
        %v2083 = vmul.f32 %v2081, %v2081
        %v2084 = vadd.f32 %v2074, %v2082
        %v2085 = vadd.f32 %v2075, %v2083
        %vm2086 = vcmp.ne.f32.partialorder %v2035, %v395
        %vm2087 = vcmp.ne.f32.partialorder %v2035, %v396
        %v2088 = vsel %vm2086, %v2084, 1e+09
        %v2089 = vsel %vm2087, %v2085, 1e+09
        %2091 = vset.pattern.permute.xlu0 0
        %2092 = vperm.xlu0 %2091, %v2059
        %v2093 = vpop.permute.xlu0 %2092
        %vm2095 = vcmp.ne.f32.partialorder %v2093, %v405
        %vm2096 = vcmp.ne.f32.partialorder %v2093, %v409
        %v2097 = vsel %vm2095, %v2084, 1e+09
        %v2098 = vsel %vm2096, %v2085, 1e+09
        %v2099 = vmin.f32 %v1876, %v2088
        %v2100 = vmin.f32 %v1877, %v2089
        %v2101 = vmin.f32 %v1878, %v2097
        %v2102 = vmin.f32 %v1879, %v2098
        %2104 = vset.pattern.permute.xlu0 0
        %2105 = vperm.xlu0 %2104, %v1900
        %v2106 = vpop.permute.xlu0 %2105
        %v2108 = vsub.f32 %v2106, %v633
        %v2109 = vsub.f32 %v2106, %v637
        %v2110 = vmul.f32 %v2108, %v2108
        %v2111 = vmul.f32 %v2109, %v2109
        %2112 = vset.pattern.permute.xlu0 1
        %2113 = vperm.xlu0 %2112, %v1900
        %v2114 = vpop.permute.xlu0 %2113
        %v2116 = vsub.f32 %v2114, %v652
        %v2117 = vsub.f32 %v2114, %v656
        %v2118 = vmul.f32 %v2116, %v2116
        %v2119 = vmul.f32 %v2117, %v2117
        %v2120 = vadd.f32 %v2110, %v2118
        %v2121 = vadd.f32 %v2111, %v2119
        %vm2122 = vcmp.ne.f32.partialorder %v2036, %v395
        %vm2123 = vcmp.ne.f32.partialorder %v2036, %v396
        %v2124 = vsel %vm2122, %v2120, 1e+09
        %v2125 = vsel %vm2123, %v2121, 1e+09
        %2127 = vset.pattern.permute.xlu0 0
        %2128 = vperm.xlu0 %2127, %v2060
        %v2129 = vpop.permute.xlu0 %2128
        %vm2131 = vcmp.ne.f32.partialorder %v2129, %v405
        %vm2132 = vcmp.ne.f32.partialorder %v2129, %v409
        %v2133 = vsel %vm2131, %v2120, 1e+09
        %v2134 = vsel %vm2132, %v2121, 1e+09
        %v2135 = vmin.f32 %v2099, %v2124
        %v2136 = vmin.f32 %v2100, %v2125
        %v2137 = vmin.f32 %v2101, %v2133
        %v2138 = vmin.f32 %v2102, %v2134
        %2140 = vset.pattern.permute.xlu0 0
        %2141 = vperm.xlu0 %2140, %v1901
        %v2142 = vpop.permute.xlu0 %2141
        %v2144 = vsub.f32 %v2142, %v633
        %v2145 = vsub.f32 %v2142, %v637
        %v2146 = vmul.f32 %v2144, %v2144
        %v2147 = vmul.f32 %v2145, %v2145
        %2148 = vset.pattern.permute.xlu0 1
        %2149 = vperm.xlu0 %2148, %v1901
        %v2150 = vpop.permute.xlu0 %2149
        %v2152 = vsub.f32 %v2150, %v652
        %v2153 = vsub.f32 %v2150, %v656
        %v2154 = vmul.f32 %v2152, %v2152
        %v2155 = vmul.f32 %v2153, %v2153
        %v2156 = vadd.f32 %v2146, %v2154
        %v2157 = vadd.f32 %v2147, %v2155
        %vm2158 = vcmp.ne.f32.partialorder %v2037, %v395
        %vm2159 = vcmp.ne.f32.partialorder %v2037, %v396
        %v2160 = vsel %vm2158, %v2156, 1e+09
        %v2161 = vsel %vm2159, %v2157, 1e+09
        %2163 = vset.pattern.permute.xlu0 0
        %2164 = vperm.xlu0 %2163, %v2061
        %v2165 = vpop.permute.xlu0 %2164
        %vm2167 = vcmp.ne.f32.partialorder %v2165, %v405
        %vm2168 = vcmp.ne.f32.partialorder %v2165, %v409
        %v2169 = vsel %vm2167, %v2156, 1e+09
        %v2170 = vsel %vm2168, %v2157, 1e+09
        %v2171 = vmin.f32 %v2135, %v2160
        %v2172 = vmin.f32 %v2136, %v2161
        %v2173 = vmin.f32 %v2137, %v2169
        %v2174 = vmin.f32 %v2138, %v2170
        %2176 = vset.pattern.permute.xlu0 0
        %2177 = vperm.xlu0 %2176, %v1902
        %v2178 = vpop.permute.xlu0 %2177
        %v2180 = vsub.f32 %v2178, %v633
        %v2181 = vsub.f32 %v2178, %v637
        %v2182 = vmul.f32 %v2180, %v2180
        %v2183 = vmul.f32 %v2181, %v2181
        %2184 = vset.pattern.permute.xlu0 1
        %2185 = vperm.xlu0 %2184, %v1902
        %v2186 = vpop.permute.xlu0 %2185
        %v2188 = vsub.f32 %v2186, %v652
        %v2189 = vsub.f32 %v2186, %v656
        %v2190 = vmul.f32 %v2188, %v2188
        %v2191 = vmul.f32 %v2189, %v2189
        %v2192 = vadd.f32 %v2182, %v2190
        %v2193 = vadd.f32 %v2183, %v2191
        %vm2194 = vcmp.ne.f32.partialorder %v2038, %v395
        %vm2195 = vcmp.ne.f32.partialorder %v2038, %v396
        %v2196 = vsel %vm2194, %v2192, 1e+09
        %v2197 = vsel %vm2195, %v2193, 1e+09
        %2199 = vset.pattern.permute.xlu0 0
        %2200 = vperm.xlu0 %2199, %v2062
        %v2201 = vpop.permute.xlu0 %2200
        %vm2203 = vcmp.ne.f32.partialorder %v2201, %v405
        %vm2204 = vcmp.ne.f32.partialorder %v2201, %v409
        %v2205 = vsel %vm2203, %v2192, 1e+09
        %v2206 = vsel %vm2204, %v2193, 1e+09
        %v2207 = vmin.f32 %v2171, %v2196
        %v2208 = vmin.f32 %v2172, %v2197
        %v2209 = vmin.f32 %v2173, %v2205
        %v2210 = vmin.f32 %v2174, %v2206
        %2212 = vset.pattern.permute.xlu0 0
        %2213 = vperm.xlu0 %2212, %v1903
        %v2214 = vpop.permute.xlu0 %2213
        %v2216 = vsub.f32 %v2214, %v633
        %v2217 = vsub.f32 %v2214, %v637
        %v2218 = vmul.f32 %v2216, %v2216
        %v2219 = vmul.f32 %v2217, %v2217
        %2220 = vset.pattern.permute.xlu0 1
        %2221 = vperm.xlu0 %2220, %v1903
        %v2222 = vpop.permute.xlu0 %2221
        %v2224 = vsub.f32 %v2222, %v652
        %v2225 = vsub.f32 %v2222, %v656
        %v2226 = vmul.f32 %v2224, %v2224
        %v2227 = vmul.f32 %v2225, %v2225
        %v2228 = vadd.f32 %v2218, %v2226
        %v2229 = vadd.f32 %v2219, %v2227
        %vm2230 = vcmp.ne.f32.partialorder %v2039, %v395
        %vm2231 = vcmp.ne.f32.partialorder %v2039, %v396
        %v2232 = vsel %vm2230, %v2228, 1e+09
        %v2233 = vsel %vm2231, %v2229, 1e+09
        %2235 = vset.pattern.permute.xlu0 0
        %2236 = vperm.xlu0 %2235, %v2063
        %v2237 = vpop.permute.xlu0 %2236
        %vm2239 = vcmp.ne.f32.partialorder %v2237, %v405
        %vm2240 = vcmp.ne.f32.partialorder %v2237, %v409
        %v2241 = vsel %vm2239, %v2228, 1e+09
        %v2242 = vsel %vm2240, %v2229, 1e+09
        %v2243 = vmin.f32 %v2207, %v2232
        %v2244 = vmin.f32 %v2208, %v2233
        %v2245 = vmin.f32 %v2209, %v2241
        %v2246 = vmin.f32 %v2210, %v2242
        %2248 = vset.pattern.permute.xlu0 0
        %2249 = vperm.xlu0 %2248, %v1904
        %v2250 = vpop.permute.xlu0 %2249
        %v2252 = vsub.f32 %v2250, %v633
        %v2253 = vsub.f32 %v2250, %v637
        %v2254 = vmul.f32 %v2252, %v2252
        %v2255 = vmul.f32 %v2253, %v2253
        %2256 = vset.pattern.permute.xlu0 1
        %2257 = vperm.xlu0 %2256, %v1904
        %v2258 = vpop.permute.xlu0 %2257
        %v2260 = vsub.f32 %v2258, %v652
        %v2261 = vsub.f32 %v2258, %v656
        %v2262 = vmul.f32 %v2260, %v2260
        %v2263 = vmul.f32 %v2261, %v2261
        %v2264 = vadd.f32 %v2254, %v2262
        %v2265 = vadd.f32 %v2255, %v2263
        %vm2266 = vcmp.ne.f32.partialorder %v2040, %v395
        %vm2267 = vcmp.ne.f32.partialorder %v2040, %v396
        %v2268 = vsel %vm2266, %v2264, 1e+09
        %v2269 = vsel %vm2267, %v2265, 1e+09
        %2271 = vset.pattern.permute.xlu0 0
        %2272 = vperm.xlu0 %2271, %v2064
        %v2273 = vpop.permute.xlu0 %2272
        %vm2275 = vcmp.ne.f32.partialorder %v2273, %v405
        %vm2276 = vcmp.ne.f32.partialorder %v2273, %v409
        %v2277 = vsel %vm2275, %v2264, 1e+09
        %v2278 = vsel %vm2276, %v2265, 1e+09
        %v2279 = vmin.f32 %v2243, %v2268
        %v2280 = vmin.f32 %v2244, %v2269
        %v2281 = vmin.f32 %v2245, %v2277
        %v2282 = vmin.f32 %v2246, %v2278
        %2284 = vset.pattern.permute.xlu0 0
        %2285 = vperm.xlu0 %2284, %v1905
        %v2286 = vpop.permute.xlu0 %2285
        %v2288 = vsub.f32 %v2286, %v633
        %v2289 = vsub.f32 %v2286, %v637
        %v2290 = vmul.f32 %v2288, %v2288
        %v2291 = vmul.f32 %v2289, %v2289
        %2292 = vset.pattern.permute.xlu0 1
        %2293 = vperm.xlu0 %2292, %v1905
        %v2294 = vpop.permute.xlu0 %2293
        %v2296 = vsub.f32 %v2294, %v652
        %v2297 = vsub.f32 %v2294, %v656
        %v2298 = vmul.f32 %v2296, %v2296
        %v2299 = vmul.f32 %v2297, %v2297
        %v2300 = vadd.f32 %v2290, %v2298
        %v2301 = vadd.f32 %v2291, %v2299
        %vm2302 = vcmp.ne.f32.partialorder %v2041, %v395
        %vm2303 = vcmp.ne.f32.partialorder %v2041, %v396
        %v2304 = vsel %vm2302, %v2300, 1e+09
        %v2305 = vsel %vm2303, %v2301, 1e+09
        %2307 = vset.pattern.permute.xlu0 0
        %2308 = vperm.xlu0 %2307, %v2065
        %v2309 = vpop.permute.xlu0 %2308
        %vm2311 = vcmp.ne.f32.partialorder %v2309, %v405
        %vm2312 = vcmp.ne.f32.partialorder %v2309, %v409
        %v2313 = vsel %vm2311, %v2300, 1e+09
        %v2314 = vsel %vm2312, %v2301, 1e+09
        %v2315 = vmin.f32 %v2279, %v2304
        %v2316 = vmin.f32 %v2280, %v2305
        %v2317 = vmin.f32 %v2281, %v2313
        %v2318 = vmin.f32 %v2282, %v2314
        %2320 = vset.pattern.permute.xlu0 0
        %2321 = vperm.xlu0 %2320, %v1906
        %v2322 = vpop.permute.xlu0 %2321
        %v2324 = vsub.f32 %v2322, %v633
        %v2325 = vsub.f32 %v2322, %v637
        %v2326 = vmul.f32 %v2324, %v2324
        %v2327 = vmul.f32 %v2325, %v2325
        %2328 = vset.pattern.permute.xlu0 1
        %2329 = vperm.xlu0 %2328, %v1906
        %v2330 = vpop.permute.xlu0 %2329
        %v2332 = vsub.f32 %v2330, %v652
        %v2333 = vsub.f32 %v2330, %v656
        %v2334 = vmul.f32 %v2332, %v2332
        %v2335 = vmul.f32 %v2333, %v2333
        %v2336 = vadd.f32 %v2326, %v2334
        %v2337 = vadd.f32 %v2327, %v2335
        %vm2338 = vcmp.ne.f32.partialorder %v2042, %v395
        %vm2339 = vcmp.ne.f32.partialorder %v2042, %v396
        %v2340 = vsel %vm2338, %v2336, 1e+09
        %v2341 = vsel %vm2339, %v2337, 1e+09
        %2343 = vset.pattern.permute.xlu0 0
        %2344 = vperm.xlu0 %2343, %v2066
        %v2345 = vpop.permute.xlu0 %2344
        %vm2347 = vcmp.ne.f32.partialorder %v2345, %v405
        %vm2348 = vcmp.ne.f32.partialorder %v2345, %v409
        %v2349 = vsel %vm2347, %v2336, 1e+09
        %v2350 = vsel %vm2348, %v2337, 1e+09
        %v2351 = vmin.f32 %v2315, %v2340
        %v2352 = vmin.f32 %v2316, %v2341
        %v2353 = vmin.f32 %v2317, %v2349
        %v2354 = vmin.f32 %v2318, %v2350
        %v2355 = vrot.slane %v2351, 4
        %v2356 = vmin.f32 %v2351, %v2355
        %v2357 = vrot.slane %v2356, 2
        %v2358 = vmin.f32 %v2356, %v2357
        %v2359 = vrot.slane %v2358, 1
        %v2360 = vmin.f32 %v2358, %v2359
        %v2361 = vrot.slane %v2352, 4
        %v2362 = vmin.f32 %v2352, %v2361
        %v2363 = vrot.slane %v2362, 2
        %v2364 = vmin.f32 %v2362, %v2363
        %v2365 = vrot.slane %v2364, 1
        %v2366 = vmin.f32 %v2364, %v2365
        %vm2367 = vcmp.ge.f32.partialorder %v2360, 5e+08
        %vm2368 = vcmp.ge.f32.partialorder %v2366, 5e+08
        %v2369 = vsel %vm2367, 0.0, %v2360
        %v2370 = vsel %vm2368, 0.0, %v2366
        %v2371 = vrot.slane %v2353, 4
        %v2372 = vmin.f32 %v2353, %v2371
        %v2373 = vrot.slane %v2372, 2
        %v2374 = vmin.f32 %v2372, %v2373
        %v2375 = vrot.slane %v2374, 1
        %v2376 = vmin.f32 %v2374, %v2375
        %v2377 = vrot.slane %v2354, 4
        %v2378 = vmin.f32 %v2354, %v2377
        %v2379 = vrot.slane %v2378, 2
        %v2380 = vmin.f32 %v2378, %v2379
        %v2381 = vrot.slane %v2380, 1
        %v2382 = vmin.f32 %v2380, %v2381
        %vm2383 = vcmp.ge.f32.partialorder %v2376, 5e+08
        %vm2384 = vcmp.ge.f32.partialorder %v2382, 5e+08
        %v2385 = vsel %vm2383, 0.0, %v2376
        %v2386 = vsel %vm2384, 0.0, %v2382
        %v2387 = vstv %s419
        %v2388 = vmul.f32 %v2369, %v2387
        %v2389 = vmul.f32 %v2370, %v2387
        %v2390 = vstv %s432
        %v2391 = vmul.f32 %v2385, %v2390
        %v2392 = vmul.f32 %v2386, %v2390
        %v2393 = vadd.f32 %v2388, %v2391
        %v2394 = vadd.f32 %v2389, %v2392
        %v2395 = vmul.f32 %v414, %v2393
        %v2396 = vmul.f32 %v415, %v2394
        %v2397 = vsel %vm420, %v2395, 0.0
        %v2398 = vsel %vm420, %v2396, 0.0
        %v2399 = vadd.f32 %v2397, %v2398
        %2400 = vadd.xlane.f32.xlu0 %v2399
        %v2401 = vpop.xlane.xlu0 %2400
        %v2402 = vrot.slane %v2401, 4
        %v2403 = vadd.f32 %v2401, %v2402
        %v2404 = vrot.slane %v2403, 2
        %v2405 = vadd.f32 %v2403, %v2404
        %v2406 = vrot.slane %v2405, 1
        %v2407 = vadd.f32 %v2405, %v2406
        %s2408 = vtos %v2407
        %v2409 = vstv %s2408
        %2410 = vst [vmem:[%s300] sm:$0x1] %v2409
        %s2411 = sand.u32 %s188, 1
        %s2412 = scalar_lea.sflag [#allocation3], %s2411
        %s2413 = sand.u32 %s188, 1
        %s2414 = scalar_lea.vmem [#allocation2], %s2413
        // Predicated region
        $region45: #{tpu_custom_call.1} parent=43 // pred_check
          %p2415 = pneg %p198
        $region46: #{tpu_custom_call.1} parent=43 // pred_check_branch
          %2417 = sbr.rel (%p2415) target = $region48
        $region47: #{tpu_custom_call.1} parent=43 // pred_region
          %s2419 = ssub.s32 16, 16
          %2420 = vsyncadd %s2412, %s2419
          %s2421 = smul.addr %s24, 4
          %s2422 = sadd.s32 %s25, %s2421
          %s2423 = smul.addr %s2422, 16
          %s2424 = scalar_lea.hbm %s6, %s2423
          %s2426 = sshll.u32 %s2414, 4
          %s2427 = int_to_ptr.vmem [resolvable:$true] %s2426
          %2429 = dma.vmem_to_hbm [thread:$0]  %s2427, 16, %s2424, %s2412
        $region48: #{tpu_custom_call.1} parent=43 // pred_fallthru
          _
      $region44: #{tpu_custom_call.1} parent=5 // pred_fallthru
        _
      %p2430 = scmp.le.s32.totalorder 2, %s15
      // Predicated region
      $region49: #{tpu_custom_call.1} parent=5 // pred_check
        %p2431 = pneg %p2430
      $region50: #{tpu_custom_call.1} parent=5 // pred_check_branch
        %2433 = sbr.rel (%p2431) target = $region52
      $region51: #{tpu_custom_call.1} parent=5 // pred_region
        %s2434 = ssub.s32 %s15, 2
        // Predicated region
        $region53: #{tpu_custom_call.1} parent=51 // pred_check
          %p2435 = pneg %p204
        $region54: #{tpu_custom_call.1} parent=51 // pred_check_branch
          %2437 = sbr.rel (%p2435) target = $region56
        $region55: #{tpu_custom_call.1} parent=51 // pred_region
          %s2438 = sand.u32 %s189, 1
          %s2439 = scalar_lea.sflag [#allocation3], %s2438
          %s2440 = sand.u32 %s189, 1
          %s2441 = scalar_lea.vmem [#allocation2], %s2440
          %2442 = dma.done %s2439, 16
        $region56: #{tpu_custom_call.1} parent=51 // pred_fallthru
          _
      $region52: #{tpu_custom_call.1} parent=5 // pred_fallthru
        _
    $region6: #{tpu_custom_call.1} parent=1 // loop_footer
      %s19 = sadd.s32 1, %s15
    $region7: #{tpu_custom_call.1} parent=1 // loop_footer_branch
      %14 = sbr.rel target = $region3
    $region8: #{tpu_custom_call.1} parent=1 // loop_exit
      _
    %2443 = vsyncpa [#allocation3], 1
    %s2444 = scalar_lea.sflag [#allocation3], 1
    %2445 = vsyncpa %s2444, 1

</llo_original>
